<compile_context>
chip_gen: v6e
topology: v6e:2x2x1
jax: 0.10.0
libtpu: 0.0.40
codegen_flags: <defaults>
</compile_context>

<pallas_src>
import functools

import jax
import jax.numpy as jnp
from jax.experimental import pallas as pl
from jax.experimental.pallas import tpu as pltpu

_BN_EPS = 1e-5


def _round_up(x, m):
    return (x + m - 1) // m * m


def _channel_pad(c):
    # 256-wide alignment for deep layers keeps the v6e/v7x 2x256x256 MXU full;
    # 128 otherwise (lane-dense either way).
    return _round_up(c, 256) if c >= 256 else _round_up(c, 128)


# ----------------------------- Pallas kernel --------------------------------- #

def _conv_bn_kernel(x_ref, w_ref, b_ref, *rest, k, stride, relu):
    """Fused conv(kxk, stride) + BN shift [+ residual] [+ ReLU] for one row block.

    x_ref : (1, sp*sp, Hp2, Wp2, cin_p)  phase-decomposed, spatially padded input
    w_ref : (k*k*cin_p, cout_p)          BN-scale-folded weights
    b_ref : (1, cout_p)                  BN shift (f32)
    rest  : [r_ref (1, th, Wo_p, cout_p)], o_ref (1, th, Wo_p, cout_p)
    """
    if len(rest) == 2:
        r_ref, o_ref = rest
    else:
        (o_ref,) = rest
        r_ref = None

    s = stride
    sp = min(k, s)                      # number of phases per spatial axis
    _, th, wop, coutp = o_ref.shape
    cinp = x_ref.shape[-1]
    row0 = pl.program_id(1) * th

    # Gather the k*k taps from the VMEM-resident block -> (th*wop, k*k*cinp).
    # All reshapes are layout-trivial because wop % 8 == 0 and cinp % 128 == 0.
    parts = []
    for dy in range(k):
        for dx in range(k):
            ph = (dy % s) * sp + (dx % s)
            xs = x_ref[0, ph, pl.ds(row0 + dy // s, th), pl.ds(dx // s, wop), :]
            parts.append(xs.reshape(th * wop, cinp))
    patches = parts[0] if len(parts) == 1 else jnp.concatenate(parts, axis=1)

    # One deep MXU matmul, f32 accumulation; BN shift / residual / ReLU on the VPU.
    y = jnp.dot(patches, w_ref[...], preferred_element_type=jnp.float32)
    y = y + b_ref[...]
    if r_ref is not None:
        y = y + r_ref[...].reshape(th * wop, coutp).astype(jnp.float32)
    if relu:
        y = jnp.maximum(y, 0.0)
    o_ref[...] = y.reshape(1, th, wop, coutp).astype(o_ref.dtype)


# ------------------------------ Kernel wrapper -------------------------------- #

def _pick_row_blocks(n_batch, ho, wo_p):
    """Divisor of `ho`: keep each block MXU-sized, but guarantee >= 2 grid steps
    so both v7x TensorCores get work (no effect on 1-TC v5e/v6e)."""
    divisors = [d for d in range(1, ho + 1) if ho % d == 0]
    target_rows = max(1, 2048 // max(wo_p, 1))
    good = [d for d in divisors if ho // d >= target_rows]
    nrb = max(good) if good else 1
    if n_batch * nrb < 2:
        bigger = [d for d in divisors if d > nrb]
        if bigger:
            nrb = bigger[0]
    return nrb


def conv_bn_act(x, w_oihw, gamma, beta, mean, var, *, k, stride, pad, relu,
                valid_w=None, residual=None, out_dtype=None,
                compute_dtype=jnp.bfloat16):
    """Fused Conv2d(k, stride, pad, bias=False) + eval-BN [+ residual] [+ ReLU].

    x : (N, Hin, Wstore, cin_p) NHWC, channels already padded; columns >= valid_w
        may hold junk from a previous padded-width kernel output and are ignored.
    Returns ((N, Ho, Wo_p, cout_p) with valid columns [:Wo], (Ho, Wo, Wo_p)).
    """
    n, hin, wstore, cin_p = x.shape
    win = wstore if valid_w is None else valid_w
    if win != wstore:
        x = x[:, :, :win, :]

    s = stride
    ho = (hin + 2 * pad - k) // s + 1
    wo = (win + 2 * pad - k) // s + 1
    wo_p = _round_up(wo, 8)            # sublane-aligned output width (junk cols beyond wo)
    off = (k - 1) // s
    hp2 = ho + off
    wp2 = wo_p + off
    sp = min(k, s)

    # Spatial zero-pad once (single 1x activation pass) and phase-decompose so the
    # in-kernel tap gather needs only unstrided slices, even for stride > 1.
    xp = jnp.pad(x.astype(compute_dtype),
                 ((0, 0),
                  (pad, s * hp2 - hin - pad),
                  (pad, s * wp2 - win - pad),
                  (0, 0)))
    xph = xp.reshape(n, hp2, s, wp2, s, cin_p)[:, :, :sp, :, :sp, :]
    xph = xph.transpose(0, 2, 4, 1, 3, 5).reshape(n, sp * sp, hp2, wp2, cin_p)

    # Fold BN scale into the conv weights; keep the shift (and accumulation) in f32.
    cout = w_oihw.shape[0]
    cout_p = _channel_pad(cout)
    scale = (gamma / jnp.sqrt(var + _BN_EPS)).astype(jnp.float32)
    shift = (beta.astype(jnp.float32) - mean.astype(jnp.float32) * scale).reshape(1, cout)
    wmat = jnp.transpose(w_oihw.astype(jnp.float32), (2, 3, 1, 0)) * scale.reshape(1, 1, 1, cout)
    wmat = jnp.pad(wmat, ((0, 0), (0, 0),
                          (0, cin_p - w_oihw.shape[1]), (0, cout_p - cout)))
    wmat = wmat.reshape(k * k * cin_p, cout_p).astype(compute_dtype)
    shift = jnp.pad(shift, ((0, 0), (0, cout_p - cout)))

    out_dtype = compute_dtype if out_dtype is None else out_dtype
    nrb = _pick_row_blocks(n, ho, wo_p)
    th = ho // nrb

    in_specs = [
        pl.BlockSpec((1, sp * sp, hp2, wp2, cin_p), lambda b, j: (b, 0, 0, 0, 0)),
        pl.BlockSpec((k * k * cin_p, cout_p), lambda b, j: (0, 0)),
        pl.BlockSpec((1, cout_p), lambda b, j: (0, 0)),
    ]
    args = [xph, wmat, shift]
    if residual is not None:
        in_specs.append(pl.BlockSpec((1, th, wo_p, cout_p), lambda b, j: (b, j, 0, 0)))
        args.append(residual)

    # VMEM budget: double-buffered blocks + in-kernel patch matrix / f32 result,
    # clamped with headroom under the physical per-core capacity (v7x: 64 MiB).
    cdt = jnp.dtype(compute_dtype).itemsize
    odt = jnp.dtype(out_dtype).itemsize
    need = 2 * sp * sp * hp2 * wp2 * cin_p * cdt
    need += 2 * k * k * cin_p * cout_p * cdt
    need += 2 * cout_p * 4
    need += 2 * th * wo_p * cout_p * odt
    if residual is not None:
        need += 2 * th * wo_p * cout_p * jnp.dtype(residual.dtype).itemsize
    need += th * wo_p * (k * k * cin_p * cdt + 2 * cout_p * 4)
    try:
        vmem_cap = pltpu.get_tpu_info().vmem_capacity_bytes
    except Exception:
        vmem_cap = 64 << 20
    vmem_limit = int(min(int(0.85 * vmem_cap), max(32 << 20, 2 * need)))
    vmem_limit = max(vmem_limit, need + (4 << 20))

    kernel = functools.partial(_conv_bn_kernel, k=k, stride=s, relu=relu)
    out = pl.pallas_call(
        kernel,
        grid=(n, nrb),
        in_specs=in_specs,
        out_specs=pl.BlockSpec((1, th, wo_p, cout_p), lambda b, j: (b, j, 0, 0)),
        out_shape=jax.ShapeDtypeStruct((n, ho, wo_p, cout_p), out_dtype),
        compiler_params=pltpu.CompilerParams(
            dimension_semantics=("parallel", "parallel"),
            vmem_limit_bytes=vmem_limit),
    )(*args)
    return out, (ho, wo, wo_p)


# ------------------------------ BasicBlock forward ---------------------------- #

def basic_block_forward(x_nchw, params, in_planes, planes, stride, *,
                        compute_dtype=jnp.bfloat16):
    """Pallas implementation of BasicBlock.forward. Input/output are NCHW f32."""
    n, _, h, w = x_nchw.shape
    cin_p = _channel_pad(in_planes)

    # NCHW -> NHWC, cast, pad channels; this padded layout is kept across all kernels.
    xc = jnp.transpose(x_nchw, (0, 2, 3, 1)).astype(compute_dtype)
    xc = jnp.pad(xc, ((0, 0), (0, 0), (0, 0), (0, cin_p - in_planes)))

    # conv1 (3x3, stride) + bn1 + ReLU  (bf16 intermediate output)
    out1, (ho, wo, wo_p) = conv_bn_act(
        xc, params["conv1_w"], params["bn1_g"], params["bn1_b"],
        params["bn1_m"], params["bn1_v"], k=3, stride=stride, pad=1, relu=True,
        compute_dtype=compute_dtype)

    # shortcut branch
    if stride != 1 or in_planes != planes:
        sc, _ = conv_bn_act(
            xc, params["sc_w"], params["sc_bn_g"], params["sc_bn_b"],
            params["sc_bn_m"], params["sc_bn_v"], k=1, stride=stride, pad=0,
            relu=False, compute_dtype=compute_dtype)
    else:
        # identity: same padded-channel layout, width-pad to the kernels' stored width
        sc = jnp.pad(xc, ((0, 0), (0, 0), (0, wo_p - w), (0, 0)))

    # conv2 (3x3, stride 1) + bn2 + residual add + ReLU, fully fused, f32 output
    out2, _ = conv_bn_act(
        out1, params["conv2_w"], params["bn2_g"], params["bn2_b"],
        params["bn2_m"], params["bn2_v"], k=3, stride=1, pad=1, relu=True,
        valid_w=wo, residual=sc, out_dtype=jnp.float32,
        compute_dtype=compute_dtype)

    # single de-padding slice for the whole block, then NHWC -> NCHW
    out = out2[:, :ho, :wo, :planes]
    return jnp.transpose(out, (0, 3, 1, 2))


# ------------------------- Pure-JAX reference (check) ------------------------- #

def basic_block_reference(x, params, in_planes, planes, stride):
    def conv(x, w, s, pad):
        return jax.lax.conv_general_dilated(
            x, w, (s, s), ((pad, pad), (pad, pad)),
            dimension_numbers=("NCHW", "OIHW", "NCHW"))

    def bn(x, g, b, m, v, eps=_BN_EPS):
        g, b, m, v = (t[None, :, None, None] for t in (g, b, m, v))
        return (x - m) / jnp.sqrt(v + eps) * g + b

    out = jax.nn.relu(bn(conv(x, params["conv1_w"], stride, 1),
                         params["bn1_g"], params["bn1_b"], params["bn1_m"], params["bn1_v"]))
    out = bn(conv(out, params["conv2_w"], 1, 1),
             params["bn2_g"], params["bn2_b"], params["bn2_m"], params["bn2_v"])
    if stride != 1 or in_planes != planes:
        sc = bn(conv(x, params["sc_w"], stride, 0),
                params["sc_bn_g"], params["sc_bn_b"], params["sc_bn_m"], params["sc_bn_v"])
    else:
        sc = x
    return jax.nn.relu(out + sc)


# ------------------------------ Parameter init -------------------------------- #

def init_params(key, in_planes, planes, stride):
    ks = jax.random.split(key, 16)
    f32 = jnp.float32

    def bn_params(k):
        a, b, c, d = jax.random.split(k, 4)
        return (1.0 + 0.1 * jax.random.normal(a, (planes,), f32),                    # gamma
                0.1 * jax.random.normal(b, (planes,), f32),                          # beta
                0.1 * jax.random.normal(c, (planes,), f32),                          # running_mean
                0.5 + 0.5 * jax.nn.sigmoid(jax.random.normal(d, (planes,), f32)))    # running_var

    p = {}
    p["conv1_w"] = 0.1 * jax.random.normal(ks[0], (planes, in_planes, 3, 3), f32)
    p["bn1_g"], p["bn1_b"], p["bn1_m"], p["bn1_v"] = bn_params(ks[1])
    p["conv2_w"] = 0.1 * jax.random.normal(ks[2], (planes, planes, 3, 3), f32)
    p["bn2_g"], p["bn2_b"], p["bn2_m"], p["bn2_v"] = bn_params(ks[3])
    if stride != 1 or in_planes != planes:
        p["sc_w"] = 0.1 * jax.random.normal(ks[4], (planes, in_planes, 1, 1), f32)
        p["sc_bn_g"], p["sc_bn_b"], p["sc_bn_m"], p["sc_bn_v"] = bn_params(ks[5])
    return p


# ----------------------------------- Main -------------------------------------- #

def _run_case(key, in_planes, planes, stride, N=2, H=16, W=16,
              compute_dtype=jnp.bfloat16):
    kx, kp = jax.random.split(key)
    x = jax.random.normal(kx, (N, in_planes, H, W), jnp.float32)
    params = init_params(kp, in_planes, planes, stride)

    fwd = jax.jit(functools.partial(basic_block_forward, in_planes=in_planes,
                                    planes=planes, stride=stride,
                                    compute_dtype=compute_dtype))
    out = jax.block_until_ready(fwd(x, params))
    ref = jax.block_until_ready(
        basic_block_reference(x, params, in_planes, planes, stride))

    assert out.shape == ref.shape, (out.shape, ref.shape)
    err = float(jnp.max(jnp.abs(out - ref)))
    if jnp.dtype(compute_dtype) == jnp.dtype(jnp.float32):
        tol = 1e-4
    else:  # bf16 operands / intermediates, f32 accumulation
        tol = 5e-2 * max(1.0, float(jnp.max(jnp.abs(ref))))
    assert err < tol, (err, tol)
    return out


if __name__ == "__main__":
    key = jax.random.PRNGKey(0)
    k1, k2, k3, k4, k5 = jax.random.split(key, 5)
    # Case 1: projection shortcut (stride=2, channel expansion 4 -> 8), bf16 fast path
    _run_case(k1, in_planes=4, planes=8, stride=2)
    # Case 2: identity shortcut (stride=1, in_planes == planes), bf16
    _run_case(k2, in_planes=4, planes=4, stride=1)
    # Case 3: width not a multiple of 8 (W=20 -> padded-width/junk-column path), bf16
    _run_case(k3, in_planes=8, planes=8, stride=1, H=20, W=20)
    # Case 4: f32 compute path, projection shortcut (tight-tolerance logic check)
    _run_case(k4, in_planes=4, planes=8, stride=2, compute_dtype=jnp.float32)
    # Case 5: f32 compute path, identity shortcut
    _run_case(k5, in_planes=4, planes=4, stride=1, compute_dtype=jnp.float32)
    print("KERNEL_OK")
</pallas_src>

<mosaic_0001>
module attributes {stable_mosaic.version = 11 : i64} {
  func.func @_conv_bn_kernel(%arg0: i32, %arg1: i32, %arg2: memref<1x4x9x9x128xbf16, #tpu.memory_space<vmem>>, %arg3: memref<1152x128xbf16, #tpu.memory_space<vmem>>, %arg4: memref<1x128xf32, #tpu.memory_space<vmem>>, %arg5: memref<1x8x8x128xbf16, #tpu.memory_space<vmem>>) attributes {dimension_semantics = [#tpu.dimension_semantics<parallel>, #tpu.dimension_semantics<parallel>], iteration_bounds = array<i64: 2, 1>, scalar_prefetch = 0 : i64, scratch_operands = 0 : i64, tpu.core_type = #tpu.core_type<tc>, window_params = [{transform_indices = @transform_0, window_bounds = array<i64: 1, 4, 9, 9, 128>}, {pipeline_mode = #tpu.pipeline_mode<synchronous>, transform_indices = @transform_1, window_bounds = array<i64: 1152, 128>}, {pipeline_mode = #tpu.pipeline_mode<synchronous>, transform_indices = @transform_2, window_bounds = array<i64: 1, 128>}, {transform_indices = @transform_3, window_bounds = array<i64: 1, 8, 8, 128>}]} {
    %c8_i32 = arith.constant 8 : i32
    %0 = arith.muli %arg1, %c8_i32 : i32
    %c0_i32 = arith.constant 0 : i32
    %1 = arith.addi %0, %c0_i32 : i32
    %c0 = arith.constant 0 : index
    %c0_0 = arith.constant 0 : index
    %2 = arith.index_cast %1 : i32 to index
    %c0_1 = arith.constant 0 : index
    %c0_2 = arith.constant 0 : index
    %3 = vector.load %arg2[%c0, %c0_0, %2, %c0_1, %c0_2] : memref<1x4x9x9x128xbf16, #tpu.memory_space<vmem>>, vector<1x1x8x8x128xbf16>
    %4 = vector.shape_cast %3 : vector<1x1x8x8x128xbf16> to vector<8x8x128xbf16>
    %5 = vector.shape_cast %4 : vector<8x8x128xbf16> to vector<64x128xbf16>
    %c0_i32_3 = arith.constant 0 : i32
    %6 = arith.addi %0, %c0_i32_3 : i32
    %c0_4 = arith.constant 0 : index
    %c1 = arith.constant 1 : index
    %7 = arith.index_cast %6 : i32 to index
    %c0_5 = arith.constant 0 : index
    %c0_6 = arith.constant 0 : index
    %8 = vector.load %arg2[%c0_4, %c1, %7, %c0_5, %c0_6] : memref<1x4x9x9x128xbf16, #tpu.memory_space<vmem>>, vector<1x1x8x8x128xbf16>
    %9 = vector.shape_cast %8 : vector<1x1x8x8x128xbf16> to vector<8x8x128xbf16>
    %10 = vector.shape_cast %9 : vector<8x8x128xbf16> to vector<64x128xbf16>
    %c0_i32_7 = arith.constant 0 : i32
    %11 = arith.addi %0, %c0_i32_7 : i32
    %c0_8 = arith.constant 0 : index
    %c0_9 = arith.constant 0 : index
    %12 = arith.index_cast %11 : i32 to index
    %c1_10 = arith.constant 1 : index
    %c0_11 = arith.constant 0 : index
    %13 = vector.load %arg2[%c0_8, %c0_9, %12, %c1_10, %c0_11] : memref<1x4x9x9x128xbf16, #tpu.memory_space<vmem>>, vector<1x1x8x8x128xbf16>
    %14 = vector.shape_cast %13 : vector<1x1x8x8x128xbf16> to vector<8x8x128xbf16>
    %15 = vector.shape_cast %14 : vector<8x8x128xbf16> to vector<64x128xbf16>
    %c0_i32_12 = arith.constant 0 : i32
    %16 = arith.addi %0, %c0_i32_12 : i32
    %c0_13 = arith.constant 0 : index
    %c2 = arith.constant 2 : index
    %17 = arith.index_cast %16 : i32 to index
    %c0_14 = arith.constant 0 : index
    %c0_15 = arith.constant 0 : index
    %18 = vector.load %arg2[%c0_13, %c2, %17, %c0_14, %c0_15] : memref<1x4x9x9x128xbf16, #tpu.memory_space<vmem>>, vector<1x1x8x8x128xbf16>
    %19 = vector.shape_cast %18 : vector<1x1x8x8x128xbf16> to vector<8x8x128xbf16>
    %20 = vector.shape_cast %19 : vector<8x8x128xbf16> to vector<64x128xbf16>
    %c0_i32_16 = arith.constant 0 : i32
    %21 = arith.addi %0, %c0_i32_16 : i32
    %c0_17 = arith.constant 0 : index
    %c3 = arith.constant 3 : index
    %22 = arith.index_cast %21 : i32 to index
    %c0_18 = arith.constant 0 : index
    %c0_19 = arith.constant 0 : index
    %23 = vector.load %arg2[%c0_17, %c3, %22, %c0_18, %c0_19] : memref<1x4x9x9x128xbf16, #tpu.memory_space<vmem>>, vector<1x1x8x8x128xbf16>
    %24 = vector.shape_cast %23 : vector<1x1x8x8x128xbf16> to vector<8x8x128xbf16>
    %25 = vector.shape_cast %24 : vector<8x8x128xbf16> to vector<64x128xbf16>
    %c0_i32_20 = arith.constant 0 : i32
    %26 = arith.addi %0, %c0_i32_20 : i32
    %c0_21 = arith.constant 0 : index
    %c2_22 = arith.constant 2 : index
    %27 = arith.index_cast %26 : i32 to index
    %c1_23 = arith.constant 1 : index
    %c0_24 = arith.constant 0 : index
    %28 = vector.load %arg2[%c0_21, %c2_22, %27, %c1_23, %c0_24] : memref<1x4x9x9x128xbf16, #tpu.memory_space<vmem>>, vector<1x1x8x8x128xbf16>
    %29 = vector.shape_cast %28 : vector<1x1x8x8x128xbf16> to vector<8x8x128xbf16>
    %30 = vector.shape_cast %29 : vector<8x8x128xbf16> to vector<64x128xbf16>
    %c1_i32 = arith.constant 1 : i32
    %31 = arith.addi %0, %c1_i32 : i32
    %c0_25 = arith.constant 0 : index
    %c0_26 = arith.constant 0 : index
    %32 = arith.index_cast %31 : i32 to index
    %c0_27 = arith.constant 0 : index
    %c0_28 = arith.constant 0 : index
    %33 = vector.load %arg2[%c0_25, %c0_26, %32, %c0_27, %c0_28] : memref<1x4x9x9x128xbf16, #tpu.memory_space<vmem>>, vector<1x1x8x8x128xbf16>
    %34 = vector.shape_cast %33 : vector<1x1x8x8x128xbf16> to vector<8x8x128xbf16>
    %35 = vector.shape_cast %34 : vector<8x8x128xbf16> to vector<64x128xbf16>
    %c1_i32_29 = arith.constant 1 : i32
    %36 = arith.addi %0, %c1_i32_29 : i32
    %c0_30 = arith.constant 0 : index
    %c1_31 = arith.constant 1 : index
    %37 = arith.index_cast %36 : i32 to index
    %c0_32 = arith.constant 0 : index
    %c0_33 = arith.constant 0 : index
    %38 = vector.load %arg2[%c0_30, %c1_31, %37, %c0_32, %c0_33] : memref<1x4x9x9x128xbf16, #tpu.memory_space<vmem>>, vector<1x1x8x8x128xbf16>
    %39 = vector.shape_cast %38 : vector<1x1x8x8x128xbf16> to vector<8x8x128xbf16>
    %40 = vector.shape_cast %39 : vector<8x8x128xbf16> to vector<64x128xbf16>
    %c1_i32_34 = arith.constant 1 : i32
    %41 = arith.addi %0, %c1_i32_34 : i32
    %c0_35 = arith.constant 0 : index
    %c0_36 = arith.constant 0 : index
    %42 = arith.index_cast %41 : i32 to index
    %c1_37 = arith.constant 1 : index
    %c0_38 = arith.constant 0 : index
    %43 = vector.load %arg2[%c0_35, %c0_36, %42, %c1_37, %c0_38] : memref<1x4x9x9x128xbf16, #tpu.memory_space<vmem>>, vector<1x1x8x8x128xbf16>
    %44 = vector.shape_cast %43 : vector<1x1x8x8x128xbf16> to vector<8x8x128xbf16>
    %45 = vector.shape_cast %44 : vector<8x8x128xbf16> to vector<64x128xbf16>
    %46 = tpu.concatenate %5, %10, %15, %20, %25, %30, %35, %40, %45 in 1 : vector<64x128xbf16>, vector<64x128xbf16>, vector<64x128xbf16>, vector<64x128xbf16>, vector<64x128xbf16>, vector<64x128xbf16>, vector<64x128xbf16>, vector<64x128xbf16>, vector<64x128xbf16> -> vector<64x1152xbf16>
    %c0_39 = arith.constant 0 : index
    %c0_40 = arith.constant 0 : index
    %47 = vector.load %arg3[%c0_39, %c0_40] : memref<1152x128xbf16, #tpu.memory_space<vmem>>, vector<1152x128xbf16>
    %cst = arith.constant dense<0.000000e+00> : vector<64x128xf32>
    %48 = tpu.matmul %46, %47, %cst {dimension_numbers = #tpu.dot_dimension_numbers<[1], [0], [0], [1], [0, 0, 1, 1], [], []>} : vector<64x1152xbf16>, vector<1152x128xbf16>, vector<64x128xf32> -> vector<64x128xf32>
    %c0_41 = arith.constant 0 : index
    %c0_42 = arith.constant 0 : index
    %49 = vector.load %arg4[%c0_41, %c0_42] : memref<1x128xf32, #tpu.memory_space<vmem>>, vector<1x128xf32>
    %50 = vector.broadcast %49 : vector<1x128xf32> to vector<64x128xf32>
    %51 = arith.addf %48, %50 : vector<64x128xf32>
    %cst_43 = arith.constant 0.000000e+00 : f32
    %52 = vector.broadcast %cst_43 : f32 to vector<64x128xf32>
    %53 = arith.maximumf %51, %52 : vector<64x128xf32>
    %54 = vector.shape_cast %53 : vector<64x128xf32> to vector<1x8x8x128xf32>
    %55 = arith.truncf %54 : vector<1x8x8x128xf32> to vector<1x8x8x128xbf16>
    %c0_44 = arith.constant 0 : index
    %c0_45 = arith.constant 0 : index
    %c0_46 = arith.constant 0 : index
    %c0_47 = arith.constant 0 : index
    %56 = vector.load %arg5[%c0_44, %c0_45, %c0_46, %c0_47] : memref<1x8x8x128xbf16, #tpu.memory_space<vmem>>, vector<1x8x8x128xbf16>
    tpu.vector_store %arg5[%c0_44, %c0_45, %c0_46, %c0_47], %55 {strides = array<i32>} : memref<1x8x8x128xbf16, #tpu.memory_space<vmem>>, vector<1x8x8x128xbf16>,
    return
  }
  func.func @transform_0(%arg0: i32, %arg1: i32) -> (i32, i32, i32, i32, i32) {
    %c0_i32 = arith.constant 0 : i32
    %c0_i32_0 = arith.constant 0 : i32
    %c0_i32_1 = arith.constant 0 : i32
    %c0_i32_2 = arith.constant 0 : i32
    %c0_i32_3 = arith.constant 0 : i32
    return %arg0, %c0_i32, %c0_i32_0, %c0_i32_1, %c0_i32_2 : i32, i32, i32, i32, i32
  }
  func.func @transform_1(%arg0: i32, %arg1: i32) -> (i32, i32) {
    %c0_i32 = arith.constant 0 : i32
    %c0_i32_0 = arith.constant 0 : i32
    %c0_i32_1 = arith.constant 0 : i32
    return %c0_i32, %c0_i32_0 : i32, i32
  }
  func.func @transform_2(%arg0: i32, %arg1: i32) -> (i32, i32) {
    %c0_i32 = arith.constant 0 : i32
    %c0_i32_0 = arith.constant 0 : i32
    %c0_i32_1 = arith.constant 0 : i32
    return %c0_i32, %c0_i32_0 : i32, i32
  }
  func.func @transform_3(%arg0: i32, %arg1: i32) -> (i32, i32, i32, i32) {
    %c0_i32 = arith.constant 0 : i32
    %c0_i32_0 = arith.constant 0 : i32
    %c0_i32_1 = arith.constant 0 : i32
    return %arg0, %arg1, %c0_i32, %c0_i32_0 : i32, i32, i32, i32
  }
}

module attributes {stable_mosaic.version = 11 : i64} {
  func.func @_conv_bn_kernel(%arg0: i32, %arg1: i32, %arg2: memref<1x1x8x8x128xbf16, #tpu.memory_space<vmem>>, %arg3: memref<128x128xbf16, #tpu.memory_space<vmem>>, %arg4: memref<1x128xf32, #tpu.memory_space<vmem>>, %arg5: memref<1x8x8x128xbf16, #tpu.memory_space<vmem>>) attributes {dimension_semantics = [#tpu.dimension_semantics<parallel>, #tpu.dimension_semantics<parallel>], iteration_bounds = array<i64: 2, 1>, scalar_prefetch = 0 : i64, scratch_operands = 0 : i64, tpu.core_type = #tpu.core_type<tc>, window_params = [{transform_indices = @transform_0, window_bounds = array<i64: 1, 1, 8, 8, 128>}, {pipeline_mode = #tpu.pipeline_mode<synchronous>, transform_indices = @transform_1, window_bounds = array<i64: 128, 128>}, {pipeline_mode = #tpu.pipeline_mode<synchronous>, transform_indices = @transform_2, window_bounds = array<i64: 1, 128>}, {transform_indices = @transform_3, window_bounds = array<i64: 1, 8, 8, 128>}]} {
    %c8_i32 = arith.constant 8 : i32
    %0 = arith.muli %arg1, %c8_i32 : i32
    %c0_i32 = arith.constant 0 : i32
    %1 = arith.addi %0, %c0_i32 : i32
    %c0 = arith.constant 0 : index
    %c0_0 = arith.constant 0 : index
    %2 = arith.index_cast %1 : i32 to index
    %c0_1 = arith.constant 0 : index
    %c0_2 = arith.constant 0 : index
    %3 = vector.load %arg2[%c0, %c0_0, %2, %c0_1, %c0_2] : memref<1x1x8x8x128xbf16, #tpu.memory_space<vmem>>, vector<1x1x8x8x128xbf16>
    %4 = vector.shape_cast %3 : vector<1x1x8x8x128xbf16> to vector<8x8x128xbf16>
    %5 = vector.shape_cast %4 : vector<8x8x128xbf16> to vector<64x128xbf16>
    %c0_3 = arith.constant 0 : index
    %c0_4 = arith.constant 0 : index
    %6 = vector.load %arg3[%c0_3, %c0_4] : memref<128x128xbf16, #tpu.memory_space<vmem>>, vector<128x128xbf16>
    %cst = arith.constant dense<0.000000e+00> : vector<64x128xf32>
    %7 = tpu.matmul %5, %6, %cst {dimension_numbers = #tpu.dot_dimension_numbers<[1], [0], [0], [1], [0, 0, 1, 1], [], []>} : vector<64x128xbf16>, vector<128x128xbf16>, vector<64x128xf32> -> vector<64x128xf32>
    %c0_5 = arith.constant 0 : index
    %c0_6 = arith.constant 0 : index
    %8 = vector.load %arg4[%c0_5, %c0_6] : memref<1x128xf32, #tpu.memory_space<vmem>>, vector<1x128xf32>
    %9 = vector.broadcast %8 : vector<1x128xf32> to vector<64x128xf32>
    %10 = arith.addf %7, %9 : vector<64x128xf32>
    %11 = vector.shape_cast %10 : vector<64x128xf32> to vector<1x8x8x128xf32>
    %12 = arith.truncf %11 : vector<1x8x8x128xf32> to vector<1x8x8x128xbf16>
    %c0_7 = arith.constant 0 : index
    %c0_8 = arith.constant 0 : index
    %c0_9 = arith.constant 0 : index
    %c0_10 = arith.constant 0 : index
    %13 = vector.load %arg5[%c0_7, %c0_8, %c0_9, %c0_10] : memref<1x8x8x128xbf16, #tpu.memory_space<vmem>>, vector<1x8x8x128xbf16>
    tpu.vector_store %arg5[%c0_7, %c0_8, %c0_9, %c0_10], %12 {strides = array<i32>} : memref<1x8x8x128xbf16, #tpu.memory_space<vmem>>, vector<1x8x8x128xbf16>,
    return
  }
  func.func @transform_0(%arg0: i32, %arg1: i32) -> (i32, i32, i32, i32, i32) {
    %c0_i32 = arith.constant 0 : i32
    %c0_i32_0 = arith.constant 0 : i32
    %c0_i32_1 = arith.constant 0 : i32
    %c0_i32_2 = arith.constant 0 : i32
    %c0_i32_3 = arith.constant 0 : i32
    return %arg0, %c0_i32, %c0_i32_0, %c0_i32_1, %c0_i32_2 : i32, i32, i32, i32, i32
  }
  func.func @transform_1(%arg0: i32, %arg1: i32) -> (i32, i32) {
    %c0_i32 = arith.constant 0 : i32
    %c0_i32_0 = arith.constant 0 : i32
    %c0_i32_1 = arith.constant 0 : i32
    return %c0_i32, %c0_i32_0 : i32, i32
  }
  func.func @transform_2(%arg0: i32, %arg1: i32) -> (i32, i32) {
    %c0_i32 = arith.constant 0 : i32
    %c0_i32_0 = arith.constant 0 : i32
    %c0_i32_1 = arith.constant 0 : i32
    return %c0_i32, %c0_i32_0 : i32, i32
  }
  func.func @transform_3(%arg0: i32, %arg1: i32) -> (i32, i32, i32, i32) {
    %c0_i32 = arith.constant 0 : i32
    %c0_i32_0 = arith.constant 0 : i32
    %c0_i32_1 = arith.constant 0 : i32
    return %arg0, %arg1, %c0_i32, %c0_i32_0 : i32, i32, i32, i32
  }
}

module attributes {stable_mosaic.version = 11 : i64} {
  func.func @_conv_bn_kernel(%arg0: i32, %arg1: i32, %arg2: memref<1x1x10x10x128xbf16, #tpu.memory_space<vmem>>, %arg3: memref<1152x128xbf16, #tpu.memory_space<vmem>>, %arg4: memref<1x128xf32, #tpu.memory_space<vmem>>, %arg5: memref<1x8x8x128xbf16, #tpu.memory_space<vmem>>, %arg6: memref<1x8x8x128xf32, #tpu.memory_space<vmem>>) attributes {dimension_semantics = [#tpu.dimension_semantics<parallel>, #tpu.dimension_semantics<parallel>], iteration_bounds = array<i64: 2, 1>, scalar_prefetch = 0 : i64, scratch_operands = 0 : i64, tpu.core_type = #tpu.core_type<tc>, window_params = [{transform_indices = @transform_0, window_bounds = array<i64: 1, 1, 10, 10, 128>}, {pipeline_mode = #tpu.pipeline_mode<synchronous>, transform_indices = @transform_1, window_bounds = array<i64: 1152, 128>}, {pipeline_mode = #tpu.pipeline_mode<synchronous>, transform_indices = @transform_2, window_bounds = array<i64: 1, 128>}, {transform_indices = @transform_3, window_bounds = array<i64: 1, 8, 8, 128>}, {transform_indices = @transform_4, window_bounds = array<i64: 1, 8, 8, 128>}]} {
    %c8_i32 = arith.constant 8 : i32
    %0 = arith.muli %arg1, %c8_i32 : i32
    %c0_i32 = arith.constant 0 : i32
    %1 = arith.addi %0, %c0_i32 : i32
    %c0 = arith.constant 0 : index
    %c0_0 = arith.constant 0 : index
    %2 = arith.index_cast %1 : i32 to index
    %c0_1 = arith.constant 0 : index
    %c0_2 = arith.constant 0 : index
    %3 = vector.load %arg2[%c0, %c0_0, %2, %c0_1, %c0_2] : memref<1x1x10x10x128xbf16, #tpu.memory_space<vmem>>, vector<1x1x8x8x128xbf16>
    %4 = vector.shape_cast %3 : vector<1x1x8x8x128xbf16> to vector<8x8x128xbf16>
    %5 = vector.shape_cast %4 : vector<8x8x128xbf16> to vector<64x128xbf16>
    %c0_i32_3 = arith.constant 0 : i32
    %6 = arith.addi %0, %c0_i32_3 : i32
    %c0_4 = arith.constant 0 : index
    %c0_5 = arith.constant 0 : index
    %7 = arith.index_cast %6 : i32 to index
    %c1 = arith.constant 1 : index
    %c0_6 = arith.constant 0 : index
    %8 = vector.load %arg2[%c0_4, %c0_5, %7, %c1, %c0_6] : memref<1x1x10x10x128xbf16, #tpu.memory_space<vmem>>, vector<1x1x8x8x128xbf16>
    %9 = vector.shape_cast %8 : vector<1x1x8x8x128xbf16> to vector<8x8x128xbf16>
    %10 = vector.shape_cast %9 : vector<8x8x128xbf16> to vector<64x128xbf16>
    %c0_i32_7 = arith.constant 0 : i32
    %11 = arith.addi %0, %c0_i32_7 : i32
    %c0_8 = arith.constant 0 : index
    %c0_9 = arith.constant 0 : index
    %12 = arith.index_cast %11 : i32 to index
    %c2 = arith.constant 2 : index
    %c0_10 = arith.constant 0 : index
    %13 = vector.load %arg2[%c0_8, %c0_9, %12, %c2, %c0_10] : memref<1x1x10x10x128xbf16, #tpu.memory_space<vmem>>, vector<1x1x8x8x128xbf16>
    %14 = vector.shape_cast %13 : vector<1x1x8x8x128xbf16> to vector<8x8x128xbf16>
    %15 = vector.shape_cast %14 : vector<8x8x128xbf16> to vector<64x128xbf16>
    %c1_i32 = arith.constant 1 : i32
    %16 = arith.addi %0, %c1_i32 : i32
    %c0_11 = arith.constant 0 : index
    %c0_12 = arith.constant 0 : index
    %17 = arith.index_cast %16 : i32 to index
    %c0_13 = arith.constant 0 : index
    %c0_14 = arith.constant 0 : index
    %18 = vector.load %arg2[%c0_11, %c0_12, %17, %c0_13, %c0_14] : memref<1x1x10x10x128xbf16, #tpu.memory_space<vmem>>, vector<1x1x8x8x128xbf16>
    %19 = vector.shape_cast %18 : vector<1x1x8x8x128xbf16> to vector<8x8x128xbf16>
    %20 = vector.shape_cast %19 : vector<8x8x128xbf16> to vector<64x128xbf16>
    %c1_i32_15 = arith.constant 1 : i32
    %21 = arith.addi %0, %c1_i32_15 : i32
    %c0_16 = arith.constant 0 : index
    %c0_17 = arith.constant 0 : index
    %22 = arith.index_cast %21 : i32 to index
    %c1_18 = arith.constant 1 : index
    %c0_19 = arith.constant 0 : index
    %23 = vector.load %arg2[%c0_16, %c0_17, %22, %c1_18, %c0_19] : memref<1x1x10x10x128xbf16, #tpu.memory_space<vmem>>, vector<1x1x8x8x128xbf16>
    %24 = vector.shape_cast %23 : vector<1x1x8x8x128xbf16> to vector<8x8x128xbf16>
    %25 = vector.shape_cast %24 : vector<8x8x128xbf16> to vector<64x128xbf16>
    %c1_i32_20 = arith.constant 1 : i32
    %26 = arith.addi %0, %c1_i32_20 : i32
    %c0_21 = arith.constant 0 : index
    %c0_22 = arith.constant 0 : index
    %27 = arith.index_cast %26 : i32 to index
    %c2_23 = arith.constant 2 : index
    %c0_24 = arith.constant 0 : index
    %28 = vector.load %arg2[%c0_21, %c0_22, %27, %c2_23, %c0_24] : memref<1x1x10x10x128xbf16, #tpu.memory_space<vmem>>, vector<1x1x8x8x128xbf16>
    %29 = vector.shape_cast %28 : vector<1x1x8x8x128xbf16> to vector<8x8x128xbf16>
    %30 = vector.shape_cast %29 : vector<8x8x128xbf16> to vector<64x128xbf16>
    %c2_i32 = arith.constant 2 : i32
    %31 = arith.addi %0, %c2_i32 : i32
    %c0_25 = arith.constant 0 : index
    %c0_26 = arith.constant 0 : index
    %32 = arith.index_cast %31 : i32 to index
    %c0_27 = arith.constant 0 : index
    %c0_28 = arith.constant 0 : index
    %33 = vector.load %arg2[%c0_25, %c0_26, %32, %c0_27, %c0_28] : memref<1x1x10x10x128xbf16, #tpu.memory_space<vmem>>, vector<1x1x8x8x128xbf16>
    %34 = vector.shape_cast %33 : vector<1x1x8x8x128xbf16> to vector<8x8x128xbf16>
    %35 = vector.shape_cast %34 : vector<8x8x128xbf16> to vector<64x128xbf16>
    %c2_i32_29 = arith.constant 2 : i32
    %36 = arith.addi %0, %c2_i32_29 : i32
    %c0_30 = arith.constant 0 : index
    %c0_31 = arith.constant 0 : index
    %37 = arith.index_cast %36 : i32 to index
    %c1_32 = arith.constant 1 : index
    %c0_33 = arith.constant 0 : index
    %38 = vector.load %arg2[%c0_30, %c0_31, %37, %c1_32, %c0_33] : memref<1x1x10x10x128xbf16, #tpu.memory_space<vmem>>, vector<1x1x8x8x128xbf16>
    %39 = vector.shape_cast %38 : vector<1x1x8x8x128xbf16> to vector<8x8x128xbf16>
    %40 = vector.shape_cast %39 : vector<8x8x128xbf16> to vector<64x128xbf16>
    %c2_i32_34 = arith.constant 2 : i32
    %41 = arith.addi %0, %c2_i32_34 : i32
    %c0_35 = arith.constant 0 : index
    %c0_36 = arith.constant 0 : index
    %42 = arith.index_cast %41 : i32 to index
    %c2_37 = arith.constant 2 : index
    %c0_38 = arith.constant 0 : index
    %43 = vector.load %arg2[%c0_35, %c0_36, %42, %c2_37, %c0_38] : memref<1x1x10x10x128xbf16, #tpu.memory_space<vmem>>, vector<1x1x8x8x128xbf16>
    %44 = vector.shape_cast %43 : vector<1x1x8x8x128xbf16> to vector<8x8x128xbf16>
    %45 = vector.shape_cast %44 : vector<8x8x128xbf16> to vector<64x128xbf16>
    %46 = tpu.concatenate %5, %10, %15, %20, %25, %30, %35, %40, %45 in 1 : vector<64x128xbf16>, vector<64x128xbf16>, vector<64x128xbf16>, vector<64x128xbf16>, vector<64x128xbf16>, vector<64x128xbf16>, vector<64x128xbf16>, vector<64x128xbf16>, vector<64x128xbf16> -> vector<64x1152xbf16>
    %c0_39 = arith.constant 0 : index
    %c0_40 = arith.constant 0 : index
    %47 = vector.load %arg3[%c0_39, %c0_40] : memref<1152x128xbf16, #tpu.memory_space<vmem>>, vector<1152x128xbf16>
    %cst = arith.constant dense<0.000000e+00> : vector<64x128xf32>
    %48 = tpu.matmul %46, %47, %cst {dimension_numbers = #tpu.dot_dimension_numbers<[1], [0], [0], [1], [0, 0, 1, 1], [], []>} : vector<64x1152xbf16>, vector<1152x128xbf16>, vector<64x128xf32> -> vector<64x128xf32>
    %c0_41 = arith.constant 0 : index
    %c0_42 = arith.constant 0 : index
    %49 = vector.load %arg4[%c0_41, %c0_42] : memref<1x128xf32, #tpu.memory_space<vmem>>, vector<1x128xf32>
    %50 = vector.broadcast %49 : vector<1x128xf32> to vector<64x128xf32>
    %51 = arith.addf %48, %50 : vector<64x128xf32>
    %c0_43 = arith.constant 0 : index
    %c0_44 = arith.constant 0 : index
    %c0_45 = arith.constant 0 : index
    %c0_46 = arith.constant 0 : index
    %52 = vector.load %arg5[%c0_43, %c0_44, %c0_45, %c0_46] : memref<1x8x8x128xbf16, #tpu.memory_space<vmem>>, vector<1x8x8x128xbf16>
    %53 = vector.shape_cast %52 : vector<1x8x8x128xbf16> to vector<64x128xbf16>
    %54 = arith.extf %53 : vector<64x128xbf16> to vector<64x128xf32>
    %55 = arith.addf %51, %54 : vector<64x128xf32>
    %cst_47 = arith.constant 0.000000e+00 : f32
    %56 = vector.broadcast %cst_47 : f32 to vector<64x128xf32>
    %57 = arith.maximumf %55, %56 : vector<64x128xf32>
    %58 = vector.shape_cast %57 : vector<64x128xf32> to vector<1x8x8x128xf32>
    %c0_48 = arith.constant 0 : index
    %c0_49 = arith.constant 0 : index
    %c0_50 = arith.constant 0 : index
    %c0_51 = arith.constant 0 : index
    %59 = vector.load %arg6[%c0_48, %c0_49, %c0_50, %c0_51] : memref<1x8x8x128xf32, #tpu.memory_space<vmem>>, vector<1x8x8x128xf32>
    tpu.vector_store %arg6[%c0_48, %c0_49, %c0_50, %c0_51], %58 {strides = array<i32>} : memref<1x8x8x128xf32, #tpu.memory_space<vmem>>, vector<1x8x8x128xf32>,
    return
  }
  func.func @transform_0(%arg0: i32, %arg1: i32) -> (i32, i32, i32, i32, i32) {
    %c0_i32 = arith.constant 0 : i32
    %c0_i32_0 = arith.constant 0 : i32
    %c0_i32_1 = arith.constant 0 : i32
    %c0_i32_2 = arith.constant 0 : i32
    %c0_i32_3 = arith.constant 0 : i32
    return %arg0, %c0_i32, %c0_i32_0, %c0_i32_1, %c0_i32_2 : i32, i32, i32, i32, i32
  }
  func.func @transform_1(%arg0: i32, %arg1: i32) -> (i32, i32) {
    %c0_i32 = arith.constant 0 : i32
    %c0_i32_0 = arith.constant 0 : i32
    %c0_i32_1 = arith.constant 0 : i32
    return %c0_i32, %c0_i32_0 : i32, i32
  }
  func.func @transform_2(%arg0: i32, %arg1: i32) -> (i32, i32) {
    %c0_i32 = arith.constant 0 : i32
    %c0_i32_0 = arith.constant 0 : i32
    %c0_i32_1 = arith.constant 0 : i32
    return %c0_i32, %c0_i32_0 : i32, i32
  }
  func.func @transform_3(%arg0: i32, %arg1: i32) -> (i32, i32, i32, i32) {
    %c0_i32 = arith.constant 0 : i32
    %c0_i32_0 = arith.constant 0 : i32
    %c0_i32_1 = arith.constant 0 : i32
    return %arg0, %arg1, %c0_i32, %c0_i32_0 : i32, i32, i32, i32
  }
  func.func @transform_4(%arg0: i32, %arg1: i32) -> (i32, i32, i32, i32) {
    %c0_i32 = arith.constant 0 : i32
    %c0_i32_0 = arith.constant 0 : i32
    %c0_i32_1 = arith.constant 0 : i32
    return %arg0, %arg1, %c0_i32, %c0_i32_0 : i32, i32, i32, i32
  }
}

</mosaic_0001>

<llo_original>
// kernel: basic_block_forward.4
$region0: #{basic_block_forward.4}
  #allocation0 [shape = 'u32[]', space=smem, size = 0x4, offset = 0x4, fixed_abs, tag = 'smem constant byte address 0x4 - core index']
  #allocation1 [shape = 'u32[144,128]{1,0:T(1,128)}', space=vmem, size = 0x12000, scoped, tag = 'internal scratch']
  %s0 = inlined_call_operand.vmem [shape: bf16[2,1,8,8,128], index: 0, kind: input, shape index: {}]
  %s1 = inlined_call_operand.vmem [shape: bf16[128,128], index: 1, kind: input, shape index: {}]
  %s2 = inlined_call_operand.vmem [shape: f32[1,128], index: 2, kind: input, shape index: {}]
  %s3 = inlined_call_operand.vmem [shape: bf16[2,8,8,128], index: 3, kind: output, shape index: {}]
  %s4 = sld [smem:[#allocation0]]
  $region45: #{basic_block_forward.4} parent=0
    _
  %s6 = ssub.s32 1, %s4
  %s7 = scalar_select 0, %s6, %s4
  loop: start=0, step=1, limit=4
  $region2: #{basic_block_forward.4} parent=0 // loop_pre_header
    _
  $region3: #{basic_block_forward.4} parent=0 // loop_header
    %s9 = sphi 0, %s13
    %p10 = scmp.ge.s32.totalorder %s9, 4
    %s16 = sphi 0, %s28
    %s17 = sphi 0, %s24
    %s18 = sphi 0, %s16
    %s19 = sphi 0, %s17
    %s20 = sphi 0, %s18
    %s21 = sphi 0, %s19
    %s31 = sphi 0, %s33
    %s34 = sphi 0, %s31
    %s35 = sphi 0, %s34
    %s51 = sphi 0, %s35
    %s55 = sphi 0, %s55
    %s57 = sphi 0, %s55
    %s58 = sphi 0, %s57
    %s72 = sphi 0, %s58
    %s76 = sphi 0, %s76
    %s78 = sphi 0, %s76
    %s79 = sphi 0, %s78
    %s93 = sphi 0, %s79
    %s101 = sphi 0, %s103
    %s104 = sphi 0, %s101
    %s105 = sphi 0, %s104
    %s121 = sphi 0, %s105
  $region4: #{basic_block_forward.4} parent=0 // loop_header_branch
    %12 = sbr.rel (%p10) target = $region8
  $region5: #{basic_block_forward.4} parent=0 // loop_body
    %s14 = ssub.s32 %s9, 1
    %s15 = ssub.s32 %s9, 2
    %s22 = sadd.s32 1, %s17
    %p23 = scmp.ge.s32.totalorder %s22, 1
    %s24 = scalar_select %p23, 0, %s22
    %s25 = sadd.s32 1, %s16
    %s26 = scalar_select %p23, %s25, %s16
    %p27 = scmp.ge.s32.totalorder %s26, 2
    %s28 = scalar_select %p27, 0, %s26
    %s29 = ssub.s32 %s16, %s28
    %p30 = scmp.eq.s32.totalorder %s29, 0
    %s32 = sadd.s32 %s31, 1
    %s33 = scalar_select %p30, %s31, %s32
    %p36 = pneg %p30
    %p37 = scmp.eq.s32.totalorder %s9, 1
    %p38 = por %p36, %p37
    %p39 = scmp.ne.s32.totalorder %s31, %s34
    %p40 = scmp.eq.s32.totalorder %s9, 0
    %p41 = por %p39, %p40
    %p42 = scmp.ne.s32.totalorder %s31, %s34
    %p43 = scmp.eq.s32.totalorder %s14, 1
    %p44 = por %p42, %p43
    %p45 = scmp.ne.s32.totalorder %s34, %s35
    %p46 = scmp.eq.s32.totalorder %s14, 0
    %p47 = por %p45, %p46
    %p48 = scmp.ne.s32.totalorder %s34, %s35
    %p49 = scmp.eq.s32.totalorder %s15, 1
    %p50 = por %p48, %p49
    %p52 = scmp.ne.s32.totalorder %s35, %s51
    %p53 = scmp.eq.s32.totalorder %s15, 0
    %p54 = por %p52, %p53
    %s56 = sadd.s32 %s55, 1
    %p59 = scmp.eq.s32.totalorder %s9, 1
    %p60 = scmp.ne.s32.totalorder %s55, %s57
    %p61 = scmp.eq.s32.totalorder %s9, 0
    %p62 = por %p60, %p61
    %p63 = scmp.ne.s32.totalorder %s55, %s57
    %p64 = scmp.eq.s32.totalorder %s14, 1
    %p65 = por %p63, %p64
    %p66 = scmp.ne.s32.totalorder %s57, %s58
    %p67 = scmp.eq.s32.totalorder %s14, 0
    %p68 = por %p66, %p67
    %p69 = scmp.ne.s32.totalorder %s57, %s58
    %p70 = scmp.eq.s32.totalorder %s15, 1
    %p71 = por %p69, %p70
    %p73 = scmp.ne.s32.totalorder %s58, %s72
    %p74 = scmp.eq.s32.totalorder %s15, 0
    %p75 = por %p73, %p74
    %s77 = sadd.s32 %s76, 1
    %p80 = scmp.eq.s32.totalorder %s9, 1
    %p81 = scmp.ne.s32.totalorder %s76, %s78
    %p82 = scmp.eq.s32.totalorder %s9, 0
    %p83 = por %p81, %p82
    %p84 = scmp.ne.s32.totalorder %s76, %s78
    %p85 = scmp.eq.s32.totalorder %s14, 1
    %p86 = por %p84, %p85
    %p87 = scmp.ne.s32.totalorder %s78, %s79
    %p88 = scmp.eq.s32.totalorder %s14, 0
    %p89 = por %p87, %p88
    %p90 = scmp.ne.s32.totalorder %s78, %s79
    %p91 = scmp.eq.s32.totalorder %s15, 1
    %p92 = por %p90, %p91
    %p94 = scmp.ne.s32.totalorder %s79, %s93
    %p95 = scmp.eq.s32.totalorder %s15, 0
    %p96 = por %p94, %p95
    %s97 = ssub.s32 %s16, %s28
    %s98 = ssub.s32 %s17, %s24
    %s99 = sor.u32 %s97, %s98
    %p100 = scmp.eq.s32.totalorder %s99, 0
    %s102 = sadd.s32 %s101, 1
    %s103 = scalar_select %p100, %s101, %s102
    %p106 = pneg %p100
    %p107 = scmp.eq.s32.totalorder %s9, 1
    %p108 = por %p106, %p107
    %p109 = scmp.ne.s32.totalorder %s101, %s104
    %p110 = scmp.eq.s32.totalorder %s9, 0
    %p111 = por %p109, %p110
    %p112 = scmp.ne.s32.totalorder %s101, %s104
    %p113 = scmp.eq.s32.totalorder %s14, 1
    %p114 = por %p112, %p113
    %p115 = scmp.ne.s32.totalorder %s104, %s105
    %p116 = scmp.eq.s32.totalorder %s14, 0
    %p117 = por %p115, %p116
    %p118 = scmp.ne.s32.totalorder %s104, %s105
    %p119 = scmp.eq.s32.totalorder %s15, 1
    %p120 = por %p118, %p119
    %p122 = scmp.ne.s32.totalorder %s105, %s121
    %p123 = scmp.eq.s32.totalorder %s15, 0
    %p124 = por %p122, %p123
    %p125 = scmp.le.s32.totalorder 1, %s9
    %p126 = scmp.lt.s32.totalorder %s9, 3
    %p127 = pnand %p125, %p126
    %p128 = pneg %p127
    // Predicated region
    $region9: #{basic_block_forward.4} parent=5 // pred_check
      _
    $region10: #{basic_block_forward.4} parent=5 // pred_check_branch
      %130 = sbr.rel (%p127) target = $region12
    $region11: #{basic_block_forward.4} parent=5 // pred_region
      %s131 = ssub.s32 %s9, 1
      // Predicated region
      $region13: #{basic_block_forward.4} parent=11 // pred_check
        %p132 = pneg %p68
      $region14: #{basic_block_forward.4} parent=11 // pred_check_branch
        %134 = sbr.rel (%p132) target = $region16
      $region15: #{basic_block_forward.4} parent=11 // pred_region
        _
      $region16: #{basic_block_forward.4} parent=11 // pred_fallthru
        _
      // Predicated region
      $region17: #{basic_block_forward.4} parent=11 // pred_check
        %p135 = pneg %p89
      $region18: #{basic_block_forward.4} parent=11 // pred_check_branch
        %137 = sbr.rel (%p135) target = $region20
      $region19: #{basic_block_forward.4} parent=11 // pred_region
        _
      $region20: #{basic_block_forward.4} parent=11 // pred_fallthru
        _
    $region12: #{basic_block_forward.4} parent=5 // pred_fallthru
      _
    %p138 = scmp.lt.s32.totalorder %s9, 2
    // Predicated region
    $region21: #{basic_block_forward.4} parent=5 // pred_check
      %p139 = pneg %p138
    $region22: #{basic_block_forward.4} parent=5 // pred_check_branch
      %141 = sbr.rel (%p139) target = $region24
    $region23: #{basic_block_forward.4} parent=5 // pred_region
      // Predicated region
      $region25: #{basic_block_forward.4} parent=23 // pred_check
        %p142 = pneg %p41
      $region26: #{basic_block_forward.4} parent=23 // pred_check_branch
        %144 = sbr.rel (%p142) target = $region28
      $region27: #{basic_block_forward.4} parent=23 // pred_region
        %p145 = scmp.lt.s32.totalorder %s16, 1
        %s146 = scalar_select %p145, %s16, 1
        %s147 = smul.addr %s146, 8
        %s148 = smul.addr %s147, 4
        %s149 = scalar_lea.vmem %s0, %s148
      $region28: #{basic_block_forward.4} parent=23 // pred_fallthru
        _
    $region24: #{basic_block_forward.4} parent=5 // pred_fallthru
      _
    %p150 = scmp.le.s32.totalorder 1, %s9
    %p151 = scmp.lt.s32.totalorder %s9, 3
    %p152 = pnand %p150, %p151
    %p153 = pneg %p152
    // Predicated region
    $region29: #{basic_block_forward.4} parent=5 // pred_check
      _
    $region30: #{basic_block_forward.4} parent=5 // pred_check_branch
      %155 = sbr.rel (%p152) target = $region32
    $region31: #{basic_block_forward.4} parent=5 // pred_region
      %s156 = ssub.s32 %s9, 1
      %p157 = scmp.lt.s32.totalorder %s18, 1
      %s158 = scalar_select %p157, %s18, 1
      %s159 = smul.addr %s158, 8
      %s160 = smul.addr %s159, 4
      %s161 = scalar_lea.vmem %s0, %s160
      %p162 = pneg %p47
      %p163 = pneg %p44
      %p164 = pneg %p68
      %p165 = pneg %p65
      %p166 = pneg %p89
      %p167 = pneg %p86
      %p168 = pneg %p117
      %p169 = pneg %p114
      %s170 = smul.u32 8, %s19
      %p171 = scmp.lt.s32.totalorder %s18, 1
      %s172 = scalar_select %p171, %s18, 1
      %p173 = scmp.lt.s32.totalorder %s170, 7
      %s174 = scalar_select %p173, %s170, 7
      %s175 = smul.addr %s172, 8
      %s176 = sadd.s32 %s174, %s175
      %s177 = smul.addr %s176, 4
      %s178 = scalar_lea.vmem %s3, %s177
      %p179 = scmp.lt.s32.totalorder %s18, 1
      %s180 = scalar_select %p179, %s18, 1
      %s181 = smul.addr %s180, 8
      %s182 = smul.addr %s181, 4
      %s183 = scalar_lea.vmem %s0, %s182
      %s184 = smul.u32 8, %s19
      %p185 = scmp.lt.s32.totalorder %s18, 1
      %s186 = scalar_select %p185, %s18, 1
      %p187 = scmp.lt.s32.totalorder %s184, 7
      %s188 = scalar_select %p187, %s184, 7
      %s189 = smul.addr %s186, 8
      %s190 = sadd.s32 %s188, %s189
      %s191 = smul.addr %s190, 4
      %s192 = scalar_lea.vmem %s3, %s191
      %s193 = smul.u32 8, %s19
      %s195 = smul.u32 %s19, 8
      %s196 = smul.addr %s195, 4
      %s197 = scalar_lea.vmem %s183, %s196
      %v198 = vld [vmem:[%s197] sm:$0xf]
      %v199 = vld [vmem:[%s197 + $0x4] sm:$0xf]
      %v200 = vld [vmem:[%s197 + $0x8] sm:$0xf]
      %v201 = vld [vmem:[%s197 + $0xc] sm:$0xf]
      %v202 = vld [vmem:[%s197 + $0x10] sm:$0xf]
      %v203 = vld [vmem:[%s197 + $0x14] sm:$0xf]
      %v204 = vld [vmem:[%s197 + $0x18] sm:$0xf]
      %v205 = vld [vmem:[%s197 + $0x1c] sm:$0xf]
      %v206 = vld [vmem:[%s1] sm:$0xf]
      %v207 = vld [vmem:[%s1 + $0x4] sm:$0xf]
      %v208 = vld [vmem:[%s1 + $0x8] sm:$0xf]
      %v209 = vld [vmem:[%s1 + $0xc] sm:$0xf]
      %v210 = vld [vmem:[%s1 + $0x10] sm:$0xf]
      %v211 = vld [vmem:[%s1 + $0x14] sm:$0xf]
      %v212 = vld [vmem:[%s1 + $0x18] sm:$0xf]
      %v213 = vld [vmem:[%s1 + $0x1c] sm:$0xf]
      %v214 = vld [vmem:[%s1 + $0x20] sm:$0xf]
      %v215 = vld [vmem:[%s1 + $0x24] sm:$0xf]
      %v216 = vld [vmem:[%s1 + $0x28] sm:$0xf]
      %v217 = vld [vmem:[%s1 + $0x2c] sm:$0xf]
      %v218 = vld [vmem:[%s1 + $0x30] sm:$0xf]
      %v219 = vld [vmem:[%s1 + $0x34] sm:$0xf]
      %v220 = vld [vmem:[%s1 + $0x38] sm:$0xf]
      %v221 = vld [vmem:[%s1 + $0x3c] sm:$0xf]
      %v222 = vld [vmem:[%s2] sm:$0x1]
      %v224 = vlaneseq
      %v225 = vshrl.u32 %v224, 7
      %v226 = vsub.s32 0, %v225
      %v227 = vrot.slane %v222, %v226
      %v237 = vunpack.c.l.b16 %v198
      %v238 = vunpack.c.l.b16 %v199
      %v239 = vunpack.c.l.b16 %v200
      %v240 = vunpack.c.l.b16 %v201
      %v241 = vunpack.c.l.b16 %v202
      %v242 = vunpack.c.l.b16 %v203
      %v243 = vunpack.c.l.b16 %v204
      %v244 = vunpack.c.l.b16 %v205
      %v245 = vpack.c.b16 %v238, %v237
      %v246 = vpack.c.b16 %v240, %v239
      %v247 = vpack.c.b16 %v242, %v241
      %v248 = vpack.c.b16 %v244, %v243
      %v269 = vunpack.c.l.b16 %v206
      %v270 = vunpack.c.l.b16 %v207
      %v271 = vunpack.c.l.b16 %v208
      %v272 = vunpack.c.l.b16 %v209
      %v273 = vunpack.c.l.b16 %v210
      %v274 = vunpack.c.l.b16 %v211
      %v275 = vunpack.c.l.b16 %v212
      %v276 = vunpack.c.l.b16 %v213
      %v277 = vunpack.c.l.b16 %v214
      %v278 = vunpack.c.l.b16 %v215
      %v279 = vunpack.c.l.b16 %v216
      %v280 = vunpack.c.l.b16 %v217
      %v281 = vunpack.c.l.b16 %v218
      %v282 = vunpack.c.l.b16 %v219
      %v283 = vunpack.c.l.b16 %v220
      %v284 = vunpack.c.l.b16 %v221
      %v285 = vpack.c.b16 %v270, %v269
      %v286 = vpack.c.b16 %v272, %v271
      %v287 = vpack.c.b16 %v274, %v273
      %v288 = vpack.c.b16 %v276, %v275
      %v289 = vpack.c.b16 %v278, %v277
      %v290 = vpack.c.b16 %v280, %v279
      %v291 = vpack.c.b16 %v282, %v281
      %v292 = vpack.c.b16 %v284, %v283
      %301 = vmatprep.subr.bf16.mxu0 0
      %302 = vmatpush1.bf16.msra.mxu0 %v292
      %303 = vmatprep.subr.bf16.mxu0 0
      %304 = vmatpush1.bf16.msra.mxu0 %v291
      %305 = vmatprep.subr.bf16.mxu0 0
      %306 = vmatpush1.bf16.msra.mxu0 %v290
      %307 = vmatprep.subr.bf16.mxu0 0
      %308 = vmatpush1.bf16.msra.mxu0 %v289
      %309 = vmatprep.subr.bf16.mxu0 0
      %310 = vmatpush1.bf16.msra.mxu0 %v288
      %311 = vmatprep.subr.bf16.mxu0 0
      %312 = vmatpush1.bf16.msra.mxu0 %v287
      %313 = vmatprep.subr.bf16.mxu0 0
      %314 = vmatpush1.bf16.msra.mxu0 %v286
      %315 = vmatprep.subr.bf16.mxu0 0
      %316 = vmatpush1.bf16.msra.mxu0 %v285
      %317 = vmatprep.subr.bf16.mxu0 0
      %318 = vmatpush2.bf16.msra.mxu0 0
      %319 = vmatprep.subr.bf16.mxu0 0
      %320 = vmatpush2.bf16.msra.mxu0 0
      %321 = vmatprep.subr.bf16.mxu0 0
      %322 = vmatpush2.bf16.msra.mxu0 0
      %323 = vmatprep.subr.bf16.mxu0 0
      %324 = vmatpush2.bf16.msra.mxu0 0
      %325 = vmatprep.subr.bf16.mxu0 0
      %326 = vmatpush2.bf16.msra.mxu0 0
      %327 = vmatprep.subr.bf16.mxu0 0
      %328 = vmatpush2.bf16.msra.mxu0 0
      %329 = vmatprep.subr.bf16.mxu0 0
      %330 = vmatpush2.bf16.msra.mxu0 0
      %331 = vmatprep.subr.bf16.mxu0 0
      %332 = vmatpush2.bf16.msra.mxu0 0
      %333 = vmatprep.mubr.bf16.mxu0 0
      %334 = vmatmul.mubr.bf16.gmra.mxu0 %v245
      %v335 = vpop.f32.mrf.mxu0
      %v336 = vadd.f32 %v227, %v335
      %v337 = vpop.f32.mrf.mxu0
      %v338 = vpop.f32.mrf.mxu0
      %v339 = vadd.f32 %v227, %v338
      %v340 = vpop.f32.mrf.mxu0
      %341 = vmatprep.mubr.bf16.mxu0 0
      %342 = vmatmul.mubr.bf16.gmra.mxu0 %v246
      %v343 = vpop.f32.mrf.mxu0
      %v344 = vadd.f32 %v227, %v343
      %v345 = vpop.f32.mrf.mxu0
      %v346 = vpop.f32.mrf.mxu0
      %v347 = vadd.f32 %v227, %v346
      %v348 = vpop.f32.mrf.mxu0
      %349 = vmatprep.mubr.bf16.mxu0 0
      %350 = vmatmul.mubr.bf16.gmra.mxu0 %v247
      %v351 = vpop.f32.mrf.mxu0
      %v352 = vadd.f32 %v227, %v351
      %v353 = vpop.f32.mrf.mxu0
      %v354 = vpop.f32.mrf.mxu0
      %v355 = vadd.f32 %v227, %v354
      %v356 = vpop.f32.mrf.mxu0
      %357 = vmatprep.mubr.bf16.mxu0 0
      %358 = vmatmul.mubr.bf16.gmra.mxu0 %v248
      %v359 = vpop.f32.mrf.mxu0
      %v360 = vadd.f32 %v227, %v359
      %v361 = vpop.f32.mrf.mxu0
      %v362 = vpop.f32.mrf.mxu0
      %v363 = vadd.f32 %v227, %v362
      %v364 = vpop.f32.mrf.mxu0
      %365 = vdwg.mxu0
      %v366 = vpack.c.bf16 %v336, %v336
      %v367 = vpack.c.bf16 %v339, %v339
      %v368 = vpack.c.bf16 %v344, %v344
      %v369 = vpack.c.bf16 %v347, %v347
      %v370 = vpack.c.bf16 %v352, %v352
      %v371 = vpack.c.bf16 %v355, %v355
      %v372 = vpack.c.bf16 %v360, %v360
      %v373 = vpack.c.bf16 %v363, %v363
      %374 = vst [vmem:[%s192] sm:$0xf] %v366
      %375 = vst [vmem:[%s192 + $0x4] sm:$0xf] %v367
      %376 = vst [vmem:[%s192 + $0x8] sm:$0xf] %v368
      %377 = vst [vmem:[%s192 + $0xc] sm:$0xf] %v369
      %378 = vst [vmem:[%s192 + $0x10] sm:$0xf] %v370
      %379 = vst [vmem:[%s192 + $0x14] sm:$0xf] %v371
      %380 = vst [vmem:[%s192 + $0x18] sm:$0xf] %v372
      %381 = vst [vmem:[%s192 + $0x1c] sm:$0xf] %v373
      %s382 = smul.u32 8, %s19
      %p383 = scmp.lt.s32.totalorder %s18, 1
      %s384 = scalar_select %p383, %s18, 1
      %p385 = scmp.lt.s32.totalorder %s382, 7
      %s386 = scalar_select %p385, %s382, 7
      %s387 = smul.addr %s384, 8
      %s388 = sadd.s32 %s386, %s387
      %s389 = smul.addr %s388, 4
      %s390 = scalar_lea.vmem %s3, %s389
      // Predicated region
      $region33: #{basic_block_forward.4} parent=31 // pred_check
        %p391 = pneg %p114
      $region34: #{basic_block_forward.4} parent=31 // pred_check_branch
        %393 = sbr.rel (%p391) target = $region36
      $region35: #{basic_block_forward.4} parent=31 // pred_region
        %s394 = smul.u32 8, %s19
      $region36: #{basic_block_forward.4} parent=31 // pred_fallthru
        _
    $region32: #{basic_block_forward.4} parent=5 // pred_fallthru
      _
    %p395 = scmp.le.s32.totalorder 2, %s9
    // Predicated region
    $region37: #{basic_block_forward.4} parent=5 // pred_check
      %p396 = pneg %p395
    $region38: #{basic_block_forward.4} parent=5 // pred_check_branch
      %398 = sbr.rel (%p396) target = $region40
    $region39: #{basic_block_forward.4} parent=5 // pred_region
      %s399 = ssub.s32 %s9, 2
      // Predicated region
      $region41: #{basic_block_forward.4} parent=39 // pred_check
        %p400 = pneg %p120
      $region42: #{basic_block_forward.4} parent=39 // pred_check_branch
        %402 = sbr.rel (%p400) target = $region44
      $region43: #{basic_block_forward.4} parent=39 // pred_region
        %s403 = smul.u32 8, %s21
        %p404 = scmp.lt.s32.totalorder %s20, 1
        %s405 = scalar_select %p404, %s20, 1
        %p406 = scmp.lt.s32.totalorder %s403, 7
        %s407 = scalar_select %p406, %s403, 7
        %s408 = smul.addr %s405, 8
        %s409 = sadd.s32 %s407, %s408
        %s410 = smul.addr %s409, 4
        %s411 = scalar_lea.vmem %s3, %s410
      $region44: #{basic_block_forward.4} parent=39 // pred_fallthru
        _
    $region40: #{basic_block_forward.4} parent=5 // pred_fallthru
      _
  $region6: #{basic_block_forward.4} parent=0 // loop_footer
    %s13 = sadd.s32 1, %s9
  $region7: #{basic_block_forward.4} parent=0 // loop_footer_branch
    %8 = sbr.rel target = $region3
  $region8: #{basic_block_forward.4} parent=0 // loop_exit
    _

// kernel: basic_block_forward.3
$region0: #{basic_block_forward.3}
  #allocation0 [shape = 'u32[]', space=smem, size = 0x4, offset = 0x4, fixed_abs, tag = 'smem constant byte address 0x4 - core index']
  #allocation1 [shape = 'u32[144,128]{1,0:T(1,128)}', space=vmem, size = 0x12000, scoped, tag = 'internal scratch']
  %s0 = inlined_call_operand.vmem [shape: bf16[2,4,9,9,128], index: 0, kind: input, shape index: {}]
  %s1 = inlined_call_operand.vmem [shape: bf16[1152,128], index: 1, kind: input, shape index: {}]
  %s2 = inlined_call_operand.vmem [shape: f32[1,128], index: 2, kind: input, shape index: {}]
  %s3 = inlined_call_operand.vmem [shape: bf16[2,8,8,128], index: 3, kind: output, shape index: {}]
  %s4 = sld [smem:[#allocation0]]
  $region45: #{basic_block_forward.3} parent=0
    _
  %s6 = ssub.s32 1, %s4
  %s7 = scalar_select 0, %s6, %s4
  loop: start=0, step=1, limit=4
  $region2: #{basic_block_forward.3} parent=0 // loop_pre_header
    _
  $region3: #{basic_block_forward.3} parent=0 // loop_header
    %s9 = sphi 0, %s13
    %p10 = scmp.ge.s32.totalorder %s9, 4
    %s16 = sphi 0, %s28
    %s17 = sphi 0, %s24
    %s18 = sphi 0, %s16
    %s19 = sphi 0, %s17
    %s20 = sphi 0, %s18
    %s21 = sphi 0, %s19
    %s31 = sphi 0, %s33
    %s34 = sphi 0, %s31
    %s35 = sphi 0, %s34
    %s51 = sphi 0, %s35
    %s55 = sphi 0, %s55
    %s57 = sphi 0, %s55
    %s58 = sphi 0, %s57
    %s72 = sphi 0, %s58
    %s76 = sphi 0, %s76
    %s78 = sphi 0, %s76
    %s79 = sphi 0, %s78
    %s93 = sphi 0, %s79
    %s101 = sphi 0, %s103
    %s104 = sphi 0, %s101
    %s105 = sphi 0, %s104
    %s121 = sphi 0, %s105
  $region4: #{basic_block_forward.3} parent=0 // loop_header_branch
    %12 = sbr.rel (%p10) target = $region8
  $region5: #{basic_block_forward.3} parent=0 // loop_body
    %s14 = ssub.s32 %s9, 1
    %s15 = ssub.s32 %s9, 2
    %s22 = sadd.s32 1, %s17
    %p23 = scmp.ge.s32.totalorder %s22, 1
    %s24 = scalar_select %p23, 0, %s22
    %s25 = sadd.s32 1, %s16
    %s26 = scalar_select %p23, %s25, %s16
    %p27 = scmp.ge.s32.totalorder %s26, 2
    %s28 = scalar_select %p27, 0, %s26
    %s29 = ssub.s32 %s16, %s28
    %p30 = scmp.eq.s32.totalorder %s29, 0
    %s32 = sadd.s32 %s31, 1
    %s33 = scalar_select %p30, %s31, %s32
    %p36 = pneg %p30
    %p37 = scmp.eq.s32.totalorder %s9, 1
    %p38 = por %p36, %p37
    %p39 = scmp.ne.s32.totalorder %s31, %s34
    %p40 = scmp.eq.s32.totalorder %s9, 0
    %p41 = por %p39, %p40
    %p42 = scmp.ne.s32.totalorder %s31, %s34
    %p43 = scmp.eq.s32.totalorder %s14, 1
    %p44 = por %p42, %p43
    %p45 = scmp.ne.s32.totalorder %s34, %s35
    %p46 = scmp.eq.s32.totalorder %s14, 0
    %p47 = por %p45, %p46
    %p48 = scmp.ne.s32.totalorder %s34, %s35
    %p49 = scmp.eq.s32.totalorder %s15, 1
    %p50 = por %p48, %p49
    %p52 = scmp.ne.s32.totalorder %s35, %s51
    %p53 = scmp.eq.s32.totalorder %s15, 0
    %p54 = por %p52, %p53
    %s56 = sadd.s32 %s55, 1
    %p59 = scmp.eq.s32.totalorder %s9, 1
    %p60 = scmp.ne.s32.totalorder %s55, %s57
    %p61 = scmp.eq.s32.totalorder %s9, 0
    %p62 = por %p60, %p61
    %p63 = scmp.ne.s32.totalorder %s55, %s57
    %p64 = scmp.eq.s32.totalorder %s14, 1
    %p65 = por %p63, %p64
    %p66 = scmp.ne.s32.totalorder %s57, %s58
    %p67 = scmp.eq.s32.totalorder %s14, 0
    %p68 = por %p66, %p67
    %p69 = scmp.ne.s32.totalorder %s57, %s58
    %p70 = scmp.eq.s32.totalorder %s15, 1
    %p71 = por %p69, %p70
    %p73 = scmp.ne.s32.totalorder %s58, %s72
    %p74 = scmp.eq.s32.totalorder %s15, 0
    %p75 = por %p73, %p74
    %s77 = sadd.s32 %s76, 1
    %p80 = scmp.eq.s32.totalorder %s9, 1
    %p81 = scmp.ne.s32.totalorder %s76, %s78
    %p82 = scmp.eq.s32.totalorder %s9, 0
    %p83 = por %p81, %p82
    %p84 = scmp.ne.s32.totalorder %s76, %s78
    %p85 = scmp.eq.s32.totalorder %s14, 1
    %p86 = por %p84, %p85
    %p87 = scmp.ne.s32.totalorder %s78, %s79
    %p88 = scmp.eq.s32.totalorder %s14, 0
    %p89 = por %p87, %p88
    %p90 = scmp.ne.s32.totalorder %s78, %s79
    %p91 = scmp.eq.s32.totalorder %s15, 1
    %p92 = por %p90, %p91
    %p94 = scmp.ne.s32.totalorder %s79, %s93
    %p95 = scmp.eq.s32.totalorder %s15, 0
    %p96 = por %p94, %p95
    %s97 = ssub.s32 %s16, %s28
    %s98 = ssub.s32 %s17, %s24
    %s99 = sor.u32 %s97, %s98
    %p100 = scmp.eq.s32.totalorder %s99, 0
    %s102 = sadd.s32 %s101, 1
    %s103 = scalar_select %p100, %s101, %s102
    %p106 = pneg %p100
    %p107 = scmp.eq.s32.totalorder %s9, 1
    %p108 = por %p106, %p107
    %p109 = scmp.ne.s32.totalorder %s101, %s104
    %p110 = scmp.eq.s32.totalorder %s9, 0
    %p111 = por %p109, %p110
    %p112 = scmp.ne.s32.totalorder %s101, %s104
    %p113 = scmp.eq.s32.totalorder %s14, 1
    %p114 = por %p112, %p113
    %p115 = scmp.ne.s32.totalorder %s104, %s105
    %p116 = scmp.eq.s32.totalorder %s14, 0
    %p117 = por %p115, %p116
    %p118 = scmp.ne.s32.totalorder %s104, %s105
    %p119 = scmp.eq.s32.totalorder %s15, 1
    %p120 = por %p118, %p119
    %p122 = scmp.ne.s32.totalorder %s105, %s121
    %p123 = scmp.eq.s32.totalorder %s15, 0
    %p124 = por %p122, %p123
    %p125 = scmp.le.s32.totalorder 1, %s9
    %p126 = scmp.lt.s32.totalorder %s9, 3
    %p127 = pnand %p125, %p126
    %p128 = pneg %p127
    // Predicated region
    $region9: #{basic_block_forward.3} parent=5 // pred_check
      _
    $region10: #{basic_block_forward.3} parent=5 // pred_check_branch
      %130 = sbr.rel (%p127) target = $region12
    $region11: #{basic_block_forward.3} parent=5 // pred_region
      %s131 = ssub.s32 %s9, 1
      // Predicated region
      $region13: #{basic_block_forward.3} parent=11 // pred_check
        %p132 = pneg %p68
      $region14: #{basic_block_forward.3} parent=11 // pred_check_branch
        %134 = sbr.rel (%p132) target = $region16
      $region15: #{basic_block_forward.3} parent=11 // pred_region
        _
      $region16: #{basic_block_forward.3} parent=11 // pred_fallthru
        _
      // Predicated region
      $region17: #{basic_block_forward.3} parent=11 // pred_check
        %p135 = pneg %p89
      $region18: #{basic_block_forward.3} parent=11 // pred_check_branch
        %137 = sbr.rel (%p135) target = $region20
      $region19: #{basic_block_forward.3} parent=11 // pred_region
        _
      $region20: #{basic_block_forward.3} parent=11 // pred_fallthru
        _
    $region12: #{basic_block_forward.3} parent=5 // pred_fallthru
      _
    %p138 = scmp.lt.s32.totalorder %s9, 2
    // Predicated region
    $region21: #{basic_block_forward.3} parent=5 // pred_check
      %p139 = pneg %p138
    $region22: #{basic_block_forward.3} parent=5 // pred_check_branch
      %141 = sbr.rel (%p139) target = $region24
    $region23: #{basic_block_forward.3} parent=5 // pred_region
      // Predicated region
      $region25: #{basic_block_forward.3} parent=23 // pred_check
        %p142 = pneg %p41
      $region26: #{basic_block_forward.3} parent=23 // pred_check_branch
        %144 = sbr.rel (%p142) target = $region28
      $region27: #{basic_block_forward.3} parent=23 // pred_region
        %p145 = scmp.lt.s32.totalorder %s16, 1
        %s146 = scalar_select %p145, %s16, 1
        %s147 = smul.addr %s146, 72
        %s148 = smul.addr %s147, 4
        %s149 = scalar_lea.vmem %s0, %s148
      $region28: #{basic_block_forward.3} parent=23 // pred_fallthru
        _
    $region24: #{basic_block_forward.3} parent=5 // pred_fallthru
      _
    %p150 = scmp.le.s32.totalorder 1, %s9
    %p151 = scmp.lt.s32.totalorder %s9, 3
    %p152 = pnand %p150, %p151
    %p153 = pneg %p152
    // Predicated region
    $region29: #{basic_block_forward.3} parent=5 // pred_check
      _
    $region30: #{basic_block_forward.3} parent=5 // pred_check_branch
      %155 = sbr.rel (%p152) target = $region32
    $region31: #{basic_block_forward.3} parent=5 // pred_region
      %s156 = ssub.s32 %s9, 1
      %p157 = scmp.lt.s32.totalorder %s18, 1
      %s158 = scalar_select %p157, %s18, 1
      %s159 = smul.addr %s158, 72
      %s160 = smul.addr %s159, 4
      %s161 = scalar_lea.vmem %s0, %s160
      %p162 = pneg %p47
      %p163 = pneg %p44
      %p164 = pneg %p68
      %p165 = pneg %p65
      %p166 = pneg %p89
      %p167 = pneg %p86
      %p168 = pneg %p117
      %p169 = pneg %p114
      %s170 = smul.u32 8, %s19
      %p171 = scmp.lt.s32.totalorder %s18, 1
      %s172 = scalar_select %p171, %s18, 1
      %p173 = scmp.lt.s32.totalorder %s170, 7
      %s174 = scalar_select %p173, %s170, 7
      %s175 = smul.addr %s172, 8
      %s176 = sadd.s32 %s174, %s175
      %s177 = smul.addr %s176, 4
      %s178 = scalar_lea.vmem %s3, %s177
      %p179 = scmp.lt.s32.totalorder %s18, 1
      %s180 = scalar_select %p179, %s18, 1
      %s181 = smul.addr %s180, 72
      %s182 = smul.addr %s181, 4
      %s183 = scalar_lea.vmem %s0, %s182
      %s184 = smul.u32 8, %s19
      %p185 = scmp.lt.s32.totalorder %s18, 1
      %s186 = scalar_select %p185, %s18, 1
      %p187 = scmp.lt.s32.totalorder %s184, 7
      %s188 = scalar_select %p187, %s184, 7
      %s189 = smul.addr %s186, 8
      %s190 = sadd.s32 %s188, %s189
      %s191 = smul.addr %s190, 4
      %s192 = scalar_lea.vmem %s3, %s191
      %s193 = smul.u32 8, %s19
      %s195 = smul.u32 %s19, 8
      %s196 = smul.u32 %s195, 2
      %s197 = smul.addr %s196, 4
      %s198 = scalar_lea.vmem %s183, %s197
      %v199 = vld [vmem:[%s198] sm:$0xf]
      %v200 = vld [vmem:[%s198 + $0x8] sm:$0xf]
      %v201 = vld [vmem:[%s198 + $0x10] sm:$0xf]
      %v202 = vld [vmem:[%s198 + $0x18] sm:$0xf]
      %v203 = vld [vmem:[%s198 + $0x20] sm:$0xf]
      %v204 = vld [vmem:[%s198 + $0x28] sm:$0xf]
      %v205 = vld [vmem:[%s198 + $0x30] sm:$0xf]
      %v206 = vld [vmem:[%s198 + $0x38] sm:$0xf]
      %s207 = sadd.s32 %s196, 18
      %s208 = smul.addr %s207, 4
      %s209 = scalar_lea.vmem %s183, %s208
      %v210 = vld [vmem:[%s209] sm:$0xf]
      %v211 = vld [vmem:[%s209 + $0x8] sm:$0xf]
      %v212 = vld [vmem:[%s209 + $0x10] sm:$0xf]
      %v213 = vld [vmem:[%s209 + $0x18] sm:$0xf]
      %v214 = vld [vmem:[%s209 + $0x20] sm:$0xf]
      %v215 = vld [vmem:[%s209 + $0x28] sm:$0xf]
      %v216 = vld [vmem:[%s209 + $0x30] sm:$0xf]
      %v217 = vld [vmem:[%s209 + $0x38] sm:$0xf]
      %v218 = vld [vmem:[%s198 + $0x4] sm:$0x1]
      %v219 = vld [vmem:[%s198 + $0xc] sm:$0x1]
      %v220 = vld [vmem:[%s198 + $0x14] sm:$0x1]
      %v221 = vld [vmem:[%s198 + $0x1c] sm:$0x1]
      %v222 = vld [vmem:[%s198 + $0x24] sm:$0x1]
      %v223 = vld [vmem:[%s198 + $0x2c] sm:$0x1]
      %v224 = vld [vmem:[%s198 + $0x34] sm:$0x1]
      %v225 = vld [vmem:[%s198 + $0x3c] sm:$0x1]
      %vm226 = vsmask.f32 3328
      %vm227 = vsmask.f32 7440
      %vm228 = vmor %vm226, %vm227
      %v230 = vshrl.u32 %v199, 16
      %v232 = vrot.slane %v230, 4
      %v233 = vshll.u32 %v199, 16
      %v235 = vrot.slane %v233, 5
      %v236 = vor.u32 %v232, %v235
      %v237 = vrot.slane %v236, 4
      %v239 = vshll.u32 %v218, 16
      %v241 = vrot.slane %v239, 5
      %v242 = vsel %vm228, %v237, %v241
      %v244 = vshrl.u32 %v200, 16
      %v246 = vrot.slane %v244, 4
      %v247 = vshll.u32 %v200, 16
      %v249 = vrot.slane %v247, 5
      %v250 = vor.u32 %v246, %v249
      %v251 = vrot.slane %v250, 4
      %v253 = vshll.u32 %v219, 16
      %v255 = vrot.slane %v253, 5
      %v256 = vsel %vm228, %v251, %v255
      %v258 = vshrl.u32 %v201, 16
      %v260 = vrot.slane %v258, 4
      %v261 = vshll.u32 %v201, 16
      %v263 = vrot.slane %v261, 5
      %v264 = vor.u32 %v260, %v263
      %v265 = vrot.slane %v264, 4
      %v267 = vshll.u32 %v220, 16
      %v269 = vrot.slane %v267, 5
      %v270 = vsel %vm228, %v265, %v269
      %v272 = vshrl.u32 %v202, 16
      %v274 = vrot.slane %v272, 4
      %v275 = vshll.u32 %v202, 16
      %v277 = vrot.slane %v275, 5
      %v278 = vor.u32 %v274, %v277
      %v279 = vrot.slane %v278, 4
      %v281 = vshll.u32 %v221, 16
      %v283 = vrot.slane %v281, 5
      %v284 = vsel %vm228, %v279, %v283
      %v286 = vshrl.u32 %v203, 16
      %v288 = vrot.slane %v286, 4
      %v289 = vshll.u32 %v203, 16
      %v291 = vrot.slane %v289, 5
      %v292 = vor.u32 %v288, %v291
      %v293 = vrot.slane %v292, 4
      %v295 = vshll.u32 %v222, 16
      %v297 = vrot.slane %v295, 5
      %v298 = vsel %vm228, %v293, %v297
      %v300 = vshrl.u32 %v204, 16
      %v302 = vrot.slane %v300, 4
      %v303 = vshll.u32 %v204, 16
      %v305 = vrot.slane %v303, 5
      %v306 = vor.u32 %v302, %v305
      %v307 = vrot.slane %v306, 4
      %v309 = vshll.u32 %v223, 16
      %v311 = vrot.slane %v309, 5
      %v312 = vsel %vm228, %v307, %v311
      %v314 = vshrl.u32 %v205, 16
      %v316 = vrot.slane %v314, 4
      %v317 = vshll.u32 %v205, 16
      %v319 = vrot.slane %v317, 5
      %v320 = vor.u32 %v316, %v319
      %v321 = vrot.slane %v320, 4
      %v323 = vshll.u32 %v224, 16
      %v325 = vrot.slane %v323, 5
      %v326 = vsel %vm228, %v321, %v325
      %v328 = vshrl.u32 %v206, 16
      %v330 = vrot.slane %v328, 4
      %v331 = vshll.u32 %v206, 16
      %v333 = vrot.slane %v331, 5
      %v334 = vor.u32 %v330, %v333
      %v335 = vrot.slane %v334, 4
      %v337 = vshll.u32 %v225, 16
      %v339 = vrot.slane %v337, 5
      %v340 = vsel %vm228, %v335, %v339
      %s341 = sadd.s32 %s196, 36
      %s342 = smul.addr %s341, 4
      %s343 = scalar_lea.vmem %s183, %s342
      %v344 = vld [vmem:[%s343] sm:$0xf]
      %v345 = vld [vmem:[%s343 + $0x8] sm:$0xf]
      %v346 = vld [vmem:[%s343 + $0x10] sm:$0xf]
      %v347 = vld [vmem:[%s343 + $0x18] sm:$0xf]
      %v348 = vld [vmem:[%s343 + $0x20] sm:$0xf]
      %v349 = vld [vmem:[%s343 + $0x28] sm:$0xf]
      %v350 = vld [vmem:[%s343 + $0x30] sm:$0xf]
      %v351 = vld [vmem:[%s343 + $0x38] sm:$0xf]
      %s352 = sadd.s32 %s196, 54
      %s353 = smul.addr %s352, 4
      %s354 = scalar_lea.vmem %s183, %s353
      %v355 = vld [vmem:[%s354] sm:$0xf]
      %v356 = vld [vmem:[%s354 + $0x8] sm:$0xf]
      %v357 = vld [vmem:[%s354 + $0x10] sm:$0xf]
      %v358 = vld [vmem:[%s354 + $0x18] sm:$0xf]
      %v359 = vld [vmem:[%s354 + $0x20] sm:$0xf]
      %v360 = vld [vmem:[%s354 + $0x28] sm:$0xf]
      %v361 = vld [vmem:[%s354 + $0x30] sm:$0xf]
      %v362 = vld [vmem:[%s354 + $0x38] sm:$0xf]
      %v363 = vld [vmem:[%s343 + $0x4] sm:$0x1]
      %v364 = vld [vmem:[%s343 + $0xc] sm:$0x1]
      %v365 = vld [vmem:[%s343 + $0x14] sm:$0x1]
      %v366 = vld [vmem:[%s343 + $0x1c] sm:$0x1]
      %v367 = vld [vmem:[%s343 + $0x24] sm:$0x1]
      %v368 = vld [vmem:[%s343 + $0x2c] sm:$0x1]
      %v369 = vld [vmem:[%s343 + $0x34] sm:$0x1]
      %v370 = vld [vmem:[%s343 + $0x3c] sm:$0x1]
      %v372 = vshrl.u32 %v344, 16
      %v374 = vrot.slane %v372, 4
      %v375 = vshll.u32 %v344, 16
      %v377 = vrot.slane %v375, 5
      %v378 = vor.u32 %v374, %v377
      %v379 = vrot.slane %v378, 4
      %v381 = vshll.u32 %v363, 16
      %v383 = vrot.slane %v381, 5
      %v384 = vsel %vm228, %v379, %v383
      %v386 = vshrl.u32 %v345, 16
      %v388 = vrot.slane %v386, 4
      %v389 = vshll.u32 %v345, 16
      %v391 = vrot.slane %v389, 5
      %v392 = vor.u32 %v388, %v391
      %v393 = vrot.slane %v392, 4
      %v395 = vshll.u32 %v364, 16
      %v397 = vrot.slane %v395, 5
      %v398 = vsel %vm228, %v393, %v397
      %v400 = vshrl.u32 %v346, 16
      %v402 = vrot.slane %v400, 4
      %v403 = vshll.u32 %v346, 16
      %v405 = vrot.slane %v403, 5
      %v406 = vor.u32 %v402, %v405
      %v407 = vrot.slane %v406, 4
      %v409 = vshll.u32 %v365, 16
      %v411 = vrot.slane %v409, 5
      %v412 = vsel %vm228, %v407, %v411
      %v414 = vshrl.u32 %v347, 16
      %v416 = vrot.slane %v414, 4
      %v417 = vshll.u32 %v347, 16
      %v419 = vrot.slane %v417, 5
      %v420 = vor.u32 %v416, %v419
      %v421 = vrot.slane %v420, 4
      %v423 = vshll.u32 %v366, 16
      %v425 = vrot.slane %v423, 5
      %v426 = vsel %vm228, %v421, %v425
      %v428 = vshrl.u32 %v348, 16
      %v430 = vrot.slane %v428, 4
      %v431 = vshll.u32 %v348, 16
      %v433 = vrot.slane %v431, 5
      %v434 = vor.u32 %v430, %v433
      %v435 = vrot.slane %v434, 4
      %v437 = vshll.u32 %v367, 16
      %v439 = vrot.slane %v437, 5
      %v440 = vsel %vm228, %v435, %v439
      %v442 = vshrl.u32 %v349, 16
      %v444 = vrot.slane %v442, 4
      %v445 = vshll.u32 %v349, 16
      %v447 = vrot.slane %v445, 5
      %v448 = vor.u32 %v444, %v447
      %v449 = vrot.slane %v448, 4
      %v451 = vshll.u32 %v368, 16
      %v453 = vrot.slane %v451, 5
      %v454 = vsel %vm228, %v449, %v453
      %v456 = vshrl.u32 %v350, 16
      %v458 = vrot.slane %v456, 4
      %v459 = vshll.u32 %v350, 16
      %v461 = vrot.slane %v459, 5
      %v462 = vor.u32 %v458, %v461
      %v463 = vrot.slane %v462, 4
      %v465 = vshll.u32 %v369, 16
      %v467 = vrot.slane %v465, 5
      %v468 = vsel %vm228, %v463, %v467
      %v470 = vshrl.u32 %v351, 16
      %v472 = vrot.slane %v470, 4
      %v473 = vshll.u32 %v351, 16
      %v475 = vrot.slane %v473, 5
      %v476 = vor.u32 %v472, %v475
      %v477 = vrot.slane %v476, 4
      %v479 = vshll.u32 %v370, 16
      %v481 = vrot.slane %v479, 5
      %v482 = vsel %vm228, %v477, %v481
      %s483 = sadd.s32 %s195, 1
      %s484 = smul.u32 %s483, 2
      %s485 = smul.addr %s484, 4
      %s486 = scalar_lea.vmem %s183, %s485
      %v487 = vld [vmem:[%s486] sm:$0xf]
      %v488 = vld [vmem:[%s486 + $0x8] sm:$0xf]
      %v489 = vld [vmem:[%s486 + $0x10] sm:$0xf]
      %v490 = vld [vmem:[%s486 + $0x18] sm:$0xf]
      %v491 = vld [vmem:[%s486 + $0x20] sm:$0xf]
      %v492 = vld [vmem:[%s486 + $0x28] sm:$0xf]
      %v493 = vld [vmem:[%s486 + $0x30] sm:$0xf]
      %v494 = vld [vmem:[%s486 + $0x38] sm:$0xf]
      %s495 = sadd.s32 %s484, 18
      %s496 = smul.addr %s495, 4
      %s497 = scalar_lea.vmem %s183, %s496
      %v498 = vld [vmem:[%s497] sm:$0xf]
      %v499 = vld [vmem:[%s497 + $0x8] sm:$0xf]
      %v500 = vld [vmem:[%s497 + $0x10] sm:$0xf]
      %v501 = vld [vmem:[%s497 + $0x18] sm:$0xf]
      %v502 = vld [vmem:[%s497 + $0x20] sm:$0xf]
      %v503 = vld [vmem:[%s497 + $0x28] sm:$0xf]
      %v504 = vld [vmem:[%s497 + $0x30] sm:$0xf]
      %v505 = vld [vmem:[%s497 + $0x38] sm:$0xf]
      %v506 = vld [vmem:[%s486 + $0x4] sm:$0x1]
      %v507 = vld [vmem:[%s486 + $0xc] sm:$0x1]
      %v508 = vld [vmem:[%s486 + $0x14] sm:$0x1]
      %v509 = vld [vmem:[%s486 + $0x1c] sm:$0x1]
      %v510 = vld [vmem:[%s486 + $0x24] sm:$0x1]
      %v511 = vld [vmem:[%s486 + $0x2c] sm:$0x1]
      %v512 = vld [vmem:[%s486 + $0x34] sm:$0x1]
      %v513 = vld [vmem:[%s486 + $0x3c] sm:$0x1]
      %v515 = vshrl.u32 %v487, 16
      %v517 = vrot.slane %v515, 4
      %v518 = vshll.u32 %v487, 16
      %v520 = vrot.slane %v518, 5
      %v521 = vor.u32 %v517, %v520
      %v522 = vrot.slane %v521, 4
      %v524 = vshll.u32 %v506, 16
      %v526 = vrot.slane %v524, 5
      %v527 = vsel %vm228, %v522, %v526
      %v529 = vshrl.u32 %v488, 16
      %v531 = vrot.slane %v529, 4
      %v532 = vshll.u32 %v488, 16
      %v534 = vrot.slane %v532, 5
      %v535 = vor.u32 %v531, %v534
      %v536 = vrot.slane %v535, 4
      %v538 = vshll.u32 %v507, 16
      %v540 = vrot.slane %v538, 5
      %v541 = vsel %vm228, %v536, %v540
      %v543 = vshrl.u32 %v489, 16
      %v545 = vrot.slane %v543, 4
      %v546 = vshll.u32 %v489, 16
      %v548 = vrot.slane %v546, 5
      %v549 = vor.u32 %v545, %v548
      %v550 = vrot.slane %v549, 4
      %v552 = vshll.u32 %v508, 16
      %v554 = vrot.slane %v552, 5
      %v555 = vsel %vm228, %v550, %v554
      %v557 = vshrl.u32 %v490, 16
      %v559 = vrot.slane %v557, 4
      %v560 = vshll.u32 %v490, 16
      %v562 = vrot.slane %v560, 5
      %v563 = vor.u32 %v559, %v562
      %v564 = vrot.slane %v563, 4
      %v566 = vshll.u32 %v509, 16
      %v568 = vrot.slane %v566, 5
      %v569 = vsel %vm228, %v564, %v568
      %v571 = vshrl.u32 %v491, 16
      %v573 = vrot.slane %v571, 4
      %v574 = vshll.u32 %v491, 16
      %v576 = vrot.slane %v574, 5
      %v577 = vor.u32 %v573, %v576
      %v578 = vrot.slane %v577, 4
      %v580 = vshll.u32 %v510, 16
      %v582 = vrot.slane %v580, 5
      %v583 = vsel %vm228, %v578, %v582
      %v585 = vshrl.u32 %v492, 16
      %v587 = vrot.slane %v585, 4
      %v588 = vshll.u32 %v492, 16
      %v590 = vrot.slane %v588, 5
      %v591 = vor.u32 %v587, %v590
      %v592 = vrot.slane %v591, 4
      %v594 = vshll.u32 %v511, 16
      %v596 = vrot.slane %v594, 5
      %v597 = vsel %vm228, %v592, %v596
      %v599 = vshrl.u32 %v493, 16
      %v601 = vrot.slane %v599, 4
      %v602 = vshll.u32 %v493, 16
      %v604 = vrot.slane %v602, 5
      %v605 = vor.u32 %v601, %v604
      %v606 = vrot.slane %v605, 4
      %v608 = vshll.u32 %v512, 16
      %v610 = vrot.slane %v608, 5
      %v611 = vsel %vm228, %v606, %v610
      %v613 = vshrl.u32 %v494, 16
      %v615 = vrot.slane %v613, 4
      %v616 = vshll.u32 %v494, 16
      %v618 = vrot.slane %v616, 5
      %v619 = vor.u32 %v615, %v618
      %v620 = vrot.slane %v619, 4
      %v622 = vshll.u32 %v513, 16
      %v624 = vrot.slane %v622, 5
      %v625 = vsel %vm228, %v620, %v624
      %v634 = vunpack.c.l.b16 %v199
      %v635 = vunpack.c.l.b16 %v200
      %v636 = vunpack.c.l.b16 %v201
      %v637 = vunpack.c.l.b16 %v202
      %v638 = vunpack.c.l.b16 %v203
      %v639 = vunpack.c.l.b16 %v204
      %v640 = vunpack.c.l.b16 %v205
      %v641 = vunpack.c.l.b16 %v206
      %v642 = vpack.c.b16 %v635, %v634
      %v643 = vpack.c.b16 %v637, %v636
      %v644 = vpack.c.b16 %v639, %v638
      %v645 = vpack.c.b16 %v641, %v640
      %v658 = vunpack.c.l.b16 %v210
      %v659 = vunpack.c.l.b16 %v211
      %v660 = vunpack.c.l.b16 %v212
      %v661 = vunpack.c.l.b16 %v213
      %v662 = vunpack.c.l.b16 %v214
      %v663 = vunpack.c.l.b16 %v215
      %v664 = vunpack.c.l.b16 %v216
      %v665 = vunpack.c.l.b16 %v217
      %v666 = vpack.c.b16 %v659, %v658
      %v667 = vpack.c.b16 %v661, %v660
      %v668 = vpack.c.b16 %v663, %v662
      %v669 = vpack.c.b16 %v665, %v664
      %v674 = vunpack.c.l.b16 %v242
      %v675 = vunpack.c.l.b16 %v256
      %v676 = vunpack.c.l.b16 %v270
      %v677 = vunpack.c.l.b16 %v284
      %v678 = vunpack.c.l.b16 %v298
      %v679 = vunpack.c.l.b16 %v312
      %v680 = vunpack.c.l.b16 %v326
      %v681 = vunpack.c.l.b16 %v340
      %v682 = vpack.c.b16 %v675, %v674
      %v683 = vpack.c.b16 %v677, %v676
      %v684 = vpack.c.b16 %v679, %v678
      %v685 = vpack.c.b16 %v681, %v680
      %v698 = vunpack.c.l.b16 %v344
      %v699 = vunpack.c.l.b16 %v345
      %v700 = vunpack.c.l.b16 %v346
      %v701 = vunpack.c.l.b16 %v347
      %v702 = vunpack.c.l.b16 %v348
      %v703 = vunpack.c.l.b16 %v349
      %v704 = vunpack.c.l.b16 %v350
      %v705 = vunpack.c.l.b16 %v351
      %v706 = vpack.c.b16 %v699, %v698
      %v707 = vpack.c.b16 %v701, %v700
      %v708 = vpack.c.b16 %v703, %v702
      %v709 = vpack.c.b16 %v705, %v704
      %v722 = vunpack.c.l.b16 %v355
      %v723 = vunpack.c.l.b16 %v356
      %v724 = vunpack.c.l.b16 %v357
      %v725 = vunpack.c.l.b16 %v358
      %v726 = vunpack.c.l.b16 %v359
      %v727 = vunpack.c.l.b16 %v360
      %v728 = vunpack.c.l.b16 %v361
      %v729 = vunpack.c.l.b16 %v362
      %v730 = vpack.c.b16 %v723, %v722
      %v731 = vpack.c.b16 %v725, %v724
      %v732 = vpack.c.b16 %v727, %v726
      %v733 = vpack.c.b16 %v729, %v728
      %v738 = vunpack.c.l.b16 %v384
      %v739 = vunpack.c.l.b16 %v398
      %v740 = vunpack.c.l.b16 %v412
      %v741 = vunpack.c.l.b16 %v426
      %v742 = vunpack.c.l.b16 %v440
      %v743 = vunpack.c.l.b16 %v454
      %v744 = vunpack.c.l.b16 %v468
      %v745 = vunpack.c.l.b16 %v482
      %v746 = vpack.c.b16 %v739, %v738
      %v747 = vpack.c.b16 %v741, %v740
      %v748 = vpack.c.b16 %v743, %v742
      %v749 = vpack.c.b16 %v745, %v744
      %v762 = vunpack.c.l.b16 %v487
      %v763 = vunpack.c.l.b16 %v488
      %v764 = vunpack.c.l.b16 %v489
      %v765 = vunpack.c.l.b16 %v490
      %v766 = vunpack.c.l.b16 %v491
      %v767 = vunpack.c.l.b16 %v492
      %v768 = vunpack.c.l.b16 %v493
      %v769 = vunpack.c.l.b16 %v494
      %v770 = vpack.c.b16 %v763, %v762
      %v771 = vpack.c.b16 %v765, %v764
      %v772 = vpack.c.b16 %v767, %v766
      %v773 = vpack.c.b16 %v769, %v768
      %v786 = vunpack.c.l.b16 %v498
      %v787 = vunpack.c.l.b16 %v499
      %v788 = vunpack.c.l.b16 %v500
      %v789 = vunpack.c.l.b16 %v501
      %v790 = vunpack.c.l.b16 %v502
      %v791 = vunpack.c.l.b16 %v503
      %v792 = vunpack.c.l.b16 %v504
      %v793 = vunpack.c.l.b16 %v505
      %v794 = vpack.c.b16 %v787, %v786
      %v795 = vpack.c.b16 %v789, %v788
      %v796 = vpack.c.b16 %v791, %v790
      %v797 = vpack.c.b16 %v793, %v792
      %v802 = vunpack.c.l.b16 %v527
      %v803 = vunpack.c.l.b16 %v541
      %v804 = vunpack.c.l.b16 %v555
      %v805 = vunpack.c.l.b16 %v569
      %v806 = vunpack.c.l.b16 %v583
      %v807 = vunpack.c.l.b16 %v597
      %v808 = vunpack.c.l.b16 %v611
      %v809 = vunpack.c.l.b16 %v625
      %v810 = vpack.c.b16 %v803, %v802
      %v811 = vpack.c.b16 %v805, %v804
      %v812 = vpack.c.b16 %v807, %v806
      %v813 = vpack.c.b16 %v809, %v808
      %v818 = vld [vmem:[%s1] sm:$0xf]
      %v819 = vld [vmem:[%s1 + $0x4] sm:$0xf]
      %v820 = vld [vmem:[%s1 + $0x8] sm:$0xf]
      %v821 = vld [vmem:[%s1 + $0xc] sm:$0xf]
      %v822 = vld [vmem:[%s1 + $0x10] sm:$0xf]
      %v823 = vld [vmem:[%s1 + $0x14] sm:$0xf]
      %v824 = vld [vmem:[%s1 + $0x18] sm:$0xf]
      %v825 = vld [vmem:[%s1 + $0x1c] sm:$0xf]
      %v826 = vld [vmem:[%s1 + $0x20] sm:$0xf]
      %v827 = vld [vmem:[%s1 + $0x24] sm:$0xf]
      %v828 = vld [vmem:[%s1 + $0x28] sm:$0xf]
      %v829 = vld [vmem:[%s1 + $0x2c] sm:$0xf]
      %v830 = vld [vmem:[%s1 + $0x30] sm:$0xf]
      %v831 = vld [vmem:[%s1 + $0x34] sm:$0xf]
      %v832 = vld [vmem:[%s1 + $0x38] sm:$0xf]
      %v833 = vld [vmem:[%s1 + $0x3c] sm:$0xf]
      %v834 = vld [vmem:[%s1 + $0x40] sm:$0xf]
      %v835 = vld [vmem:[%s1 + $0x44] sm:$0xf]
      %v836 = vld [vmem:[%s1 + $0x48] sm:$0xf]
      %v837 = vld [vmem:[%s1 + $0x4c] sm:$0xf]
      %v838 = vld [vmem:[%s1 + $0x50] sm:$0xf]
      %v839 = vld [vmem:[%s1 + $0x54] sm:$0xf]
      %v840 = vld [vmem:[%s1 + $0x58] sm:$0xf]
      %v841 = vld [vmem:[%s1 + $0x5c] sm:$0xf]
      %v842 = vld [vmem:[%s1 + $0x60] sm:$0xf]
      %v843 = vld [vmem:[%s1 + $0x64] sm:$0xf]
      %v844 = vld [vmem:[%s1 + $0x68] sm:$0xf]
      %v845 = vld [vmem:[%s1 + $0x6c] sm:$0xf]
      %v846 = vld [vmem:[%s1 + $0x70] sm:$0xf]
      %v847 = vld [vmem:[%s1 + $0x74] sm:$0xf]
      %v848 = vld [vmem:[%s1 + $0x78] sm:$0xf]
      %v849 = vld [vmem:[%s1 + $0x7c] sm:$0xf]
      %v850 = vld [vmem:[%s1 + $0x80] sm:$0xf]
      %v851 = vld [vmem:[%s1 + $0x84] sm:$0xf]
      %v852 = vld [vmem:[%s1 + $0x88] sm:$0xf]
      %v853 = vld [vmem:[%s1 + $0x8c] sm:$0xf]
      %v854 = vld [vmem:[%s1 + $0x90] sm:$0xf]
      %v855 = vld [vmem:[%s1 + $0x94] sm:$0xf]
      %v856 = vld [vmem:[%s1 + $0x98] sm:$0xf]
      %v857 = vld [vmem:[%s1 + $0x9c] sm:$0xf]
      %v858 = vld [vmem:[%s1 + $0xa0] sm:$0xf]
      %v859 = vld [vmem:[%s1 + $0xa4] sm:$0xf]
      %v860 = vld [vmem:[%s1 + $0xa8] sm:$0xf]
      %v861 = vld [vmem:[%s1 + $0xac] sm:$0xf]
      %v862 = vld [vmem:[%s1 + $0xb0] sm:$0xf]
      %v863 = vld [vmem:[%s1 + $0xb4] sm:$0xf]
      %v864 = vld [vmem:[%s1 + $0xb8] sm:$0xf]
      %v865 = vld [vmem:[%s1 + $0xbc] sm:$0xf]
      %v866 = vld [vmem:[%s1 + $0xc0] sm:$0xf]
      %v867 = vld [vmem:[%s1 + $0xc4] sm:$0xf]
      %v868 = vld [vmem:[%s1 + $0xc8] sm:$0xf]
      %v869 = vld [vmem:[%s1 + $0xcc] sm:$0xf]
      %v870 = vld [vmem:[%s1 + $0xd0] sm:$0xf]
      %v871 = vld [vmem:[%s1 + $0xd4] sm:$0xf]
      %v872 = vld [vmem:[%s1 + $0xd8] sm:$0xf]
      %v873 = vld [vmem:[%s1 + $0xdc] sm:$0xf]
      %v874 = vld [vmem:[%s1 + $0xe0] sm:$0xf]
      %v875 = vld [vmem:[%s1 + $0xe4] sm:$0xf]
      %v876 = vld [vmem:[%s1 + $0xe8] sm:$0xf]
      %v877 = vld [vmem:[%s1 + $0xec] sm:$0xf]
      %v878 = vld [vmem:[%s1 + $0xf0] sm:$0xf]
      %v879 = vld [vmem:[%s1 + $0xf4] sm:$0xf]
      %v880 = vld [vmem:[%s1 + $0xf8] sm:$0xf]
      %v881 = vld [vmem:[%s1 + $0xfc] sm:$0xf]
      %v882 = vld [vmem:[%s1 + $0x100] sm:$0xf]
      %v883 = vld [vmem:[%s1 + $0x104] sm:$0xf]
      %v884 = vld [vmem:[%s1 + $0x108] sm:$0xf]
      %v885 = vld [vmem:[%s1 + $0x10c] sm:$0xf]
      %v886 = vld [vmem:[%s1 + $0x110] sm:$0xf]
      %v887 = vld [vmem:[%s1 + $0x114] sm:$0xf]
      %v888 = vld [vmem:[%s1 + $0x118] sm:$0xf]
      %v889 = vld [vmem:[%s1 + $0x11c] sm:$0xf]
      %v890 = vld [vmem:[%s1 + $0x120] sm:$0xf]
      %v891 = vld [vmem:[%s1 + $0x124] sm:$0xf]
      %v892 = vld [vmem:[%s1 + $0x128] sm:$0xf]
      %v893 = vld [vmem:[%s1 + $0x12c] sm:$0xf]
      %v894 = vld [vmem:[%s1 + $0x130] sm:$0xf]
      %v895 = vld [vmem:[%s1 + $0x134] sm:$0xf]
      %v896 = vld [vmem:[%s1 + $0x138] sm:$0xf]
      %v897 = vld [vmem:[%s1 + $0x13c] sm:$0xf]
      %v898 = vld [vmem:[%s1 + $0x140] sm:$0xf]
      %v899 = vld [vmem:[%s1 + $0x144] sm:$0xf]
      %v900 = vld [vmem:[%s1 + $0x148] sm:$0xf]
      %v901 = vld [vmem:[%s1 + $0x14c] sm:$0xf]
      %v902 = vld [vmem:[%s1 + $0x150] sm:$0xf]
      %v903 = vld [vmem:[%s1 + $0x154] sm:$0xf]
      %v904 = vld [vmem:[%s1 + $0x158] sm:$0xf]
      %v905 = vld [vmem:[%s1 + $0x15c] sm:$0xf]
      %v906 = vld [vmem:[%s1 + $0x160] sm:$0xf]
      %v907 = vld [vmem:[%s1 + $0x164] sm:$0xf]
      %v908 = vld [vmem:[%s1 + $0x168] sm:$0xf]
      %v909 = vld [vmem:[%s1 + $0x16c] sm:$0xf]
      %v910 = vld [vmem:[%s1 + $0x170] sm:$0xf]
      %v911 = vld [vmem:[%s1 + $0x174] sm:$0xf]
      %v912 = vld [vmem:[%s1 + $0x178] sm:$0xf]
      %v913 = vld [vmem:[%s1 + $0x17c] sm:$0xf]
      %v914 = vld [vmem:[%s1 + $0x180] sm:$0xf]
      %v915 = vld [vmem:[%s1 + $0x184] sm:$0xf]
      %v916 = vld [vmem:[%s1 + $0x188] sm:$0xf]
      %v917 = vld [vmem:[%s1 + $0x18c] sm:$0xf]
      %v918 = vld [vmem:[%s1 + $0x190] sm:$0xf]
      %v919 = vld [vmem:[%s1 + $0x194] sm:$0xf]
      %v920 = vld [vmem:[%s1 + $0x198] sm:$0xf]
      %v921 = vld [vmem:[%s1 + $0x19c] sm:$0xf]
      %v922 = vld [vmem:[%s1 + $0x1a0] sm:$0xf]
      %v923 = vld [vmem:[%s1 + $0x1a4] sm:$0xf]
      %v924 = vld [vmem:[%s1 + $0x1a8] sm:$0xf]
      %v925 = vld [vmem:[%s1 + $0x1ac] sm:$0xf]
      %v926 = vld [vmem:[%s1 + $0x1b0] sm:$0xf]
      %v927 = vld [vmem:[%s1 + $0x1b4] sm:$0xf]
      %v928 = vld [vmem:[%s1 + $0x1b8] sm:$0xf]
      %v929 = vld [vmem:[%s1 + $0x1bc] sm:$0xf]
      %v930 = vld [vmem:[%s1 + $0x1c0] sm:$0xf]
      %v931 = vld [vmem:[%s1 + $0x1c4] sm:$0xf]
      %v932 = vld [vmem:[%s1 + $0x1c8] sm:$0xf]
      %v933 = vld [vmem:[%s1 + $0x1cc] sm:$0xf]
      %v934 = vld [vmem:[%s1 + $0x1d0] sm:$0xf]
      %v935 = vld [vmem:[%s1 + $0x1d4] sm:$0xf]
      %v936 = vld [vmem:[%s1 + $0x1d8] sm:$0xf]
      %v937 = vld [vmem:[%s1 + $0x1dc] sm:$0xf]
      %v938 = vld [vmem:[%s1 + $0x1e0] sm:$0xf]
      %v939 = vld [vmem:[%s1 + $0x1e4] sm:$0xf]
      %v940 = vld [vmem:[%s1 + $0x1e8] sm:$0xf]
      %v941 = vld [vmem:[%s1 + $0x1ec] sm:$0xf]
      %v942 = vld [vmem:[%s1 + $0x1f0] sm:$0xf]
      %v943 = vld [vmem:[%s1 + $0x1f4] sm:$0xf]
      %v944 = vld [vmem:[%s1 + $0x1f8] sm:$0xf]
      %v945 = vld [vmem:[%s1 + $0x1fc] sm:$0xf]
      %v946 = vld [vmem:[%s1 + $0x200] sm:$0xf]
      %v947 = vld [vmem:[%s1 + $0x204] sm:$0xf]
      %v948 = vld [vmem:[%s1 + $0x208] sm:$0xf]
      %v949 = vld [vmem:[%s1 + $0x20c] sm:$0xf]
      %v950 = vld [vmem:[%s1 + $0x210] sm:$0xf]
      %v951 = vld [vmem:[%s1 + $0x214] sm:$0xf]
      %v952 = vld [vmem:[%s1 + $0x218] sm:$0xf]
      %v953 = vld [vmem:[%s1 + $0x21c] sm:$0xf]
      %v954 = vld [vmem:[%s1 + $0x220] sm:$0xf]
      %v955 = vld [vmem:[%s1 + $0x224] sm:$0xf]
      %v956 = vld [vmem:[%s1 + $0x228] sm:$0xf]
      %v957 = vld [vmem:[%s1 + $0x22c] sm:$0xf]
      %v958 = vld [vmem:[%s1 + $0x230] sm:$0xf]
      %v959 = vld [vmem:[%s1 + $0x234] sm:$0xf]
      %v960 = vld [vmem:[%s1 + $0x238] sm:$0xf]
      %v961 = vld [vmem:[%s1 + $0x23c] sm:$0xf]
      %v962 = vld [vmem:[%s2] sm:$0x1]
      %v964 = vlaneseq
      %v965 = vshrl.u32 %v964, 7
      %v966 = vsub.s32 0, %v965
      %v967 = vrot.slane %v962, %v966
      %v1113 = vunpack.c.l.b16 %v818
      %v1114 = vunpack.c.l.b16 %v819
      %v1115 = vunpack.c.l.b16 %v820
      %v1116 = vunpack.c.l.b16 %v821
      %v1117 = vunpack.c.l.b16 %v822
      %v1118 = vunpack.c.l.b16 %v823
      %v1119 = vunpack.c.l.b16 %v824
      %v1120 = vunpack.c.l.b16 %v825
      %v1121 = vunpack.c.l.b16 %v826
      %v1122 = vunpack.c.l.b16 %v827
      %v1123 = vunpack.c.l.b16 %v828
      %v1124 = vunpack.c.l.b16 %v829
      %v1125 = vunpack.c.l.b16 %v830
      %v1126 = vunpack.c.l.b16 %v831
      %v1127 = vunpack.c.l.b16 %v832
      %v1128 = vunpack.c.l.b16 %v833
      %v1129 = vunpack.c.l.b16 %v834
      %v1130 = vunpack.c.l.b16 %v835
      %v1131 = vunpack.c.l.b16 %v836
      %v1132 = vunpack.c.l.b16 %v837
      %v1133 = vunpack.c.l.b16 %v838
      %v1134 = vunpack.c.l.b16 %v839
      %v1135 = vunpack.c.l.b16 %v840
      %v1136 = vunpack.c.l.b16 %v841
      %v1137 = vunpack.c.l.b16 %v842
      %v1138 = vunpack.c.l.b16 %v843
      %v1139 = vunpack.c.l.b16 %v844
      %v1140 = vunpack.c.l.b16 %v845
      %v1141 = vunpack.c.l.b16 %v846
      %v1142 = vunpack.c.l.b16 %v847
      %v1143 = vunpack.c.l.b16 %v848
      %v1144 = vunpack.c.l.b16 %v849
      %v1145 = vunpack.c.l.b16 %v850
      %v1146 = vunpack.c.l.b16 %v851
      %v1147 = vunpack.c.l.b16 %v852
      %v1148 = vunpack.c.l.b16 %v853
      %v1149 = vunpack.c.l.b16 %v854
      %v1150 = vunpack.c.l.b16 %v855
      %v1151 = vunpack.c.l.b16 %v856
      %v1152 = vunpack.c.l.b16 %v857
      %v1153 = vunpack.c.l.b16 %v858
      %v1154 = vunpack.c.l.b16 %v859
      %v1155 = vunpack.c.l.b16 %v860
      %v1156 = vunpack.c.l.b16 %v861
      %v1157 = vunpack.c.l.b16 %v862
      %v1158 = vunpack.c.l.b16 %v863
      %v1159 = vunpack.c.l.b16 %v864
      %v1160 = vunpack.c.l.b16 %v865
      %v1161 = vunpack.c.l.b16 %v866
      %v1162 = vunpack.c.l.b16 %v867
      %v1163 = vunpack.c.l.b16 %v868
      %v1164 = vunpack.c.l.b16 %v869
      %v1165 = vunpack.c.l.b16 %v870
      %v1166 = vunpack.c.l.b16 %v871
      %v1167 = vunpack.c.l.b16 %v872
      %v1168 = vunpack.c.l.b16 %v873
      %v1169 = vunpack.c.l.b16 %v874
      %v1170 = vunpack.c.l.b16 %v875
      %v1171 = vunpack.c.l.b16 %v876
      %v1172 = vunpack.c.l.b16 %v877
      %v1173 = vunpack.c.l.b16 %v878
      %v1174 = vunpack.c.l.b16 %v879
      %v1175 = vunpack.c.l.b16 %v880
      %v1176 = vunpack.c.l.b16 %v881
      %v1177 = vunpack.c.l.b16 %v882
      %v1178 = vunpack.c.l.b16 %v883
      %v1179 = vunpack.c.l.b16 %v884
      %v1180 = vunpack.c.l.b16 %v885
      %v1181 = vunpack.c.l.b16 %v886
      %v1182 = vunpack.c.l.b16 %v887
      %v1183 = vunpack.c.l.b16 %v888
      %v1184 = vunpack.c.l.b16 %v889
      %v1185 = vunpack.c.l.b16 %v890
      %v1186 = vunpack.c.l.b16 %v891
      %v1187 = vunpack.c.l.b16 %v892
      %v1188 = vunpack.c.l.b16 %v893
      %v1189 = vunpack.c.l.b16 %v894
      %v1190 = vunpack.c.l.b16 %v895
      %v1191 = vunpack.c.l.b16 %v896
      %v1192 = vunpack.c.l.b16 %v897
      %v1193 = vunpack.c.l.b16 %v898
      %v1194 = vunpack.c.l.b16 %v899
      %v1195 = vunpack.c.l.b16 %v900
      %v1196 = vunpack.c.l.b16 %v901
      %v1197 = vunpack.c.l.b16 %v902
      %v1198 = vunpack.c.l.b16 %v903
      %v1199 = vunpack.c.l.b16 %v904
      %v1200 = vunpack.c.l.b16 %v905
      %v1201 = vunpack.c.l.b16 %v906
      %v1202 = vunpack.c.l.b16 %v907
      %v1203 = vunpack.c.l.b16 %v908
      %v1204 = vunpack.c.l.b16 %v909
      %v1205 = vunpack.c.l.b16 %v910
      %v1206 = vunpack.c.l.b16 %v911
      %v1207 = vunpack.c.l.b16 %v912
      %v1208 = vunpack.c.l.b16 %v913
      %v1209 = vunpack.c.l.b16 %v914
      %v1210 = vunpack.c.l.b16 %v915
      %v1211 = vunpack.c.l.b16 %v916
      %v1212 = vunpack.c.l.b16 %v917
      %v1213 = vunpack.c.l.b16 %v918
      %v1214 = vunpack.c.l.b16 %v919
      %v1215 = vunpack.c.l.b16 %v920
      %v1216 = vunpack.c.l.b16 %v921
      %v1217 = vunpack.c.l.b16 %v922
      %v1218 = vunpack.c.l.b16 %v923
      %v1219 = vunpack.c.l.b16 %v924
      %v1220 = vunpack.c.l.b16 %v925
      %v1221 = vunpack.c.l.b16 %v926
      %v1222 = vunpack.c.l.b16 %v927
      %v1223 = vunpack.c.l.b16 %v928
      %v1224 = vunpack.c.l.b16 %v929
      %v1225 = vunpack.c.l.b16 %v930
      %v1226 = vunpack.c.l.b16 %v931
      %v1227 = vunpack.c.l.b16 %v932
      %v1228 = vunpack.c.l.b16 %v933
      %v1229 = vunpack.c.l.b16 %v934
      %v1230 = vunpack.c.l.b16 %v935
      %v1231 = vunpack.c.l.b16 %v936
      %v1232 = vunpack.c.l.b16 %v937
      %v1233 = vunpack.c.l.b16 %v938
      %v1234 = vunpack.c.l.b16 %v939
      %v1235 = vunpack.c.l.b16 %v940
      %v1236 = vunpack.c.l.b16 %v941
      %v1237 = vunpack.c.l.b16 %v942
      %v1238 = vunpack.c.l.b16 %v943
      %v1239 = vunpack.c.l.b16 %v944
      %v1240 = vunpack.c.l.b16 %v945
      %v1241 = vunpack.c.l.b16 %v946
      %v1242 = vunpack.c.l.b16 %v947
      %v1243 = vunpack.c.l.b16 %v948
      %v1244 = vunpack.c.l.b16 %v949
      %v1245 = vunpack.c.l.b16 %v950
      %v1246 = vunpack.c.l.b16 %v951
      %v1247 = vunpack.c.l.b16 %v952
      %v1248 = vunpack.c.l.b16 %v953
      %v1249 = vunpack.c.l.b16 %v954
      %v1250 = vunpack.c.l.b16 %v955
      %v1251 = vunpack.c.l.b16 %v956
      %v1252 = vunpack.c.l.b16 %v957
      %v1253 = vunpack.c.l.b16 %v958
      %v1254 = vunpack.c.l.b16 %v959
      %v1255 = vunpack.c.l.b16 %v960
      %v1256 = vunpack.c.l.b16 %v961
      %v1257 = vpack.c.b16 %v1114, %v1113
      %v1258 = vpack.c.b16 %v1116, %v1115
      %v1259 = vpack.c.b16 %v1118, %v1117
      %v1260 = vpack.c.b16 %v1120, %v1119
      %v1261 = vpack.c.b16 %v1122, %v1121
      %v1262 = vpack.c.b16 %v1124, %v1123
      %v1263 = vpack.c.b16 %v1126, %v1125
      %v1264 = vpack.c.b16 %v1128, %v1127
      %v1265 = vpack.c.b16 %v1130, %v1129
      %v1266 = vpack.c.b16 %v1132, %v1131
      %v1267 = vpack.c.b16 %v1134, %v1133
      %v1268 = vpack.c.b16 %v1136, %v1135
      %v1269 = vpack.c.b16 %v1138, %v1137
      %v1270 = vpack.c.b16 %v1140, %v1139
      %v1271 = vpack.c.b16 %v1142, %v1141
      %v1272 = vpack.c.b16 %v1144, %v1143
      %v1273 = vpack.c.b16 %v1146, %v1145
      %v1274 = vpack.c.b16 %v1148, %v1147
      %v1275 = vpack.c.b16 %v1150, %v1149
      %v1276 = vpack.c.b16 %v1152, %v1151
      %v1277 = vpack.c.b16 %v1154, %v1153
      %v1278 = vpack.c.b16 %v1156, %v1155
      %v1279 = vpack.c.b16 %v1158, %v1157
      %v1280 = vpack.c.b16 %v1160, %v1159
      %v1281 = vpack.c.b16 %v1162, %v1161
      %v1282 = vpack.c.b16 %v1164, %v1163
      %v1283 = vpack.c.b16 %v1166, %v1165
      %v1284 = vpack.c.b16 %v1168, %v1167
      %v1285 = vpack.c.b16 %v1170, %v1169
      %v1286 = vpack.c.b16 %v1172, %v1171
      %v1287 = vpack.c.b16 %v1174, %v1173
      %v1288 = vpack.c.b16 %v1176, %v1175
      %v1289 = vpack.c.b16 %v1178, %v1177
      %v1290 = vpack.c.b16 %v1180, %v1179
      %v1291 = vpack.c.b16 %v1182, %v1181
      %v1292 = vpack.c.b16 %v1184, %v1183
      %v1293 = vpack.c.b16 %v1186, %v1185
      %v1294 = vpack.c.b16 %v1188, %v1187
      %v1295 = vpack.c.b16 %v1190, %v1189
      %v1296 = vpack.c.b16 %v1192, %v1191
      %v1297 = vpack.c.b16 %v1194, %v1193
      %v1298 = vpack.c.b16 %v1196, %v1195
      %v1299 = vpack.c.b16 %v1198, %v1197
      %v1300 = vpack.c.b16 %v1200, %v1199
      %v1301 = vpack.c.b16 %v1202, %v1201
      %v1302 = vpack.c.b16 %v1204, %v1203
      %v1303 = vpack.c.b16 %v1206, %v1205
      %v1304 = vpack.c.b16 %v1208, %v1207
      %v1305 = vpack.c.b16 %v1210, %v1209
      %v1306 = vpack.c.b16 %v1212, %v1211
      %v1307 = vpack.c.b16 %v1214, %v1213
      %v1308 = vpack.c.b16 %v1216, %v1215
      %v1309 = vpack.c.b16 %v1218, %v1217
      %v1310 = vpack.c.b16 %v1220, %v1219
      %v1311 = vpack.c.b16 %v1222, %v1221
      %v1312 = vpack.c.b16 %v1224, %v1223
      %v1313 = vpack.c.b16 %v1226, %v1225
      %v1314 = vpack.c.b16 %v1228, %v1227
      %v1315 = vpack.c.b16 %v1230, %v1229
      %v1316 = vpack.c.b16 %v1232, %v1231
      %v1317 = vpack.c.b16 %v1234, %v1233
      %v1318 = vpack.c.b16 %v1236, %v1235
      %v1319 = vpack.c.b16 %v1238, %v1237
      %v1320 = vpack.c.b16 %v1240, %v1239
      %v1321 = vpack.c.b16 %v1242, %v1241
      %v1322 = vpack.c.b16 %v1244, %v1243
      %v1323 = vpack.c.b16 %v1246, %v1245
      %v1324 = vpack.c.b16 %v1248, %v1247
      %v1325 = vpack.c.b16 %v1250, %v1249
      %v1326 = vpack.c.b16 %v1252, %v1251
      %v1327 = vpack.c.b16 %v1254, %v1253
      %v1328 = vpack.c.b16 %v1256, %v1255
      %1401 = vmatprep.subr.bf16.mxu0 0
      %1402 = vmatpush1.bf16.msra.mxu0 %v1264
      %1403 = vmatprep.subr.bf16.mxu0 0
      %1404 = vmatpush1.bf16.msra.mxu0 %v1263
      %1405 = vmatprep.subr.bf16.mxu0 0
      %1406 = vmatpush1.bf16.msra.mxu0 %v1262
      %1407 = vmatprep.subr.bf16.mxu0 0
      %1408 = vmatpush1.bf16.msra.mxu0 %v1261
      %1409 = vmatprep.subr.bf16.mxu0 0
      %1410 = vmatpush1.bf16.msra.mxu0 %v1260
      %1411 = vmatprep.subr.bf16.mxu0 0
      %1412 = vmatpush1.bf16.msra.mxu0 %v1259
      %1413 = vmatprep.subr.bf16.mxu0 0
      %1414 = vmatpush1.bf16.msra.mxu0 %v1258
      %1415 = vmatprep.subr.bf16.mxu0 0
      %1416 = vmatpush1.bf16.msra.mxu0 %v1257
      %1417 = vmatprep.subr.bf16.mxu0 0
      %1418 = vmatpush2.bf16.msra.mxu0 %v1272
      %1419 = vmatprep.subr.bf16.mxu0 0
      %1420 = vmatpush2.bf16.msra.mxu0 %v1271
      %1421 = vmatprep.subr.bf16.mxu0 0
      %1422 = vmatpush2.bf16.msra.mxu0 %v1270
      %1423 = vmatprep.subr.bf16.mxu0 0
      %1424 = vmatpush2.bf16.msra.mxu0 %v1269
      %1425 = vmatprep.subr.bf16.mxu0 0
      %1426 = vmatpush2.bf16.msra.mxu0 %v1268
      %1427 = vmatprep.subr.bf16.mxu0 0
      %1428 = vmatpush2.bf16.msra.mxu0 %v1267
      %1429 = vmatprep.subr.bf16.mxu0 0
      %1430 = vmatpush2.bf16.msra.mxu0 %v1266
      %1431 = vmatprep.subr.bf16.mxu0 0
      %1432 = vmatpush2.bf16.msra.mxu0 %v1265
      %1433 = vmatprep.mubr.bf16.mxu0 %v666
      %1434 = vmatmul.mubr.bf16.gmra.mxu0 %v642
      %v1435 = vpop.f32.mrf.mxu0
      %v1436 = vadd.f32 %v967, %v1435
      %v1437 = vpop.f32.mrf.mxu0
      %v1438 = vpop.f32.mrf.mxu0
      %v1439 = vadd.f32 %v967, %v1438
      %v1440 = vpop.f32.mrf.mxu0
      %1441 = vmatprep.mubr.bf16.mxu0 %v667
      %1442 = vmatmul.mubr.bf16.gmra.mxu0 %v643
      %v1443 = vpop.f32.mrf.mxu0
      %v1444 = vadd.f32 %v967, %v1443
      %v1445 = vpop.f32.mrf.mxu0
      %v1446 = vpop.f32.mrf.mxu0
      %v1447 = vadd.f32 %v967, %v1446
      %v1448 = vpop.f32.mrf.mxu0
      %1449 = vmatprep.mubr.bf16.mxu0 %v668
      %1450 = vmatmul.mubr.bf16.gmra.mxu0 %v644
      %v1451 = vpop.f32.mrf.mxu0
      %v1452 = vadd.f32 %v967, %v1451
      %v1453 = vpop.f32.mrf.mxu0
      %v1454 = vpop.f32.mrf.mxu0
      %v1455 = vadd.f32 %v967, %v1454
      %v1456 = vpop.f32.mrf.mxu0
      %1457 = vmatprep.mubr.bf16.mxu0 %v669
      %1458 = vmatmul.mubr.bf16.gmra.mxu0 %v645
      %v1459 = vpop.f32.mrf.mxu0
      %v1460 = vadd.f32 %v967, %v1459
      %v1461 = vpop.f32.mrf.mxu0
      %v1462 = vpop.f32.mrf.mxu0
      %v1463 = vadd.f32 %v967, %v1462
      %v1464 = vpop.f32.mrf.mxu0
      %1465 = vdwg.mxu0
      %1466 = vmatprep.subr.bf16.mxu0 0
      %1467 = vmatpush1.bf16.msra.mxu0 %v1280
      %1468 = vmatprep.subr.bf16.mxu0 0
      %1469 = vmatpush1.bf16.msra.mxu0 %v1279
      %1470 = vmatprep.subr.bf16.mxu0 0
      %1471 = vmatpush1.bf16.msra.mxu0 %v1278
      %1472 = vmatprep.subr.bf16.mxu0 0
      %1473 = vmatpush1.bf16.msra.mxu0 %v1277
      %1474 = vmatprep.subr.bf16.mxu0 0
      %1475 = vmatpush1.bf16.msra.mxu0 %v1276
      %1476 = vmatprep.subr.bf16.mxu0 0
      %1477 = vmatpush1.bf16.msra.mxu0 %v1275
      %1478 = vmatprep.subr.bf16.mxu0 0
      %1479 = vmatpush1.bf16.msra.mxu0 %v1274
      %1480 = vmatprep.subr.bf16.mxu0 0
      %1481 = vmatpush1.bf16.msra.mxu0 %v1273
      %1482 = vmatprep.subr.bf16.mxu0 0
      %1483 = vmatpush2.bf16.msra.mxu0 %v1288
      %1484 = vmatprep.subr.bf16.mxu0 0
      %1485 = vmatpush2.bf16.msra.mxu0 %v1287
      %1486 = vmatprep.subr.bf16.mxu0 0
      %1487 = vmatpush2.bf16.msra.mxu0 %v1286
      %1488 = vmatprep.subr.bf16.mxu0 0
      %1489 = vmatpush2.bf16.msra.mxu0 %v1285
      %1490 = vmatprep.subr.bf16.mxu0 0
      %1491 = vmatpush2.bf16.msra.mxu0 %v1284
      %1492 = vmatprep.subr.bf16.mxu0 0
      %1493 = vmatpush2.bf16.msra.mxu0 %v1283
      %1494 = vmatprep.subr.bf16.mxu0 0
      %1495 = vmatpush2.bf16.msra.mxu0 %v1282
      %1496 = vmatprep.subr.bf16.mxu0 0
      %1497 = vmatpush2.bf16.msra.mxu0 %v1281
      %1498 = vmatprep.mubr.bf16.mxu0 %v706
      %1499 = vmatmul.mubr.bf16.gmra.mxu0 %v682
      %v1500 = vpop.f32.mrf.mxu0
      %v1501 = vadd.f32 %v1436, %v1500
      %v1502 = vpop.f32.mrf.mxu0
      %v1503 = vpop.f32.mrf.mxu0
      %v1504 = vadd.f32 %v1439, %v1503
      %v1505 = vpop.f32.mrf.mxu0
      %1506 = vmatprep.mubr.bf16.mxu0 %v707
      %1507 = vmatmul.mubr.bf16.gmra.mxu0 %v683
      %v1508 = vpop.f32.mrf.mxu0
      %v1509 = vadd.f32 %v1444, %v1508
      %v1510 = vpop.f32.mrf.mxu0
      %v1511 = vpop.f32.mrf.mxu0
      %v1512 = vadd.f32 %v1447, %v1511
      %v1513 = vpop.f32.mrf.mxu0
      %1514 = vmatprep.mubr.bf16.mxu0 %v708
      %1515 = vmatmul.mubr.bf16.gmra.mxu0 %v684
      %v1516 = vpop.f32.mrf.mxu0
      %v1517 = vadd.f32 %v1452, %v1516
      %v1518 = vpop.f32.mrf.mxu0
      %v1519 = vpop.f32.mrf.mxu0
      %v1520 = vadd.f32 %v1455, %v1519
      %v1521 = vpop.f32.mrf.mxu0
      %1522 = vmatprep.mubr.bf16.mxu0 %v709
      %1523 = vmatmul.mubr.bf16.gmra.mxu0 %v685
      %v1524 = vpop.f32.mrf.mxu0
      %v1525 = vadd.f32 %v1460, %v1524
      %v1526 = vpop.f32.mrf.mxu0
      %v1527 = vpop.f32.mrf.mxu0
      %v1528 = vadd.f32 %v1463, %v1527
      %v1529 = vpop.f32.mrf.mxu0
      %1530 = vdwg.mxu0
      %1531 = vmatprep.subr.bf16.mxu0 0
      %1532 = vmatpush1.bf16.msra.mxu0 %v1296
      %1533 = vmatprep.subr.bf16.mxu0 0
      %1534 = vmatpush1.bf16.msra.mxu0 %v1295
      %1535 = vmatprep.subr.bf16.mxu0 0
      %1536 = vmatpush1.bf16.msra.mxu0 %v1294
      %1537 = vmatprep.subr.bf16.mxu0 0
      %1538 = vmatpush1.bf16.msra.mxu0 %v1293
      %1539 = vmatprep.subr.bf16.mxu0 0
      %1540 = vmatpush1.bf16.msra.mxu0 %v1292
      %1541 = vmatprep.subr.bf16.mxu0 0
      %1542 = vmatpush1.bf16.msra.mxu0 %v1291
      %1543 = vmatprep.subr.bf16.mxu0 0
      %1544 = vmatpush1.bf16.msra.mxu0 %v1290
      %1545 = vmatprep.subr.bf16.mxu0 0
      %1546 = vmatpush1.bf16.msra.mxu0 %v1289
      %1547 = vmatprep.subr.bf16.mxu0 0
      %1548 = vmatpush2.bf16.msra.mxu0 %v1304
      %1549 = vmatprep.subr.bf16.mxu0 0
      %1550 = vmatpush2.bf16.msra.mxu0 %v1303
      %1551 = vmatprep.subr.bf16.mxu0 0
      %1552 = vmatpush2.bf16.msra.mxu0 %v1302
      %1553 = vmatprep.subr.bf16.mxu0 0
      %1554 = vmatpush2.bf16.msra.mxu0 %v1301
      %1555 = vmatprep.subr.bf16.mxu0 0
      %1556 = vmatpush2.bf16.msra.mxu0 %v1300
      %1557 = vmatprep.subr.bf16.mxu0 0
      %1558 = vmatpush2.bf16.msra.mxu0 %v1299
      %1559 = vmatprep.subr.bf16.mxu0 0
      %1560 = vmatpush2.bf16.msra.mxu0 %v1298
      %1561 = vmatprep.subr.bf16.mxu0 0
      %1562 = vmatpush2.bf16.msra.mxu0 %v1297
      %1563 = vmatprep.mubr.bf16.mxu0 %v746
      %1564 = vmatmul.mubr.bf16.gmra.mxu0 %v730
      %v1565 = vpop.f32.mrf.mxu0
      %v1566 = vadd.f32 %v1501, %v1565
      %v1567 = vpop.f32.mrf.mxu0
      %v1568 = vpop.f32.mrf.mxu0
      %v1569 = vadd.f32 %v1504, %v1568
      %v1570 = vpop.f32.mrf.mxu0
      %1571 = vmatprep.mubr.bf16.mxu0 %v747
      %1572 = vmatmul.mubr.bf16.gmra.mxu0 %v731
      %v1573 = vpop.f32.mrf.mxu0
      %v1574 = vadd.f32 %v1509, %v1573
      %v1575 = vpop.f32.mrf.mxu0
      %v1576 = vpop.f32.mrf.mxu0
      %v1577 = vadd.f32 %v1512, %v1576
      %v1578 = vpop.f32.mrf.mxu0
      %1579 = vmatprep.mubr.bf16.mxu0 %v748
      %1580 = vmatmul.mubr.bf16.gmra.mxu0 %v732
      %v1581 = vpop.f32.mrf.mxu0
      %v1582 = vadd.f32 %v1517, %v1581
      %v1583 = vpop.f32.mrf.mxu0
      %v1584 = vpop.f32.mrf.mxu0
      %v1585 = vadd.f32 %v1520, %v1584
      %v1586 = vpop.f32.mrf.mxu0
      %1587 = vmatprep.mubr.bf16.mxu0 %v749
      %1588 = vmatmul.mubr.bf16.gmra.mxu0 %v733
      %v1589 = vpop.f32.mrf.mxu0
      %v1590 = vadd.f32 %v1525, %v1589
      %v1591 = vpop.f32.mrf.mxu0
      %v1592 = vpop.f32.mrf.mxu0
      %v1593 = vadd.f32 %v1528, %v1592
      %v1594 = vpop.f32.mrf.mxu0
      %1595 = vdwg.mxu0
      %1596 = vmatprep.subr.bf16.mxu0 0
      %1597 = vmatpush1.bf16.msra.mxu0 %v1312
      %1598 = vmatprep.subr.bf16.mxu0 0
      %1599 = vmatpush1.bf16.msra.mxu0 %v1311
      %1600 = vmatprep.subr.bf16.mxu0 0
      %1601 = vmatpush1.bf16.msra.mxu0 %v1310
      %1602 = vmatprep.subr.bf16.mxu0 0
      %1603 = vmatpush1.bf16.msra.mxu0 %v1309
      %1604 = vmatprep.subr.bf16.mxu0 0
      %1605 = vmatpush1.bf16.msra.mxu0 %v1308
      %1606 = vmatprep.subr.bf16.mxu0 0
      %1607 = vmatpush1.bf16.msra.mxu0 %v1307
      %1608 = vmatprep.subr.bf16.mxu0 0
      %1609 = vmatpush1.bf16.msra.mxu0 %v1306
      %1610 = vmatprep.subr.bf16.mxu0 0
      %1611 = vmatpush1.bf16.msra.mxu0 %v1305
      %1612 = vmatprep.subr.bf16.mxu0 0
      %1613 = vmatpush2.bf16.msra.mxu0 %v1320
      %1614 = vmatprep.subr.bf16.mxu0 0
      %1615 = vmatpush2.bf16.msra.mxu0 %v1319
      %1616 = vmatprep.subr.bf16.mxu0 0
      %1617 = vmatpush2.bf16.msra.mxu0 %v1318
      %1618 = vmatprep.subr.bf16.mxu0 0
      %1619 = vmatpush2.bf16.msra.mxu0 %v1317
      %1620 = vmatprep.subr.bf16.mxu0 0
      %1621 = vmatpush2.bf16.msra.mxu0 %v1316
      %1622 = vmatprep.subr.bf16.mxu0 0
      %1623 = vmatpush2.bf16.msra.mxu0 %v1315
      %1624 = vmatprep.subr.bf16.mxu0 0
      %1625 = vmatpush2.bf16.msra.mxu0 %v1314
      %1626 = vmatprep.subr.bf16.mxu0 0
      %1627 = vmatpush2.bf16.msra.mxu0 %v1313
      %1628 = vmatprep.mubr.bf16.mxu0 %v794
      %1629 = vmatmul.mubr.bf16.gmra.mxu0 %v770
      %v1630 = vpop.f32.mrf.mxu0
      %v1631 = vadd.f32 %v1566, %v1630
      %v1632 = vpop.f32.mrf.mxu0
      %v1633 = vpop.f32.mrf.mxu0
      %v1634 = vadd.f32 %v1569, %v1633
      %v1635 = vpop.f32.mrf.mxu0
      %1636 = vmatprep.mubr.bf16.mxu0 %v795
      %1637 = vmatmul.mubr.bf16.gmra.mxu0 %v771
      %v1638 = vpop.f32.mrf.mxu0
      %v1639 = vadd.f32 %v1574, %v1638
      %v1640 = vpop.f32.mrf.mxu0
      %v1641 = vpop.f32.mrf.mxu0
      %v1642 = vadd.f32 %v1577, %v1641
      %v1643 = vpop.f32.mrf.mxu0
      %1644 = vmatprep.mubr.bf16.mxu0 %v796
      %1645 = vmatmul.mubr.bf16.gmra.mxu0 %v772
      %v1646 = vpop.f32.mrf.mxu0
      %v1647 = vadd.f32 %v1582, %v1646
      %v1648 = vpop.f32.mrf.mxu0
      %v1649 = vpop.f32.mrf.mxu0
      %v1650 = vadd.f32 %v1585, %v1649
      %v1651 = vpop.f32.mrf.mxu0
      %1652 = vmatprep.mubr.bf16.mxu0 %v797
      %1653 = vmatmul.mubr.bf16.gmra.mxu0 %v773
      %v1654 = vpop.f32.mrf.mxu0
      %v1655 = vadd.f32 %v1590, %v1654
      %v1656 = vpop.f32.mrf.mxu0
      %v1657 = vpop.f32.mrf.mxu0
      %v1658 = vadd.f32 %v1593, %v1657
      %v1659 = vpop.f32.mrf.mxu0
      %1660 = vdwg.mxu0
      %1661 = vmatprep.subr.bf16.mxu0 0
      %1662 = vmatpush1.bf16.msra.mxu0 %v1328
      %1663 = vmatprep.subr.bf16.mxu0 0
      %1664 = vmatpush1.bf16.msra.mxu0 %v1327
      %1665 = vmatprep.subr.bf16.mxu0 0
      %1666 = vmatpush1.bf16.msra.mxu0 %v1326
      %1667 = vmatprep.subr.bf16.mxu0 0
      %1668 = vmatpush1.bf16.msra.mxu0 %v1325
      %1669 = vmatprep.subr.bf16.mxu0 0
      %1670 = vmatpush1.bf16.msra.mxu0 %v1324
      %1671 = vmatprep.subr.bf16.mxu0 0
      %1672 = vmatpush1.bf16.msra.mxu0 %v1323
      %1673 = vmatprep.subr.bf16.mxu0 0
      %1674 = vmatpush1.bf16.msra.mxu0 %v1322
      %1675 = vmatprep.subr.bf16.mxu0 0
      %1676 = vmatpush1.bf16.msra.mxu0 %v1321
      %1677 = vmatprep.subr.bf16.mxu0 0
      %1678 = vmatpush2.bf16.msra.mxu0 0
      %1679 = vmatprep.subr.bf16.mxu0 0
      %1680 = vmatpush2.bf16.msra.mxu0 0
      %1681 = vmatprep.subr.bf16.mxu0 0
      %1682 = vmatpush2.bf16.msra.mxu0 0
      %1683 = vmatprep.subr.bf16.mxu0 0
      %1684 = vmatpush2.bf16.msra.mxu0 0
      %1685 = vmatprep.subr.bf16.mxu0 0
      %1686 = vmatpush2.bf16.msra.mxu0 0
      %1687 = vmatprep.subr.bf16.mxu0 0
      %1688 = vmatpush2.bf16.msra.mxu0 0
      %1689 = vmatprep.subr.bf16.mxu0 0
      %1690 = vmatpush2.bf16.msra.mxu0 0
      %1691 = vmatprep.subr.bf16.mxu0 0
      %1692 = vmatpush2.bf16.msra.mxu0 0
      %1693 = vmatprep.mubr.bf16.mxu0 0
      %1694 = vmatmul.mubr.bf16.gmra.mxu0 %v810
      %v1695 = vpop.f32.mrf.mxu0
      %v1696 = vadd.f32 %v1631, %v1695
      %v1697 = vpop.f32.mrf.mxu0
      %v1698 = vpop.f32.mrf.mxu0
      %v1699 = vadd.f32 %v1634, %v1698
      %v1700 = vpop.f32.mrf.mxu0
      %1701 = vmatprep.mubr.bf16.mxu0 0
      %1702 = vmatmul.mubr.bf16.gmra.mxu0 %v811
      %v1703 = vpop.f32.mrf.mxu0
      %v1704 = vadd.f32 %v1639, %v1703
      %v1705 = vpop.f32.mrf.mxu0
      %v1706 = vpop.f32.mrf.mxu0
      %v1707 = vadd.f32 %v1642, %v1706
      %v1708 = vpop.f32.mrf.mxu0
      %1709 = vmatprep.mubr.bf16.mxu0 0
      %1710 = vmatmul.mubr.bf16.gmra.mxu0 %v812
      %v1711 = vpop.f32.mrf.mxu0
      %v1712 = vadd.f32 %v1647, %v1711
      %v1713 = vpop.f32.mrf.mxu0
      %v1714 = vpop.f32.mrf.mxu0
      %v1715 = vadd.f32 %v1650, %v1714
      %v1716 = vpop.f32.mrf.mxu0
      %1717 = vmatprep.mubr.bf16.mxu0 0
      %1718 = vmatmul.mubr.bf16.gmra.mxu0 %v813
      %v1719 = vpop.f32.mrf.mxu0
      %v1720 = vadd.f32 %v1655, %v1719
      %v1721 = vpop.f32.mrf.mxu0
      %v1722 = vpop.f32.mrf.mxu0
      %v1723 = vadd.f32 %v1658, %v1722
      %v1724 = vpop.f32.mrf.mxu0
      %1725 = vdwg.mxu0
      %v1726 = vmax.f32 %v1696, 0.0
      %v1727 = vmax.f32 %v1699, 0.0
      %v1728 = vmax.f32 %v1704, 0.0
      %v1729 = vmax.f32 %v1707, 0.0
      %v1730 = vmax.f32 %v1712, 0.0
      %v1731 = vmax.f32 %v1715, 0.0
      %v1732 = vmax.f32 %v1720, 0.0
      %v1733 = vmax.f32 %v1723, 0.0
      %v1734 = vpack.c.bf16 %v1726, %v1726
      %v1735 = vpack.c.bf16 %v1727, %v1727
      %v1736 = vpack.c.bf16 %v1728, %v1728
      %v1737 = vpack.c.bf16 %v1729, %v1729
      %v1738 = vpack.c.bf16 %v1730, %v1730
      %v1739 = vpack.c.bf16 %v1731, %v1731
      %v1740 = vpack.c.bf16 %v1732, %v1732
      %v1741 = vpack.c.bf16 %v1733, %v1733
      %1742 = vst [vmem:[%s192] sm:$0xf] %v1734
      %1743 = vst [vmem:[%s192 + $0x4] sm:$0xf] %v1735
      %1744 = vst [vmem:[%s192 + $0x8] sm:$0xf] %v1736
      %1745 = vst [vmem:[%s192 + $0xc] sm:$0xf] %v1737
      %1746 = vst [vmem:[%s192 + $0x10] sm:$0xf] %v1738
      %1747 = vst [vmem:[%s192 + $0x14] sm:$0xf] %v1739
      %1748 = vst [vmem:[%s192 + $0x18] sm:$0xf] %v1740
      %1749 = vst [vmem:[%s192 + $0x1c] sm:$0xf] %v1741
      %s1750 = smul.u32 8, %s19
      %p1751 = scmp.lt.s32.totalorder %s18, 1
      %s1752 = scalar_select %p1751, %s18, 1
      %p1753 = scmp.lt.s32.totalorder %s1750, 7
      %s1754 = scalar_select %p1753, %s1750, 7
      %s1755 = smul.addr %s1752, 8
      %s1756 = sadd.s32 %s1754, %s1755
      %s1757 = smul.addr %s1756, 4
      %s1758 = scalar_lea.vmem %s3, %s1757
      // Predicated region
      $region33: #{basic_block_forward.3} parent=31 // pred_check
        %p1759 = pneg %p114
      $region34: #{basic_block_forward.3} parent=31 // pred_check_branch
        %1761 = sbr.rel (%p1759) target = $region36
      $region35: #{basic_block_forward.3} parent=31 // pred_region
        %s1762 = smul.u32 8, %s19
      $region36: #{basic_block_forward.3} parent=31 // pred_fallthru
        _
    $region32: #{basic_block_forward.3} parent=5 // pred_fallthru
      _
    %p1763 = scmp.le.s32.totalorder 2, %s9
    // Predicated region
    $region37: #{basic_block_forward.3} parent=5 // pred_check
      %p1764 = pneg %p1763
    $region38: #{basic_block_forward.3} parent=5 // pred_check_branch
      %1766 = sbr.rel (%p1764) target = $region40
    $region39: #{basic_block_forward.3} parent=5 // pred_region
      %s1767 = ssub.s32 %s9, 2
      // Predicated region
      $region41: #{basic_block_forward.3} parent=39 // pred_check
        %p1768 = pneg %p120
      $region42: #{basic_block_forward.3} parent=39 // pred_check_branch
        %1770 = sbr.rel (%p1768) target = $region44
      $region43: #{basic_block_forward.3} parent=39 // pred_region
        %s1771 = smul.u32 8, %s21
        %p1772 = scmp.lt.s32.totalorder %s20, 1
        %s1773 = scalar_select %p1772, %s20, 1
        %p1774 = scmp.lt.s32.totalorder %s1771, 7
        %s1775 = scalar_select %p1774, %s1771, 7
        %s1776 = smul.addr %s1773, 8
        %s1777 = sadd.s32 %s1775, %s1776
        %s1778 = smul.addr %s1777, 4
        %s1779 = scalar_lea.vmem %s3, %s1778
      $region44: #{basic_block_forward.3} parent=39 // pred_fallthru
        _
    $region40: #{basic_block_forward.3} parent=5 // pred_fallthru
      _
  $region6: #{basic_block_forward.3} parent=0 // loop_footer
    %s13 = sadd.s32 1, %s9
  $region7: #{basic_block_forward.3} parent=0 // loop_footer_branch
    %8 = sbr.rel target = $region3
  $region8: #{basic_block_forward.3} parent=0 // loop_exit
    _

// kernel: basic_block_forward.5
$region0: #{basic_block_forward.5}
  #allocation0 [shape = 'u32[]', space=smem, size = 0x4, offset = 0x4, fixed_abs, tag = 'smem constant byte address 0x4 - core index']
  #allocation1 [shape = 'u32[144,128]{1,0:T(1,128)}', space=vmem, size = 0x12000, scoped, tag = 'internal scratch']
  %s0 = inlined_call_operand.vmem [shape: bf16[2,1,10,10,128], index: 0, kind: input, shape index: {}]
  %s1 = inlined_call_operand.vmem [shape: bf16[1152,128], index: 1, kind: input, shape index: {}]
  %s2 = inlined_call_operand.vmem [shape: f32[1,128], index: 2, kind: input, shape index: {}]
  %s3 = inlined_call_operand.vmem [shape: bf16[2,8,8,128], index: 3, kind: input, shape index: {}]
  %s4 = inlined_call_operand.vmem [shape: f32[2,8,8,128], index: 4, kind: output, shape index: {}]
  %s5 = sld [smem:[#allocation0]]
  $region49: #{basic_block_forward.5} parent=0
    _
  %s7 = ssub.s32 1, %s5
  %s8 = scalar_select 0, %s7, %s5
  loop: start=0, step=1, limit=4
  $region2: #{basic_block_forward.5} parent=0 // loop_pre_header
    _
  $region3: #{basic_block_forward.5} parent=0 // loop_header
    %s10 = sphi 0, %s14
    %p11 = scmp.ge.s32.totalorder %s10, 4
    %s17 = sphi 0, %s29
    %s18 = sphi 0, %s25
    %s19 = sphi 0, %s17
    %s20 = sphi 0, %s18
    %s21 = sphi 0, %s19
    %s22 = sphi 0, %s20
    %s32 = sphi 0, %s34
    %s35 = sphi 0, %s32
    %s36 = sphi 0, %s35
    %s52 = sphi 0, %s36
    %s56 = sphi 0, %s56
    %s58 = sphi 0, %s56
    %s59 = sphi 0, %s58
    %s73 = sphi 0, %s59
    %s77 = sphi 0, %s77
    %s79 = sphi 0, %s77
    %s80 = sphi 0, %s79
    %s94 = sphi 0, %s80
    %s102 = sphi 0, %s104
    %s105 = sphi 0, %s102
    %s106 = sphi 0, %s105
    %s122 = sphi 0, %s106
    %s130 = sphi 0, %s132
    %s133 = sphi 0, %s130
    %s134 = sphi 0, %s133
    %s150 = sphi 0, %s134
  $region4: #{basic_block_forward.5} parent=0 // loop_header_branch
    %13 = sbr.rel (%p11) target = $region8
  $region5: #{basic_block_forward.5} parent=0 // loop_body
    %s15 = ssub.s32 %s10, 1
    %s16 = ssub.s32 %s10, 2
    %s23 = sadd.s32 1, %s18
    %p24 = scmp.ge.s32.totalorder %s23, 1
    %s25 = scalar_select %p24, 0, %s23
    %s26 = sadd.s32 1, %s17
    %s27 = scalar_select %p24, %s26, %s17
    %p28 = scmp.ge.s32.totalorder %s27, 2
    %s29 = scalar_select %p28, 0, %s27
    %s30 = ssub.s32 %s17, %s29
    %p31 = scmp.eq.s32.totalorder %s30, 0
    %s33 = sadd.s32 %s32, 1
    %s34 = scalar_select %p31, %s32, %s33
    %p37 = pneg %p31
    %p38 = scmp.eq.s32.totalorder %s10, 1
    %p39 = por %p37, %p38
    %p40 = scmp.ne.s32.totalorder %s32, %s35
    %p41 = scmp.eq.s32.totalorder %s10, 0
    %p42 = por %p40, %p41
    %p43 = scmp.ne.s32.totalorder %s32, %s35
    %p44 = scmp.eq.s32.totalorder %s15, 1
    %p45 = por %p43, %p44
    %p46 = scmp.ne.s32.totalorder %s35, %s36
    %p47 = scmp.eq.s32.totalorder %s15, 0
    %p48 = por %p46, %p47
    %p49 = scmp.ne.s32.totalorder %s35, %s36
    %p50 = scmp.eq.s32.totalorder %s16, 1
    %p51 = por %p49, %p50
    %p53 = scmp.ne.s32.totalorder %s36, %s52
    %p54 = scmp.eq.s32.totalorder %s16, 0
    %p55 = por %p53, %p54
    %s57 = sadd.s32 %s56, 1
    %p60 = scmp.eq.s32.totalorder %s10, 1
    %p61 = scmp.ne.s32.totalorder %s56, %s58
    %p62 = scmp.eq.s32.totalorder %s10, 0
    %p63 = por %p61, %p62
    %p64 = scmp.ne.s32.totalorder %s56, %s58
    %p65 = scmp.eq.s32.totalorder %s15, 1
    %p66 = por %p64, %p65
    %p67 = scmp.ne.s32.totalorder %s58, %s59
    %p68 = scmp.eq.s32.totalorder %s15, 0
    %p69 = por %p67, %p68
    %p70 = scmp.ne.s32.totalorder %s58, %s59
    %p71 = scmp.eq.s32.totalorder %s16, 1
    %p72 = por %p70, %p71
    %p74 = scmp.ne.s32.totalorder %s59, %s73
    %p75 = scmp.eq.s32.totalorder %s16, 0
    %p76 = por %p74, %p75
    %s78 = sadd.s32 %s77, 1
    %p81 = scmp.eq.s32.totalorder %s10, 1
    %p82 = scmp.ne.s32.totalorder %s77, %s79
    %p83 = scmp.eq.s32.totalorder %s10, 0
    %p84 = por %p82, %p83
    %p85 = scmp.ne.s32.totalorder %s77, %s79
    %p86 = scmp.eq.s32.totalorder %s15, 1
    %p87 = por %p85, %p86
    %p88 = scmp.ne.s32.totalorder %s79, %s80
    %p89 = scmp.eq.s32.totalorder %s15, 0
    %p90 = por %p88, %p89
    %p91 = scmp.ne.s32.totalorder %s79, %s80
    %p92 = scmp.eq.s32.totalorder %s16, 1
    %p93 = por %p91, %p92
    %p95 = scmp.ne.s32.totalorder %s80, %s94
    %p96 = scmp.eq.s32.totalorder %s16, 0
    %p97 = por %p95, %p96
    %s98 = ssub.s32 %s17, %s29
    %s99 = ssub.s32 %s18, %s25
    %s100 = sor.u32 %s98, %s99
    %p101 = scmp.eq.s32.totalorder %s100, 0
    %s103 = sadd.s32 %s102, 1
    %s104 = scalar_select %p101, %s102, %s103
    %p107 = pneg %p101
    %p108 = scmp.eq.s32.totalorder %s10, 1
    %p109 = por %p107, %p108
    %p110 = scmp.ne.s32.totalorder %s102, %s105
    %p111 = scmp.eq.s32.totalorder %s10, 0
    %p112 = por %p110, %p111
    %p113 = scmp.ne.s32.totalorder %s102, %s105
    %p114 = scmp.eq.s32.totalorder %s15, 1
    %p115 = por %p113, %p114
    %p116 = scmp.ne.s32.totalorder %s105, %s106
    %p117 = scmp.eq.s32.totalorder %s15, 0
    %p118 = por %p116, %p117
    %p119 = scmp.ne.s32.totalorder %s105, %s106
    %p120 = scmp.eq.s32.totalorder %s16, 1
    %p121 = por %p119, %p120
    %p123 = scmp.ne.s32.totalorder %s106, %s122
    %p124 = scmp.eq.s32.totalorder %s16, 0
    %p125 = por %p123, %p124
    %s126 = ssub.s32 %s17, %s29
    %s127 = ssub.s32 %s18, %s25
    %s128 = sor.u32 %s126, %s127
    %p129 = scmp.eq.s32.totalorder %s128, 0
    %s131 = sadd.s32 %s130, 1
    %s132 = scalar_select %p129, %s130, %s131
    %p135 = pneg %p129
    %p136 = scmp.eq.s32.totalorder %s10, 1
    %p137 = por %p135, %p136
    %p138 = scmp.ne.s32.totalorder %s130, %s133
    %p139 = scmp.eq.s32.totalorder %s10, 0
    %p140 = por %p138, %p139
    %p141 = scmp.ne.s32.totalorder %s130, %s133
    %p142 = scmp.eq.s32.totalorder %s15, 1
    %p143 = por %p141, %p142
    %p144 = scmp.ne.s32.totalorder %s133, %s134
    %p145 = scmp.eq.s32.totalorder %s15, 0
    %p146 = por %p144, %p145
    %p147 = scmp.ne.s32.totalorder %s133, %s134
    %p148 = scmp.eq.s32.totalorder %s16, 1
    %p149 = por %p147, %p148
    %p151 = scmp.ne.s32.totalorder %s134, %s150
    %p152 = scmp.eq.s32.totalorder %s16, 0
    %p153 = por %p151, %p152
    %p154 = scmp.le.s32.totalorder 1, %s10
    %p155 = scmp.lt.s32.totalorder %s10, 3
    %p156 = pnand %p154, %p155
    %p157 = pneg %p156
    // Predicated region
    $region9: #{basic_block_forward.5} parent=5 // pred_check
      _
    $region10: #{basic_block_forward.5} parent=5 // pred_check_branch
      %159 = sbr.rel (%p156) target = $region12
    $region11: #{basic_block_forward.5} parent=5 // pred_region
      %s160 = ssub.s32 %s10, 1
      // Predicated region
      $region13: #{basic_block_forward.5} parent=11 // pred_check
        %p161 = pneg %p69
      $region14: #{basic_block_forward.5} parent=11 // pred_check_branch
        %163 = sbr.rel (%p161) target = $region16
      $region15: #{basic_block_forward.5} parent=11 // pred_region
        _
      $region16: #{basic_block_forward.5} parent=11 // pred_fallthru
        _
      // Predicated region
      $region17: #{basic_block_forward.5} parent=11 // pred_check
        %p164 = pneg %p90
      $region18: #{basic_block_forward.5} parent=11 // pred_check_branch
        %166 = sbr.rel (%p164) target = $region20
      $region19: #{basic_block_forward.5} parent=11 // pred_region
        _
      $region20: #{basic_block_forward.5} parent=11 // pred_fallthru
        _
    $region12: #{basic_block_forward.5} parent=5 // pred_fallthru
      _
    %p167 = scmp.lt.s32.totalorder %s10, 2
    // Predicated region
    $region21: #{basic_block_forward.5} parent=5 // pred_check
      %p168 = pneg %p167
    $region22: #{basic_block_forward.5} parent=5 // pred_check_branch
      %170 = sbr.rel (%p168) target = $region24
    $region23: #{basic_block_forward.5} parent=5 // pred_region
      // Predicated region
      $region25: #{basic_block_forward.5} parent=23 // pred_check
        %p171 = pneg %p42
      $region26: #{basic_block_forward.5} parent=23 // pred_check_branch
        %173 = sbr.rel (%p171) target = $region28
      $region27: #{basic_block_forward.5} parent=23 // pred_region
        %p174 = scmp.lt.s32.totalorder %s17, 1
        %s175 = scalar_select %p174, %s17, 1
        %s176 = smul.addr %s175, 20
        %s177 = smul.addr %s176, 4
        %s178 = scalar_lea.vmem %s0, %s177
      $region28: #{basic_block_forward.5} parent=23 // pred_fallthru
        _
      // Predicated region
      $region29: #{basic_block_forward.5} parent=23 // pred_check
        %p179 = pneg %p112
      $region30: #{basic_block_forward.5} parent=23 // pred_check_branch
        %181 = sbr.rel (%p179) target = $region32
      $region31: #{basic_block_forward.5} parent=23 // pred_region
        %s182 = smul.u32 8, %s18
        %p183 = scmp.lt.s32.totalorder %s17, 1
        %s184 = scalar_select %p183, %s17, 1
        %p185 = scmp.lt.s32.totalorder %s182, 7
        %s186 = scalar_select %p185, %s182, 7
        %s187 = smul.addr %s184, 8
        %s188 = sadd.s32 %s186, %s187
        %s189 = smul.addr %s188, 4
        %s190 = scalar_lea.vmem %s3, %s189
        %s191 = smul.u32 8, %s18
      $region32: #{basic_block_forward.5} parent=23 // pred_fallthru
        _
    $region24: #{basic_block_forward.5} parent=5 // pred_fallthru
      _
    %p192 = scmp.le.s32.totalorder 1, %s10
    %p193 = scmp.lt.s32.totalorder %s10, 3
    %p194 = pnand %p192, %p193
    %p195 = pneg %p194
    // Predicated region
    $region33: #{basic_block_forward.5} parent=5 // pred_check
      _
    $region34: #{basic_block_forward.5} parent=5 // pred_check_branch
      %197 = sbr.rel (%p194) target = $region36
    $region35: #{basic_block_forward.5} parent=5 // pred_region
      %s198 = ssub.s32 %s10, 1
      %p199 = scmp.lt.s32.totalorder %s19, 1
      %s200 = scalar_select %p199, %s19, 1
      %s201 = smul.addr %s200, 20
      %s202 = smul.addr %s201, 4
      %s203 = scalar_lea.vmem %s0, %s202
      %p204 = pneg %p48
      %p205 = pneg %p45
      %p206 = pneg %p69
      %p207 = pneg %p66
      %p208 = pneg %p90
      %p209 = pneg %p87
      %s210 = smul.u32 8, %s20
      %p211 = scmp.lt.s32.totalorder %s19, 1
      %s212 = scalar_select %p211, %s19, 1
      %p213 = scmp.lt.s32.totalorder %s210, 7
      %s214 = scalar_select %p213, %s210, 7
      %s215 = smul.addr %s212, 8
      %s216 = sadd.s32 %s214, %s215
      %s217 = smul.addr %s216, 4
      %s218 = scalar_lea.vmem %s3, %s217
      %p219 = pneg %p118
      %p220 = pneg %p115
      %p221 = pneg %p146
      %p222 = pneg %p143
      %s223 = smul.u32 8, %s20
      %p224 = scmp.lt.s32.totalorder %s19, 1
      %s225 = scalar_select %p224, %s19, 1
      %p226 = scmp.lt.s32.totalorder %s223, 7
      %s227 = scalar_select %p226, %s223, 7
      %s228 = smul.addr %s225, 8
      %s229 = sadd.s32 %s227, %s228
      %s230 = smul.addr %s229, 8
      %s231 = scalar_lea.vmem %s4, %s230
      %p232 = scmp.lt.s32.totalorder %s19, 1
      %s233 = scalar_select %p232, %s19, 1
      %s234 = smul.addr %s233, 20
      %s235 = smul.addr %s234, 4
      %s236 = scalar_lea.vmem %s0, %s235
      %s237 = smul.u32 8, %s20
      %p238 = scmp.lt.s32.totalorder %s19, 1
      %s239 = scalar_select %p238, %s19, 1
      %p240 = scmp.lt.s32.totalorder %s237, 7
      %s241 = scalar_select %p240, %s237, 7
      %s242 = smul.addr %s239, 8
      %s243 = sadd.s32 %s241, %s242
      %s244 = smul.addr %s243, 4
      %s245 = scalar_lea.vmem %s3, %s244
      %s246 = smul.u32 8, %s20
      %s247 = smul.u32 8, %s20
      %p248 = scmp.lt.s32.totalorder %s19, 1
      %s249 = scalar_select %p248, %s19, 1
      %p250 = scmp.lt.s32.totalorder %s247, 7
      %s251 = scalar_select %p250, %s247, 7
      %s252 = smul.addr %s249, 8
      %s253 = sadd.s32 %s251, %s252
      %s254 = smul.addr %s253, 8
      %s255 = scalar_lea.vmem %s4, %s254
      %s256 = smul.u32 8, %s20
      %s258 = smul.u32 %s20, 8
      %s259 = smul.u32 %s258, 2
      %s260 = smul.addr %s259, 4
      %s261 = scalar_lea.vmem %s236, %s260
      %v262 = vld [vmem:[%s261] sm:$0xf]
      %v263 = vld [vmem:[%s261 + $0x8] sm:$0xf]
      %v264 = vld [vmem:[%s261 + $0x10] sm:$0xf]
      %v265 = vld [vmem:[%s261 + $0x18] sm:$0xf]
      %v266 = vld [vmem:[%s261 + $0x20] sm:$0xf]
      %v267 = vld [vmem:[%s261 + $0x28] sm:$0xf]
      %v268 = vld [vmem:[%s261 + $0x30] sm:$0xf]
      %v269 = vld [vmem:[%s261 + $0x38] sm:$0xf]
      %v270 = vld [vmem:[%s261 + $0x4] sm:$0x1]
      %v271 = vld [vmem:[%s261 + $0xc] sm:$0x1]
      %v272 = vld [vmem:[%s261 + $0x14] sm:$0x1]
      %v273 = vld [vmem:[%s261 + $0x1c] sm:$0x1]
      %v274 = vld [vmem:[%s261 + $0x24] sm:$0x1]
      %v275 = vld [vmem:[%s261 + $0x2c] sm:$0x1]
      %v276 = vld [vmem:[%s261 + $0x34] sm:$0x1]
      %v277 = vld [vmem:[%s261 + $0x3c] sm:$0x1]
      %vm278 = vsmask.f32 3328
      %vm279 = vsmask.f32 7440
      %vm280 = vmor %vm278, %vm279
      %v282 = vshrl.u32 %v262, 16
      %v284 = vrot.slane %v282, 4
      %v285 = vshll.u32 %v262, 16
      %v287 = vrot.slane %v285, 5
      %v288 = vor.u32 %v284, %v287
      %v289 = vrot.slane %v288, 4
      %v291 = vshll.u32 %v270, 16
      %v293 = vrot.slane %v291, 5
      %v294 = vsel %vm280, %v289, %v293
      %v296 = vshrl.u32 %v263, 16
      %v298 = vrot.slane %v296, 4
      %v299 = vshll.u32 %v263, 16
      %v301 = vrot.slane %v299, 5
      %v302 = vor.u32 %v298, %v301
      %v303 = vrot.slane %v302, 4
      %v305 = vshll.u32 %v271, 16
      %v307 = vrot.slane %v305, 5
      %v308 = vsel %vm280, %v303, %v307
      %v310 = vshrl.u32 %v264, 16
      %v312 = vrot.slane %v310, 4
      %v313 = vshll.u32 %v264, 16
      %v315 = vrot.slane %v313, 5
      %v316 = vor.u32 %v312, %v315
      %v317 = vrot.slane %v316, 4
      %v319 = vshll.u32 %v272, 16
      %v321 = vrot.slane %v319, 5
      %v322 = vsel %vm280, %v317, %v321
      %v324 = vshrl.u32 %v265, 16
      %v326 = vrot.slane %v324, 4
      %v327 = vshll.u32 %v265, 16
      %v329 = vrot.slane %v327, 5
      %v330 = vor.u32 %v326, %v329
      %v331 = vrot.slane %v330, 4
      %v333 = vshll.u32 %v273, 16
      %v335 = vrot.slane %v333, 5
      %v336 = vsel %vm280, %v331, %v335
      %v338 = vshrl.u32 %v266, 16
      %v340 = vrot.slane %v338, 4
      %v341 = vshll.u32 %v266, 16
      %v343 = vrot.slane %v341, 5
      %v344 = vor.u32 %v340, %v343
      %v345 = vrot.slane %v344, 4
      %v347 = vshll.u32 %v274, 16
      %v349 = vrot.slane %v347, 5
      %v350 = vsel %vm280, %v345, %v349
      %v352 = vshrl.u32 %v267, 16
      %v354 = vrot.slane %v352, 4
      %v355 = vshll.u32 %v267, 16
      %v357 = vrot.slane %v355, 5
      %v358 = vor.u32 %v354, %v357
      %v359 = vrot.slane %v358, 4
      %v361 = vshll.u32 %v275, 16
      %v363 = vrot.slane %v361, 5
      %v364 = vsel %vm280, %v359, %v363
      %v366 = vshrl.u32 %v268, 16
      %v368 = vrot.slane %v366, 4
      %v369 = vshll.u32 %v268, 16
      %v371 = vrot.slane %v369, 5
      %v372 = vor.u32 %v368, %v371
      %v373 = vrot.slane %v372, 4
      %v375 = vshll.u32 %v276, 16
      %v377 = vrot.slane %v375, 5
      %v378 = vsel %vm280, %v373, %v377
      %v380 = vshrl.u32 %v269, 16
      %v382 = vrot.slane %v380, 4
      %v383 = vshll.u32 %v269, 16
      %v385 = vrot.slane %v383, 5
      %v386 = vor.u32 %v382, %v385
      %v387 = vrot.slane %v386, 4
      %v389 = vshll.u32 %v277, 16
      %v391 = vrot.slane %v389, 5
      %v392 = vsel %vm280, %v387, %v391
      %v393 = vld [vmem:[%s261] sm:$0xe]
      %v394 = vld [vmem:[%s261 + $0x8] sm:$0xe]
      %v395 = vld [vmem:[%s261 + $0x10] sm:$0xe]
      %v396 = vld [vmem:[%s261 + $0x18] sm:$0xe]
      %v397 = vld [vmem:[%s261 + $0x20] sm:$0xe]
      %v398 = vld [vmem:[%s261 + $0x28] sm:$0xe]
      %v399 = vld [vmem:[%s261 + $0x30] sm:$0xe]
      %v400 = vld [vmem:[%s261 + $0x38] sm:$0xe]
      %vm417 = vcmask 1042432
      %vm418 = vcmask 1046532
      %vm419 = vmor %vm417, %vm418
      %v420 = vrot.slane %v393, 5
      %v421 = vrot.slane %v420, 4
      %v422 = vrot.slane %v270, 5
      %v423 = vsel %vm419, %v421, %v422
      %v424 = vrot.slane %v394, 5
      %v425 = vrot.slane %v424, 4
      %v426 = vrot.slane %v271, 5
      %v427 = vsel %vm419, %v425, %v426
      %v428 = vrot.slane %v395, 5
      %v429 = vrot.slane %v428, 4
      %v430 = vrot.slane %v272, 5
      %v431 = vsel %vm419, %v429, %v430
      %v432 = vrot.slane %v396, 5
      %v433 = vrot.slane %v432, 4
      %v434 = vrot.slane %v273, 5
      %v435 = vsel %vm419, %v433, %v434
      %v436 = vrot.slane %v397, 5
      %v437 = vrot.slane %v436, 4
      %v438 = vrot.slane %v274, 5
      %v439 = vsel %vm419, %v437, %v438
      %v440 = vrot.slane %v398, 5
      %v441 = vrot.slane %v440, 4
      %v442 = vrot.slane %v275, 5
      %v443 = vsel %vm419, %v441, %v442
      %v444 = vrot.slane %v399, 5
      %v445 = vrot.slane %v444, 4
      %v446 = vrot.slane %v276, 5
      %v447 = vsel %vm419, %v445, %v446
      %v448 = vrot.slane %v400, 5
      %v449 = vrot.slane %v448, 4
      %v450 = vrot.slane %v277, 5
      %v451 = vsel %vm419, %v449, %v450
      %s452 = sadd.s32 %s258, 1
      %s453 = smul.u32 %s452, 2
      %s454 = smul.addr %s453, 4
      %s455 = scalar_lea.vmem %s236, %s454
      %v456 = vld [vmem:[%s455] sm:$0xf]
      %v457 = vld [vmem:[%s455 + $0x8] sm:$0xf]
      %v458 = vld [vmem:[%s455 + $0x10] sm:$0xf]
      %v459 = vld [vmem:[%s455 + $0x18] sm:$0xf]
      %v460 = vld [vmem:[%s455 + $0x20] sm:$0xf]
      %v461 = vld [vmem:[%s455 + $0x28] sm:$0xf]
      %v462 = vld [vmem:[%s455 + $0x30] sm:$0xf]
      %v463 = vld [vmem:[%s455 + $0x38] sm:$0xf]
      %v464 = vld [vmem:[%s455 + $0x4] sm:$0x1]
      %v465 = vld [vmem:[%s455 + $0xc] sm:$0x1]
      %v466 = vld [vmem:[%s455 + $0x14] sm:$0x1]
      %v467 = vld [vmem:[%s455 + $0x1c] sm:$0x1]
      %v468 = vld [vmem:[%s455 + $0x24] sm:$0x1]
      %v469 = vld [vmem:[%s455 + $0x2c] sm:$0x1]
      %v470 = vld [vmem:[%s455 + $0x34] sm:$0x1]
      %v471 = vld [vmem:[%s455 + $0x3c] sm:$0x1]
      %v473 = vshrl.u32 %v456, 16
      %v475 = vrot.slane %v473, 4
      %v476 = vshll.u32 %v456, 16
      %v478 = vrot.slane %v476, 5
      %v479 = vor.u32 %v475, %v478
      %v480 = vrot.slane %v479, 4
      %v482 = vshll.u32 %v464, 16
      %v484 = vrot.slane %v482, 5
      %v485 = vsel %vm280, %v480, %v484
      %v487 = vshrl.u32 %v457, 16
      %v489 = vrot.slane %v487, 4
      %v490 = vshll.u32 %v457, 16
      %v492 = vrot.slane %v490, 5
      %v493 = vor.u32 %v489, %v492
      %v494 = vrot.slane %v493, 4
      %v496 = vshll.u32 %v465, 16
      %v498 = vrot.slane %v496, 5
      %v499 = vsel %vm280, %v494, %v498
      %v501 = vshrl.u32 %v458, 16
      %v503 = vrot.slane %v501, 4
      %v504 = vshll.u32 %v458, 16
      %v506 = vrot.slane %v504, 5
      %v507 = vor.u32 %v503, %v506
      %v508 = vrot.slane %v507, 4
      %v510 = vshll.u32 %v466, 16
      %v512 = vrot.slane %v510, 5
      %v513 = vsel %vm280, %v508, %v512
      %v515 = vshrl.u32 %v459, 16
      %v517 = vrot.slane %v515, 4
      %v518 = vshll.u32 %v459, 16
      %v520 = vrot.slane %v518, 5
      %v521 = vor.u32 %v517, %v520
      %v522 = vrot.slane %v521, 4
      %v524 = vshll.u32 %v467, 16
      %v526 = vrot.slane %v524, 5
      %v527 = vsel %vm280, %v522, %v526
      %v529 = vshrl.u32 %v460, 16
      %v531 = vrot.slane %v529, 4
      %v532 = vshll.u32 %v460, 16
      %v534 = vrot.slane %v532, 5
      %v535 = vor.u32 %v531, %v534
      %v536 = vrot.slane %v535, 4
      %v538 = vshll.u32 %v468, 16
      %v540 = vrot.slane %v538, 5
      %v541 = vsel %vm280, %v536, %v540
      %v543 = vshrl.u32 %v461, 16
      %v545 = vrot.slane %v543, 4
      %v546 = vshll.u32 %v461, 16
      %v548 = vrot.slane %v546, 5
      %v549 = vor.u32 %v545, %v548
      %v550 = vrot.slane %v549, 4
      %v552 = vshll.u32 %v469, 16
      %v554 = vrot.slane %v552, 5
      %v555 = vsel %vm280, %v550, %v554
      %v557 = vshrl.u32 %v462, 16
      %v559 = vrot.slane %v557, 4
      %v560 = vshll.u32 %v462, 16
      %v562 = vrot.slane %v560, 5
      %v563 = vor.u32 %v559, %v562
      %v564 = vrot.slane %v563, 4
      %v566 = vshll.u32 %v470, 16
      %v568 = vrot.slane %v566, 5
      %v569 = vsel %vm280, %v564, %v568
      %v571 = vshrl.u32 %v463, 16
      %v573 = vrot.slane %v571, 4
      %v574 = vshll.u32 %v463, 16
      %v576 = vrot.slane %v574, 5
      %v577 = vor.u32 %v573, %v576
      %v578 = vrot.slane %v577, 4
      %v580 = vshll.u32 %v471, 16
      %v582 = vrot.slane %v580, 5
      %v583 = vsel %vm280, %v578, %v582
      %v584 = vld [vmem:[%s455] sm:$0xe]
      %v585 = vld [vmem:[%s455 + $0x8] sm:$0xe]
      %v586 = vld [vmem:[%s455 + $0x10] sm:$0xe]
      %v587 = vld [vmem:[%s455 + $0x18] sm:$0xe]
      %v588 = vld [vmem:[%s455 + $0x20] sm:$0xe]
      %v589 = vld [vmem:[%s455 + $0x28] sm:$0xe]
      %v590 = vld [vmem:[%s455 + $0x30] sm:$0xe]
      %v591 = vld [vmem:[%s455 + $0x38] sm:$0xe]
      %v608 = vrot.slane %v584, 5
      %v609 = vrot.slane %v608, 4
      %v610 = vrot.slane %v464, 5
      %v611 = vsel %vm419, %v609, %v610
      %v612 = vrot.slane %v585, 5
      %v613 = vrot.slane %v612, 4
      %v614 = vrot.slane %v465, 5
      %v615 = vsel %vm419, %v613, %v614
      %v616 = vrot.slane %v586, 5
      %v617 = vrot.slane %v616, 4
      %v618 = vrot.slane %v466, 5
      %v619 = vsel %vm419, %v617, %v618
      %v620 = vrot.slane %v587, 5
      %v621 = vrot.slane %v620, 4
      %v622 = vrot.slane %v467, 5
      %v623 = vsel %vm419, %v621, %v622
      %v624 = vrot.slane %v588, 5
      %v625 = vrot.slane %v624, 4
      %v626 = vrot.slane %v468, 5
      %v627 = vsel %vm419, %v625, %v626
      %v628 = vrot.slane %v589, 5
      %v629 = vrot.slane %v628, 4
      %v630 = vrot.slane %v469, 5
      %v631 = vsel %vm419, %v629, %v630
      %v632 = vrot.slane %v590, 5
      %v633 = vrot.slane %v632, 4
      %v634 = vrot.slane %v470, 5
      %v635 = vsel %vm419, %v633, %v634
      %v636 = vrot.slane %v591, 5
      %v637 = vrot.slane %v636, 4
      %v638 = vrot.slane %v471, 5
      %v639 = vsel %vm419, %v637, %v638
      %s640 = sadd.s32 %s258, 2
      %s641 = smul.u32 %s640, 2
      %s642 = smul.addr %s641, 4
      %s643 = scalar_lea.vmem %s236, %s642
      %v644 = vld [vmem:[%s643] sm:$0xf]
      %v645 = vld [vmem:[%s643 + $0x8] sm:$0xf]
      %v646 = vld [vmem:[%s643 + $0x10] sm:$0xf]
      %v647 = vld [vmem:[%s643 + $0x18] sm:$0xf]
      %v648 = vld [vmem:[%s643 + $0x20] sm:$0xf]
      %v649 = vld [vmem:[%s643 + $0x28] sm:$0xf]
      %v650 = vld [vmem:[%s643 + $0x30] sm:$0xf]
      %v651 = vld [vmem:[%s643 + $0x38] sm:$0xf]
      %v652 = vld [vmem:[%s643 + $0x4] sm:$0x1]
      %v653 = vld [vmem:[%s643 + $0xc] sm:$0x1]
      %v654 = vld [vmem:[%s643 + $0x14] sm:$0x1]
      %v655 = vld [vmem:[%s643 + $0x1c] sm:$0x1]
      %v656 = vld [vmem:[%s643 + $0x24] sm:$0x1]
      %v657 = vld [vmem:[%s643 + $0x2c] sm:$0x1]
      %v658 = vld [vmem:[%s643 + $0x34] sm:$0x1]
      %v659 = vld [vmem:[%s643 + $0x3c] sm:$0x1]
      %v661 = vshrl.u32 %v644, 16
      %v663 = vrot.slane %v661, 4
      %v664 = vshll.u32 %v644, 16
      %v666 = vrot.slane %v664, 5
      %v667 = vor.u32 %v663, %v666
      %v668 = vrot.slane %v667, 4
      %v670 = vshll.u32 %v652, 16
      %v672 = vrot.slane %v670, 5
      %v673 = vsel %vm280, %v668, %v672
      %v675 = vshrl.u32 %v645, 16
      %v677 = vrot.slane %v675, 4
      %v678 = vshll.u32 %v645, 16
      %v680 = vrot.slane %v678, 5
      %v681 = vor.u32 %v677, %v680
      %v682 = vrot.slane %v681, 4
      %v684 = vshll.u32 %v653, 16
      %v686 = vrot.slane %v684, 5
      %v687 = vsel %vm280, %v682, %v686
      %v689 = vshrl.u32 %v646, 16
      %v691 = vrot.slane %v689, 4
      %v692 = vshll.u32 %v646, 16
      %v694 = vrot.slane %v692, 5
      %v695 = vor.u32 %v691, %v694
      %v696 = vrot.slane %v695, 4
      %v698 = vshll.u32 %v654, 16
      %v700 = vrot.slane %v698, 5
      %v701 = vsel %vm280, %v696, %v700
      %v703 = vshrl.u32 %v647, 16
      %v705 = vrot.slane %v703, 4
      %v706 = vshll.u32 %v647, 16
      %v708 = vrot.slane %v706, 5
      %v709 = vor.u32 %v705, %v708
      %v710 = vrot.slane %v709, 4
      %v712 = vshll.u32 %v655, 16
      %v714 = vrot.slane %v712, 5
      %v715 = vsel %vm280, %v710, %v714
      %v717 = vshrl.u32 %v648, 16
      %v719 = vrot.slane %v717, 4
      %v720 = vshll.u32 %v648, 16
      %v722 = vrot.slane %v720, 5
      %v723 = vor.u32 %v719, %v722
      %v724 = vrot.slane %v723, 4
      %v726 = vshll.u32 %v656, 16
      %v728 = vrot.slane %v726, 5
      %v729 = vsel %vm280, %v724, %v728
      %v731 = vshrl.u32 %v649, 16
      %v733 = vrot.slane %v731, 4
      %v734 = vshll.u32 %v649, 16
      %v736 = vrot.slane %v734, 5
      %v737 = vor.u32 %v733, %v736
      %v738 = vrot.slane %v737, 4
      %v740 = vshll.u32 %v657, 16
      %v742 = vrot.slane %v740, 5
      %v743 = vsel %vm280, %v738, %v742
      %v745 = vshrl.u32 %v650, 16
      %v747 = vrot.slane %v745, 4
      %v748 = vshll.u32 %v650, 16
      %v750 = vrot.slane %v748, 5
      %v751 = vor.u32 %v747, %v750
      %v752 = vrot.slane %v751, 4
      %v754 = vshll.u32 %v658, 16
      %v756 = vrot.slane %v754, 5
      %v757 = vsel %vm280, %v752, %v756
      %v759 = vshrl.u32 %v651, 16
      %v761 = vrot.slane %v759, 4
      %v762 = vshll.u32 %v651, 16
      %v764 = vrot.slane %v762, 5
      %v765 = vor.u32 %v761, %v764
      %v766 = vrot.slane %v765, 4
      %v768 = vshll.u32 %v659, 16
      %v770 = vrot.slane %v768, 5
      %v771 = vsel %vm280, %v766, %v770
      %v772 = vld [vmem:[%s643] sm:$0xe]
      %v773 = vld [vmem:[%s643 + $0x8] sm:$0xe]
      %v774 = vld [vmem:[%s643 + $0x10] sm:$0xe]
      %v775 = vld [vmem:[%s643 + $0x18] sm:$0xe]
      %v776 = vld [vmem:[%s643 + $0x20] sm:$0xe]
      %v777 = vld [vmem:[%s643 + $0x28] sm:$0xe]
      %v778 = vld [vmem:[%s643 + $0x30] sm:$0xe]
      %v779 = vld [vmem:[%s643 + $0x38] sm:$0xe]
      %v796 = vrot.slane %v772, 5
      %v797 = vrot.slane %v796, 4
      %v798 = vrot.slane %v652, 5
      %v799 = vsel %vm419, %v797, %v798
      %v800 = vrot.slane %v773, 5
      %v801 = vrot.slane %v800, 4
      %v802 = vrot.slane %v653, 5
      %v803 = vsel %vm419, %v801, %v802
      %v804 = vrot.slane %v774, 5
      %v805 = vrot.slane %v804, 4
      %v806 = vrot.slane %v654, 5
      %v807 = vsel %vm419, %v805, %v806
      %v808 = vrot.slane %v775, 5
      %v809 = vrot.slane %v808, 4
      %v810 = vrot.slane %v655, 5
      %v811 = vsel %vm419, %v809, %v810
      %v812 = vrot.slane %v776, 5
      %v813 = vrot.slane %v812, 4
      %v814 = vrot.slane %v656, 5
      %v815 = vsel %vm419, %v813, %v814
      %v816 = vrot.slane %v777, 5
      %v817 = vrot.slane %v816, 4
      %v818 = vrot.slane %v657, 5
      %v819 = vsel %vm419, %v817, %v818
      %v820 = vrot.slane %v778, 5
      %v821 = vrot.slane %v820, 4
      %v822 = vrot.slane %v658, 5
      %v823 = vsel %vm419, %v821, %v822
      %v824 = vrot.slane %v779, 5
      %v825 = vrot.slane %v824, 4
      %v826 = vrot.slane %v659, 5
      %v827 = vsel %vm419, %v825, %v826
      %v836 = vunpack.c.l.b16 %v262
      %v837 = vunpack.c.l.b16 %v263
      %v838 = vunpack.c.l.b16 %v264
      %v839 = vunpack.c.l.b16 %v265
      %v840 = vunpack.c.l.b16 %v266
      %v841 = vunpack.c.l.b16 %v267
      %v842 = vunpack.c.l.b16 %v268
      %v843 = vunpack.c.l.b16 %v269
      %v844 = vpack.c.b16 %v837, %v836
      %v845 = vpack.c.b16 %v839, %v838
      %v846 = vpack.c.b16 %v841, %v840
      %v847 = vpack.c.b16 %v843, %v842
      %v852 = vunpack.c.l.b16 %v294
      %v853 = vunpack.c.l.b16 %v308
      %v854 = vunpack.c.l.b16 %v322
      %v855 = vunpack.c.l.b16 %v336
      %v856 = vunpack.c.l.b16 %v350
      %v857 = vunpack.c.l.b16 %v364
      %v858 = vunpack.c.l.b16 %v378
      %v859 = vunpack.c.l.b16 %v392
      %v860 = vpack.c.b16 %v853, %v852
      %v861 = vpack.c.b16 %v855, %v854
      %v862 = vpack.c.b16 %v857, %v856
      %v863 = vpack.c.b16 %v859, %v858
      %v868 = vunpack.c.l.b16 %v423
      %v869 = vunpack.c.l.b16 %v427
      %v870 = vunpack.c.l.b16 %v431
      %v871 = vunpack.c.l.b16 %v435
      %v872 = vunpack.c.l.b16 %v439
      %v873 = vunpack.c.l.b16 %v443
      %v874 = vunpack.c.l.b16 %v447
      %v875 = vunpack.c.l.b16 %v451
      %v876 = vpack.c.b16 %v869, %v868
      %v877 = vpack.c.b16 %v871, %v870
      %v878 = vpack.c.b16 %v873, %v872
      %v879 = vpack.c.b16 %v875, %v874
      %v892 = vunpack.c.l.b16 %v456
      %v893 = vunpack.c.l.b16 %v457
      %v894 = vunpack.c.l.b16 %v458
      %v895 = vunpack.c.l.b16 %v459
      %v896 = vunpack.c.l.b16 %v460
      %v897 = vunpack.c.l.b16 %v461
      %v898 = vunpack.c.l.b16 %v462
      %v899 = vunpack.c.l.b16 %v463
      %v900 = vpack.c.b16 %v893, %v892
      %v901 = vpack.c.b16 %v895, %v894
      %v902 = vpack.c.b16 %v897, %v896
      %v903 = vpack.c.b16 %v899, %v898
      %v908 = vunpack.c.l.b16 %v485
      %v909 = vunpack.c.l.b16 %v499
      %v910 = vunpack.c.l.b16 %v513
      %v911 = vunpack.c.l.b16 %v527
      %v912 = vunpack.c.l.b16 %v541
      %v913 = vunpack.c.l.b16 %v555
      %v914 = vunpack.c.l.b16 %v569
      %v915 = vunpack.c.l.b16 %v583
      %v916 = vpack.c.b16 %v909, %v908
      %v917 = vpack.c.b16 %v911, %v910
      %v918 = vpack.c.b16 %v913, %v912
      %v919 = vpack.c.b16 %v915, %v914
      %v924 = vunpack.c.l.b16 %v611
      %v925 = vunpack.c.l.b16 %v615
      %v926 = vunpack.c.l.b16 %v619
      %v927 = vunpack.c.l.b16 %v623
      %v928 = vunpack.c.l.b16 %v627
      %v929 = vunpack.c.l.b16 %v631
      %v930 = vunpack.c.l.b16 %v635
      %v931 = vunpack.c.l.b16 %v639
      %v932 = vpack.c.b16 %v925, %v924
      %v933 = vpack.c.b16 %v927, %v926
      %v934 = vpack.c.b16 %v929, %v928
      %v935 = vpack.c.b16 %v931, %v930
      %v948 = vunpack.c.l.b16 %v644
      %v949 = vunpack.c.l.b16 %v645
      %v950 = vunpack.c.l.b16 %v646
      %v951 = vunpack.c.l.b16 %v647
      %v952 = vunpack.c.l.b16 %v648
      %v953 = vunpack.c.l.b16 %v649
      %v954 = vunpack.c.l.b16 %v650
      %v955 = vunpack.c.l.b16 %v651
      %v956 = vpack.c.b16 %v949, %v948
      %v957 = vpack.c.b16 %v951, %v950
      %v958 = vpack.c.b16 %v953, %v952
      %v959 = vpack.c.b16 %v955, %v954
      %v964 = vunpack.c.l.b16 %v673
      %v965 = vunpack.c.l.b16 %v687
      %v966 = vunpack.c.l.b16 %v701
      %v967 = vunpack.c.l.b16 %v715
      %v968 = vunpack.c.l.b16 %v729
      %v969 = vunpack.c.l.b16 %v743
      %v970 = vunpack.c.l.b16 %v757
      %v971 = vunpack.c.l.b16 %v771
      %v972 = vpack.c.b16 %v965, %v964
      %v973 = vpack.c.b16 %v967, %v966
      %v974 = vpack.c.b16 %v969, %v968
      %v975 = vpack.c.b16 %v971, %v970
      %v980 = vunpack.c.l.b16 %v799
      %v981 = vunpack.c.l.b16 %v803
      %v982 = vunpack.c.l.b16 %v807
      %v983 = vunpack.c.l.b16 %v811
      %v984 = vunpack.c.l.b16 %v815
      %v985 = vunpack.c.l.b16 %v819
      %v986 = vunpack.c.l.b16 %v823
      %v987 = vunpack.c.l.b16 %v827
      %v988 = vpack.c.b16 %v981, %v980
      %v989 = vpack.c.b16 %v983, %v982
      %v990 = vpack.c.b16 %v985, %v984
      %v991 = vpack.c.b16 %v987, %v986
      %v996 = vld [vmem:[%s1] sm:$0xf]
      %v997 = vld [vmem:[%s1 + $0x4] sm:$0xf]
      %v998 = vld [vmem:[%s1 + $0x8] sm:$0xf]
      %v999 = vld [vmem:[%s1 + $0xc] sm:$0xf]
      %v1000 = vld [vmem:[%s1 + $0x10] sm:$0xf]
      %v1001 = vld [vmem:[%s1 + $0x14] sm:$0xf]
      %v1002 = vld [vmem:[%s1 + $0x18] sm:$0xf]
      %v1003 = vld [vmem:[%s1 + $0x1c] sm:$0xf]
      %v1004 = vld [vmem:[%s1 + $0x20] sm:$0xf]
      %v1005 = vld [vmem:[%s1 + $0x24] sm:$0xf]
      %v1006 = vld [vmem:[%s1 + $0x28] sm:$0xf]
      %v1007 = vld [vmem:[%s1 + $0x2c] sm:$0xf]
      %v1008 = vld [vmem:[%s1 + $0x30] sm:$0xf]
      %v1009 = vld [vmem:[%s1 + $0x34] sm:$0xf]
      %v1010 = vld [vmem:[%s1 + $0x38] sm:$0xf]
      %v1011 = vld [vmem:[%s1 + $0x3c] sm:$0xf]
      %v1012 = vld [vmem:[%s1 + $0x40] sm:$0xf]
      %v1013 = vld [vmem:[%s1 + $0x44] sm:$0xf]
      %v1014 = vld [vmem:[%s1 + $0x48] sm:$0xf]
      %v1015 = vld [vmem:[%s1 + $0x4c] sm:$0xf]
      %v1016 = vld [vmem:[%s1 + $0x50] sm:$0xf]
      %v1017 = vld [vmem:[%s1 + $0x54] sm:$0xf]
      %v1018 = vld [vmem:[%s1 + $0x58] sm:$0xf]
      %v1019 = vld [vmem:[%s1 + $0x5c] sm:$0xf]
      %v1020 = vld [vmem:[%s1 + $0x60] sm:$0xf]
      %v1021 = vld [vmem:[%s1 + $0x64] sm:$0xf]
      %v1022 = vld [vmem:[%s1 + $0x68] sm:$0xf]
      %v1023 = vld [vmem:[%s1 + $0x6c] sm:$0xf]
      %v1024 = vld [vmem:[%s1 + $0x70] sm:$0xf]
      %v1025 = vld [vmem:[%s1 + $0x74] sm:$0xf]
      %v1026 = vld [vmem:[%s1 + $0x78] sm:$0xf]
      %v1027 = vld [vmem:[%s1 + $0x7c] sm:$0xf]
      %v1028 = vld [vmem:[%s1 + $0x80] sm:$0xf]
      %v1029 = vld [vmem:[%s1 + $0x84] sm:$0xf]
      %v1030 = vld [vmem:[%s1 + $0x88] sm:$0xf]
      %v1031 = vld [vmem:[%s1 + $0x8c] sm:$0xf]
      %v1032 = vld [vmem:[%s1 + $0x90] sm:$0xf]
      %v1033 = vld [vmem:[%s1 + $0x94] sm:$0xf]
      %v1034 = vld [vmem:[%s1 + $0x98] sm:$0xf]
      %v1035 = vld [vmem:[%s1 + $0x9c] sm:$0xf]
      %v1036 = vld [vmem:[%s1 + $0xa0] sm:$0xf]
      %v1037 = vld [vmem:[%s1 + $0xa4] sm:$0xf]
      %v1038 = vld [vmem:[%s1 + $0xa8] sm:$0xf]
      %v1039 = vld [vmem:[%s1 + $0xac] sm:$0xf]
      %v1040 = vld [vmem:[%s1 + $0xb0] sm:$0xf]
      %v1041 = vld [vmem:[%s1 + $0xb4] sm:$0xf]
      %v1042 = vld [vmem:[%s1 + $0xb8] sm:$0xf]
      %v1043 = vld [vmem:[%s1 + $0xbc] sm:$0xf]
      %v1044 = vld [vmem:[%s1 + $0xc0] sm:$0xf]
      %v1045 = vld [vmem:[%s1 + $0xc4] sm:$0xf]
      %v1046 = vld [vmem:[%s1 + $0xc8] sm:$0xf]
      %v1047 = vld [vmem:[%s1 + $0xcc] sm:$0xf]
      %v1048 = vld [vmem:[%s1 + $0xd0] sm:$0xf]
      %v1049 = vld [vmem:[%s1 + $0xd4] sm:$0xf]
      %v1050 = vld [vmem:[%s1 + $0xd8] sm:$0xf]
      %v1051 = vld [vmem:[%s1 + $0xdc] sm:$0xf]
      %v1052 = vld [vmem:[%s1 + $0xe0] sm:$0xf]
      %v1053 = vld [vmem:[%s1 + $0xe4] sm:$0xf]
      %v1054 = vld [vmem:[%s1 + $0xe8] sm:$0xf]
      %v1055 = vld [vmem:[%s1 + $0xec] sm:$0xf]
      %v1056 = vld [vmem:[%s1 + $0xf0] sm:$0xf]
      %v1057 = vld [vmem:[%s1 + $0xf4] sm:$0xf]
      %v1058 = vld [vmem:[%s1 + $0xf8] sm:$0xf]
      %v1059 = vld [vmem:[%s1 + $0xfc] sm:$0xf]
      %v1060 = vld [vmem:[%s1 + $0x100] sm:$0xf]
      %v1061 = vld [vmem:[%s1 + $0x104] sm:$0xf]
      %v1062 = vld [vmem:[%s1 + $0x108] sm:$0xf]
      %v1063 = vld [vmem:[%s1 + $0x10c] sm:$0xf]
      %v1064 = vld [vmem:[%s1 + $0x110] sm:$0xf]
      %v1065 = vld [vmem:[%s1 + $0x114] sm:$0xf]
      %v1066 = vld [vmem:[%s1 + $0x118] sm:$0xf]
      %v1067 = vld [vmem:[%s1 + $0x11c] sm:$0xf]
      %v1068 = vld [vmem:[%s1 + $0x120] sm:$0xf]
      %v1069 = vld [vmem:[%s1 + $0x124] sm:$0xf]
      %v1070 = vld [vmem:[%s1 + $0x128] sm:$0xf]
      %v1071 = vld [vmem:[%s1 + $0x12c] sm:$0xf]
      %v1072 = vld [vmem:[%s1 + $0x130] sm:$0xf]
      %v1073 = vld [vmem:[%s1 + $0x134] sm:$0xf]
      %v1074 = vld [vmem:[%s1 + $0x138] sm:$0xf]
      %v1075 = vld [vmem:[%s1 + $0x13c] sm:$0xf]
      %v1076 = vld [vmem:[%s1 + $0x140] sm:$0xf]
      %v1077 = vld [vmem:[%s1 + $0x144] sm:$0xf]
      %v1078 = vld [vmem:[%s1 + $0x148] sm:$0xf]
      %v1079 = vld [vmem:[%s1 + $0x14c] sm:$0xf]
      %v1080 = vld [vmem:[%s1 + $0x150] sm:$0xf]
      %v1081 = vld [vmem:[%s1 + $0x154] sm:$0xf]
      %v1082 = vld [vmem:[%s1 + $0x158] sm:$0xf]
      %v1083 = vld [vmem:[%s1 + $0x15c] sm:$0xf]
      %v1084 = vld [vmem:[%s1 + $0x160] sm:$0xf]
      %v1085 = vld [vmem:[%s1 + $0x164] sm:$0xf]
      %v1086 = vld [vmem:[%s1 + $0x168] sm:$0xf]
      %v1087 = vld [vmem:[%s1 + $0x16c] sm:$0xf]
      %v1088 = vld [vmem:[%s1 + $0x170] sm:$0xf]
      %v1089 = vld [vmem:[%s1 + $0x174] sm:$0xf]
      %v1090 = vld [vmem:[%s1 + $0x178] sm:$0xf]
      %v1091 = vld [vmem:[%s1 + $0x17c] sm:$0xf]
      %v1092 = vld [vmem:[%s1 + $0x180] sm:$0xf]
      %v1093 = vld [vmem:[%s1 + $0x184] sm:$0xf]
      %v1094 = vld [vmem:[%s1 + $0x188] sm:$0xf]
      %v1095 = vld [vmem:[%s1 + $0x18c] sm:$0xf]
      %v1096 = vld [vmem:[%s1 + $0x190] sm:$0xf]
      %v1097 = vld [vmem:[%s1 + $0x194] sm:$0xf]
      %v1098 = vld [vmem:[%s1 + $0x198] sm:$0xf]
      %v1099 = vld [vmem:[%s1 + $0x19c] sm:$0xf]
      %v1100 = vld [vmem:[%s1 + $0x1a0] sm:$0xf]
      %v1101 = vld [vmem:[%s1 + $0x1a4] sm:$0xf]
      %v1102 = vld [vmem:[%s1 + $0x1a8] sm:$0xf]
      %v1103 = vld [vmem:[%s1 + $0x1ac] sm:$0xf]
      %v1104 = vld [vmem:[%s1 + $0x1b0] sm:$0xf]
      %v1105 = vld [vmem:[%s1 + $0x1b4] sm:$0xf]
      %v1106 = vld [vmem:[%s1 + $0x1b8] sm:$0xf]
      %v1107 = vld [vmem:[%s1 + $0x1bc] sm:$0xf]
      %v1108 = vld [vmem:[%s1 + $0x1c0] sm:$0xf]
      %v1109 = vld [vmem:[%s1 + $0x1c4] sm:$0xf]
      %v1110 = vld [vmem:[%s1 + $0x1c8] sm:$0xf]
      %v1111 = vld [vmem:[%s1 + $0x1cc] sm:$0xf]
      %v1112 = vld [vmem:[%s1 + $0x1d0] sm:$0xf]
      %v1113 = vld [vmem:[%s1 + $0x1d4] sm:$0xf]
      %v1114 = vld [vmem:[%s1 + $0x1d8] sm:$0xf]
      %v1115 = vld [vmem:[%s1 + $0x1dc] sm:$0xf]
      %v1116 = vld [vmem:[%s1 + $0x1e0] sm:$0xf]
      %v1117 = vld [vmem:[%s1 + $0x1e4] sm:$0xf]
      %v1118 = vld [vmem:[%s1 + $0x1e8] sm:$0xf]
      %v1119 = vld [vmem:[%s1 + $0x1ec] sm:$0xf]
      %v1120 = vld [vmem:[%s1 + $0x1f0] sm:$0xf]
      %v1121 = vld [vmem:[%s1 + $0x1f4] sm:$0xf]
      %v1122 = vld [vmem:[%s1 + $0x1f8] sm:$0xf]
      %v1123 = vld [vmem:[%s1 + $0x1fc] sm:$0xf]
      %v1124 = vld [vmem:[%s1 + $0x200] sm:$0xf]
      %v1125 = vld [vmem:[%s1 + $0x204] sm:$0xf]
      %v1126 = vld [vmem:[%s1 + $0x208] sm:$0xf]
      %v1127 = vld [vmem:[%s1 + $0x20c] sm:$0xf]
      %v1128 = vld [vmem:[%s1 + $0x210] sm:$0xf]
      %v1129 = vld [vmem:[%s1 + $0x214] sm:$0xf]
      %v1130 = vld [vmem:[%s1 + $0x218] sm:$0xf]
      %v1131 = vld [vmem:[%s1 + $0x21c] sm:$0xf]
      %v1132 = vld [vmem:[%s1 + $0x220] sm:$0xf]
      %v1133 = vld [vmem:[%s1 + $0x224] sm:$0xf]
      %v1134 = vld [vmem:[%s1 + $0x228] sm:$0xf]
      %v1135 = vld [vmem:[%s1 + $0x22c] sm:$0xf]
      %v1136 = vld [vmem:[%s1 + $0x230] sm:$0xf]
      %v1137 = vld [vmem:[%s1 + $0x234] sm:$0xf]
      %v1138 = vld [vmem:[%s1 + $0x238] sm:$0xf]
      %v1139 = vld [vmem:[%s1 + $0x23c] sm:$0xf]
      %v1140 = vld [vmem:[%s2] sm:$0x1]
      %v1142 = vlaneseq
      %v1143 = vshrl.u32 %v1142, 7
      %v1144 = vsub.s32 0, %v1143
      %v1145 = vrot.slane %v1140, %v1144
      %v1291 = vunpack.c.l.b16 %v996
      %v1292 = vunpack.c.l.b16 %v997
      %v1293 = vunpack.c.l.b16 %v998
      %v1294 = vunpack.c.l.b16 %v999
      %v1295 = vunpack.c.l.b16 %v1000
      %v1296 = vunpack.c.l.b16 %v1001
      %v1297 = vunpack.c.l.b16 %v1002
      %v1298 = vunpack.c.l.b16 %v1003
      %v1299 = vunpack.c.l.b16 %v1004
      %v1300 = vunpack.c.l.b16 %v1005
      %v1301 = vunpack.c.l.b16 %v1006
      %v1302 = vunpack.c.l.b16 %v1007
      %v1303 = vunpack.c.l.b16 %v1008
      %v1304 = vunpack.c.l.b16 %v1009
      %v1305 = vunpack.c.l.b16 %v1010
      %v1306 = vunpack.c.l.b16 %v1011
      %v1307 = vunpack.c.l.b16 %v1012
      %v1308 = vunpack.c.l.b16 %v1013
      %v1309 = vunpack.c.l.b16 %v1014
      %v1310 = vunpack.c.l.b16 %v1015
      %v1311 = vunpack.c.l.b16 %v1016
      %v1312 = vunpack.c.l.b16 %v1017
      %v1313 = vunpack.c.l.b16 %v1018
      %v1314 = vunpack.c.l.b16 %v1019
      %v1315 = vunpack.c.l.b16 %v1020
      %v1316 = vunpack.c.l.b16 %v1021
      %v1317 = vunpack.c.l.b16 %v1022
      %v1318 = vunpack.c.l.b16 %v1023
      %v1319 = vunpack.c.l.b16 %v1024
      %v1320 = vunpack.c.l.b16 %v1025
      %v1321 = vunpack.c.l.b16 %v1026
      %v1322 = vunpack.c.l.b16 %v1027
      %v1323 = vunpack.c.l.b16 %v1028
      %v1324 = vunpack.c.l.b16 %v1029
      %v1325 = vunpack.c.l.b16 %v1030
      %v1326 = vunpack.c.l.b16 %v1031
      %v1327 = vunpack.c.l.b16 %v1032
      %v1328 = vunpack.c.l.b16 %v1033
      %v1329 = vunpack.c.l.b16 %v1034
      %v1330 = vunpack.c.l.b16 %v1035
      %v1331 = vunpack.c.l.b16 %v1036
      %v1332 = vunpack.c.l.b16 %v1037
      %v1333 = vunpack.c.l.b16 %v1038
      %v1334 = vunpack.c.l.b16 %v1039
      %v1335 = vunpack.c.l.b16 %v1040
      %v1336 = vunpack.c.l.b16 %v1041
      %v1337 = vunpack.c.l.b16 %v1042
      %v1338 = vunpack.c.l.b16 %v1043
      %v1339 = vunpack.c.l.b16 %v1044
      %v1340 = vunpack.c.l.b16 %v1045
      %v1341 = vunpack.c.l.b16 %v1046
      %v1342 = vunpack.c.l.b16 %v1047
      %v1343 = vunpack.c.l.b16 %v1048
      %v1344 = vunpack.c.l.b16 %v1049
      %v1345 = vunpack.c.l.b16 %v1050
      %v1346 = vunpack.c.l.b16 %v1051
      %v1347 = vunpack.c.l.b16 %v1052
      %v1348 = vunpack.c.l.b16 %v1053
      %v1349 = vunpack.c.l.b16 %v1054
      %v1350 = vunpack.c.l.b16 %v1055
      %v1351 = vunpack.c.l.b16 %v1056
      %v1352 = vunpack.c.l.b16 %v1057
      %v1353 = vunpack.c.l.b16 %v1058
      %v1354 = vunpack.c.l.b16 %v1059
      %v1355 = vunpack.c.l.b16 %v1060
      %v1356 = vunpack.c.l.b16 %v1061
      %v1357 = vunpack.c.l.b16 %v1062
      %v1358 = vunpack.c.l.b16 %v1063
      %v1359 = vunpack.c.l.b16 %v1064
      %v1360 = vunpack.c.l.b16 %v1065
      %v1361 = vunpack.c.l.b16 %v1066
      %v1362 = vunpack.c.l.b16 %v1067
      %v1363 = vunpack.c.l.b16 %v1068
      %v1364 = vunpack.c.l.b16 %v1069
      %v1365 = vunpack.c.l.b16 %v1070
      %v1366 = vunpack.c.l.b16 %v1071
      %v1367 = vunpack.c.l.b16 %v1072
      %v1368 = vunpack.c.l.b16 %v1073
      %v1369 = vunpack.c.l.b16 %v1074
      %v1370 = vunpack.c.l.b16 %v1075
      %v1371 = vunpack.c.l.b16 %v1076
      %v1372 = vunpack.c.l.b16 %v1077
      %v1373 = vunpack.c.l.b16 %v1078
      %v1374 = vunpack.c.l.b16 %v1079
      %v1375 = vunpack.c.l.b16 %v1080
      %v1376 = vunpack.c.l.b16 %v1081
      %v1377 = vunpack.c.l.b16 %v1082
      %v1378 = vunpack.c.l.b16 %v1083
      %v1379 = vunpack.c.l.b16 %v1084
      %v1380 = vunpack.c.l.b16 %v1085
      %v1381 = vunpack.c.l.b16 %v1086
      %v1382 = vunpack.c.l.b16 %v1087
      %v1383 = vunpack.c.l.b16 %v1088
      %v1384 = vunpack.c.l.b16 %v1089
      %v1385 = vunpack.c.l.b16 %v1090
      %v1386 = vunpack.c.l.b16 %v1091
      %v1387 = vunpack.c.l.b16 %v1092
      %v1388 = vunpack.c.l.b16 %v1093
      %v1389 = vunpack.c.l.b16 %v1094
      %v1390 = vunpack.c.l.b16 %v1095
      %v1391 = vunpack.c.l.b16 %v1096
      %v1392 = vunpack.c.l.b16 %v1097
      %v1393 = vunpack.c.l.b16 %v1098
      %v1394 = vunpack.c.l.b16 %v1099
      %v1395 = vunpack.c.l.b16 %v1100
      %v1396 = vunpack.c.l.b16 %v1101
      %v1397 = vunpack.c.l.b16 %v1102
      %v1398 = vunpack.c.l.b16 %v1103
      %v1399 = vunpack.c.l.b16 %v1104
      %v1400 = vunpack.c.l.b16 %v1105
      %v1401 = vunpack.c.l.b16 %v1106
      %v1402 = vunpack.c.l.b16 %v1107
      %v1403 = vunpack.c.l.b16 %v1108
      %v1404 = vunpack.c.l.b16 %v1109
      %v1405 = vunpack.c.l.b16 %v1110
      %v1406 = vunpack.c.l.b16 %v1111
      %v1407 = vunpack.c.l.b16 %v1112
      %v1408 = vunpack.c.l.b16 %v1113
      %v1409 = vunpack.c.l.b16 %v1114
      %v1410 = vunpack.c.l.b16 %v1115
      %v1411 = vunpack.c.l.b16 %v1116
      %v1412 = vunpack.c.l.b16 %v1117
      %v1413 = vunpack.c.l.b16 %v1118
      %v1414 = vunpack.c.l.b16 %v1119
      %v1415 = vunpack.c.l.b16 %v1120
      %v1416 = vunpack.c.l.b16 %v1121
      %v1417 = vunpack.c.l.b16 %v1122
      %v1418 = vunpack.c.l.b16 %v1123
      %v1419 = vunpack.c.l.b16 %v1124
      %v1420 = vunpack.c.l.b16 %v1125
      %v1421 = vunpack.c.l.b16 %v1126
      %v1422 = vunpack.c.l.b16 %v1127
      %v1423 = vunpack.c.l.b16 %v1128
      %v1424 = vunpack.c.l.b16 %v1129
      %v1425 = vunpack.c.l.b16 %v1130
      %v1426 = vunpack.c.l.b16 %v1131
      %v1427 = vunpack.c.l.b16 %v1132
      %v1428 = vunpack.c.l.b16 %v1133
      %v1429 = vunpack.c.l.b16 %v1134
      %v1430 = vunpack.c.l.b16 %v1135
      %v1431 = vunpack.c.l.b16 %v1136
      %v1432 = vunpack.c.l.b16 %v1137
      %v1433 = vunpack.c.l.b16 %v1138
      %v1434 = vunpack.c.l.b16 %v1139
      %v1435 = vpack.c.b16 %v1292, %v1291
      %v1436 = vpack.c.b16 %v1294, %v1293
      %v1437 = vpack.c.b16 %v1296, %v1295
      %v1438 = vpack.c.b16 %v1298, %v1297
      %v1439 = vpack.c.b16 %v1300, %v1299
      %v1440 = vpack.c.b16 %v1302, %v1301
      %v1441 = vpack.c.b16 %v1304, %v1303
      %v1442 = vpack.c.b16 %v1306, %v1305
      %v1443 = vpack.c.b16 %v1308, %v1307
      %v1444 = vpack.c.b16 %v1310, %v1309
      %v1445 = vpack.c.b16 %v1312, %v1311
      %v1446 = vpack.c.b16 %v1314, %v1313
      %v1447 = vpack.c.b16 %v1316, %v1315
      %v1448 = vpack.c.b16 %v1318, %v1317
      %v1449 = vpack.c.b16 %v1320, %v1319
      %v1450 = vpack.c.b16 %v1322, %v1321
      %v1451 = vpack.c.b16 %v1324, %v1323
      %v1452 = vpack.c.b16 %v1326, %v1325
      %v1453 = vpack.c.b16 %v1328, %v1327
      %v1454 = vpack.c.b16 %v1330, %v1329
      %v1455 = vpack.c.b16 %v1332, %v1331
      %v1456 = vpack.c.b16 %v1334, %v1333
      %v1457 = vpack.c.b16 %v1336, %v1335
      %v1458 = vpack.c.b16 %v1338, %v1337
      %v1459 = vpack.c.b16 %v1340, %v1339
      %v1460 = vpack.c.b16 %v1342, %v1341
      %v1461 = vpack.c.b16 %v1344, %v1343
      %v1462 = vpack.c.b16 %v1346, %v1345
      %v1463 = vpack.c.b16 %v1348, %v1347
      %v1464 = vpack.c.b16 %v1350, %v1349
      %v1465 = vpack.c.b16 %v1352, %v1351
      %v1466 = vpack.c.b16 %v1354, %v1353
      %v1467 = vpack.c.b16 %v1356, %v1355
      %v1468 = vpack.c.b16 %v1358, %v1357
      %v1469 = vpack.c.b16 %v1360, %v1359
      %v1470 = vpack.c.b16 %v1362, %v1361
      %v1471 = vpack.c.b16 %v1364, %v1363
      %v1472 = vpack.c.b16 %v1366, %v1365
      %v1473 = vpack.c.b16 %v1368, %v1367
      %v1474 = vpack.c.b16 %v1370, %v1369
      %v1475 = vpack.c.b16 %v1372, %v1371
      %v1476 = vpack.c.b16 %v1374, %v1373
      %v1477 = vpack.c.b16 %v1376, %v1375
      %v1478 = vpack.c.b16 %v1378, %v1377
      %v1479 = vpack.c.b16 %v1380, %v1379
      %v1480 = vpack.c.b16 %v1382, %v1381
      %v1481 = vpack.c.b16 %v1384, %v1383
      %v1482 = vpack.c.b16 %v1386, %v1385
      %v1483 = vpack.c.b16 %v1388, %v1387
      %v1484 = vpack.c.b16 %v1390, %v1389
      %v1485 = vpack.c.b16 %v1392, %v1391
      %v1486 = vpack.c.b16 %v1394, %v1393
      %v1487 = vpack.c.b16 %v1396, %v1395
      %v1488 = vpack.c.b16 %v1398, %v1397
      %v1489 = vpack.c.b16 %v1400, %v1399
      %v1490 = vpack.c.b16 %v1402, %v1401
      %v1491 = vpack.c.b16 %v1404, %v1403
      %v1492 = vpack.c.b16 %v1406, %v1405
      %v1493 = vpack.c.b16 %v1408, %v1407
      %v1494 = vpack.c.b16 %v1410, %v1409
      %v1495 = vpack.c.b16 %v1412, %v1411
      %v1496 = vpack.c.b16 %v1414, %v1413
      %v1497 = vpack.c.b16 %v1416, %v1415
      %v1498 = vpack.c.b16 %v1418, %v1417
      %v1499 = vpack.c.b16 %v1420, %v1419
      %v1500 = vpack.c.b16 %v1422, %v1421
      %v1501 = vpack.c.b16 %v1424, %v1423
      %v1502 = vpack.c.b16 %v1426, %v1425
      %v1503 = vpack.c.b16 %v1428, %v1427
      %v1504 = vpack.c.b16 %v1430, %v1429
      %v1505 = vpack.c.b16 %v1432, %v1431
      %v1506 = vpack.c.b16 %v1434, %v1433
      %1579 = vmatprep.subr.bf16.mxu0 0
      %1580 = vmatpush1.bf16.msra.mxu0 %v1442
      %1581 = vmatprep.subr.bf16.mxu0 0
      %1582 = vmatpush1.bf16.msra.mxu0 %v1441
      %1583 = vmatprep.subr.bf16.mxu0 0
      %1584 = vmatpush1.bf16.msra.mxu0 %v1440
      %1585 = vmatprep.subr.bf16.mxu0 0
      %1586 = vmatpush1.bf16.msra.mxu0 %v1439
      %1587 = vmatprep.subr.bf16.mxu0 0
      %1588 = vmatpush1.bf16.msra.mxu0 %v1438
      %1589 = vmatprep.subr.bf16.mxu0 0
      %1590 = vmatpush1.bf16.msra.mxu0 %v1437
      %1591 = vmatprep.subr.bf16.mxu0 0
      %1592 = vmatpush1.bf16.msra.mxu0 %v1436
      %1593 = vmatprep.subr.bf16.mxu0 0
      %1594 = vmatpush1.bf16.msra.mxu0 %v1435
      %1595 = vmatprep.subr.bf16.mxu0 0
      %1596 = vmatpush2.bf16.msra.mxu0 %v1450
      %1597 = vmatprep.subr.bf16.mxu0 0
      %1598 = vmatpush2.bf16.msra.mxu0 %v1449
      %1599 = vmatprep.subr.bf16.mxu0 0
      %1600 = vmatpush2.bf16.msra.mxu0 %v1448
      %1601 = vmatprep.subr.bf16.mxu0 0
      %1602 = vmatpush2.bf16.msra.mxu0 %v1447
      %1603 = vmatprep.subr.bf16.mxu0 0
      %1604 = vmatpush2.bf16.msra.mxu0 %v1446
      %1605 = vmatprep.subr.bf16.mxu0 0
      %1606 = vmatpush2.bf16.msra.mxu0 %v1445
      %1607 = vmatprep.subr.bf16.mxu0 0
      %1608 = vmatpush2.bf16.msra.mxu0 %v1444
      %1609 = vmatprep.subr.bf16.mxu0 0
      %1610 = vmatpush2.bf16.msra.mxu0 %v1443
      %1611 = vmatprep.mubr.bf16.mxu0 %v860
      %1612 = vmatmul.mubr.bf16.gmra.mxu0 %v844
      %v1613 = vpop.f32.mrf.mxu0
      %v1614 = vadd.f32 %v1145, %v1613
      %v1615 = vpop.f32.mrf.mxu0
      %v1616 = vpop.f32.mrf.mxu0
      %v1617 = vadd.f32 %v1145, %v1616
      %v1618 = vpop.f32.mrf.mxu0
      %1619 = vmatprep.mubr.bf16.mxu0 %v861
      %1620 = vmatmul.mubr.bf16.gmra.mxu0 %v845
      %v1621 = vpop.f32.mrf.mxu0
      %v1622 = vadd.f32 %v1145, %v1621
      %v1623 = vpop.f32.mrf.mxu0
      %v1624 = vpop.f32.mrf.mxu0
      %v1625 = vadd.f32 %v1145, %v1624
      %v1626 = vpop.f32.mrf.mxu0
      %1627 = vmatprep.mubr.bf16.mxu0 %v862
      %1628 = vmatmul.mubr.bf16.gmra.mxu0 %v846
      %v1629 = vpop.f32.mrf.mxu0
      %v1630 = vadd.f32 %v1145, %v1629
      %v1631 = vpop.f32.mrf.mxu0
      %v1632 = vpop.f32.mrf.mxu0
      %v1633 = vadd.f32 %v1145, %v1632
      %v1634 = vpop.f32.mrf.mxu0
      %1635 = vmatprep.mubr.bf16.mxu0 %v863
      %1636 = vmatmul.mubr.bf16.gmra.mxu0 %v847
      %v1637 = vpop.f32.mrf.mxu0
      %v1638 = vadd.f32 %v1145, %v1637
      %v1639 = vpop.f32.mrf.mxu0
      %v1640 = vpop.f32.mrf.mxu0
      %v1641 = vadd.f32 %v1145, %v1640
      %v1642 = vpop.f32.mrf.mxu0
      %1643 = vdwg.mxu0
      %1644 = vmatprep.subr.bf16.mxu0 0
      %1645 = vmatpush1.bf16.msra.mxu0 %v1458
      %1646 = vmatprep.subr.bf16.mxu0 0
      %1647 = vmatpush1.bf16.msra.mxu0 %v1457
      %1648 = vmatprep.subr.bf16.mxu0 0
      %1649 = vmatpush1.bf16.msra.mxu0 %v1456
      %1650 = vmatprep.subr.bf16.mxu0 0
      %1651 = vmatpush1.bf16.msra.mxu0 %v1455
      %1652 = vmatprep.subr.bf16.mxu0 0
      %1653 = vmatpush1.bf16.msra.mxu0 %v1454
      %1654 = vmatprep.subr.bf16.mxu0 0
      %1655 = vmatpush1.bf16.msra.mxu0 %v1453
      %1656 = vmatprep.subr.bf16.mxu0 0
      %1657 = vmatpush1.bf16.msra.mxu0 %v1452
      %1658 = vmatprep.subr.bf16.mxu0 0
      %1659 = vmatpush1.bf16.msra.mxu0 %v1451
      %1660 = vmatprep.subr.bf16.mxu0 0
      %1661 = vmatpush2.bf16.msra.mxu0 %v1466
      %1662 = vmatprep.subr.bf16.mxu0 0
      %1663 = vmatpush2.bf16.msra.mxu0 %v1465
      %1664 = vmatprep.subr.bf16.mxu0 0
      %1665 = vmatpush2.bf16.msra.mxu0 %v1464
      %1666 = vmatprep.subr.bf16.mxu0 0
      %1667 = vmatpush2.bf16.msra.mxu0 %v1463
      %1668 = vmatprep.subr.bf16.mxu0 0
      %1669 = vmatpush2.bf16.msra.mxu0 %v1462
      %1670 = vmatprep.subr.bf16.mxu0 0
      %1671 = vmatpush2.bf16.msra.mxu0 %v1461
      %1672 = vmatprep.subr.bf16.mxu0 0
      %1673 = vmatpush2.bf16.msra.mxu0 %v1460
      %1674 = vmatprep.subr.bf16.mxu0 0
      %1675 = vmatpush2.bf16.msra.mxu0 %v1459
      %1676 = vmatprep.mubr.bf16.mxu0 %v900
      %1677 = vmatmul.mubr.bf16.gmra.mxu0 %v876
      %v1678 = vpop.f32.mrf.mxu0
      %v1679 = vadd.f32 %v1614, %v1678
      %v1680 = vpop.f32.mrf.mxu0
      %v1681 = vpop.f32.mrf.mxu0
      %v1682 = vadd.f32 %v1617, %v1681
      %v1683 = vpop.f32.mrf.mxu0
      %1684 = vmatprep.mubr.bf16.mxu0 %v901
      %1685 = vmatmul.mubr.bf16.gmra.mxu0 %v877
      %v1686 = vpop.f32.mrf.mxu0
      %v1687 = vadd.f32 %v1622, %v1686
      %v1688 = vpop.f32.mrf.mxu0
      %v1689 = vpop.f32.mrf.mxu0
      %v1690 = vadd.f32 %v1625, %v1689
      %v1691 = vpop.f32.mrf.mxu0
      %1692 = vmatprep.mubr.bf16.mxu0 %v902
      %1693 = vmatmul.mubr.bf16.gmra.mxu0 %v878
      %v1694 = vpop.f32.mrf.mxu0
      %v1695 = vadd.f32 %v1630, %v1694
      %v1696 = vpop.f32.mrf.mxu0
      %v1697 = vpop.f32.mrf.mxu0
      %v1698 = vadd.f32 %v1633, %v1697
      %v1699 = vpop.f32.mrf.mxu0
      %1700 = vmatprep.mubr.bf16.mxu0 %v903
      %1701 = vmatmul.mubr.bf16.gmra.mxu0 %v879
      %v1702 = vpop.f32.mrf.mxu0
      %v1703 = vadd.f32 %v1638, %v1702
      %v1704 = vpop.f32.mrf.mxu0
      %v1705 = vpop.f32.mrf.mxu0
      %v1706 = vadd.f32 %v1641, %v1705
      %v1707 = vpop.f32.mrf.mxu0
      %1708 = vdwg.mxu0
      %1709 = vmatprep.subr.bf16.mxu0 0
      %1710 = vmatpush1.bf16.msra.mxu0 %v1474
      %1711 = vmatprep.subr.bf16.mxu0 0
      %1712 = vmatpush1.bf16.msra.mxu0 %v1473
      %1713 = vmatprep.subr.bf16.mxu0 0
      %1714 = vmatpush1.bf16.msra.mxu0 %v1472
      %1715 = vmatprep.subr.bf16.mxu0 0
      %1716 = vmatpush1.bf16.msra.mxu0 %v1471
      %1717 = vmatprep.subr.bf16.mxu0 0
      %1718 = vmatpush1.bf16.msra.mxu0 %v1470
      %1719 = vmatprep.subr.bf16.mxu0 0
      %1720 = vmatpush1.bf16.msra.mxu0 %v1469
      %1721 = vmatprep.subr.bf16.mxu0 0
      %1722 = vmatpush1.bf16.msra.mxu0 %v1468
      %1723 = vmatprep.subr.bf16.mxu0 0
      %1724 = vmatpush1.bf16.msra.mxu0 %v1467
      %1725 = vmatprep.subr.bf16.mxu0 0
      %1726 = vmatpush2.bf16.msra.mxu0 %v1482
      %1727 = vmatprep.subr.bf16.mxu0 0
      %1728 = vmatpush2.bf16.msra.mxu0 %v1481
      %1729 = vmatprep.subr.bf16.mxu0 0
      %1730 = vmatpush2.bf16.msra.mxu0 %v1480
      %1731 = vmatprep.subr.bf16.mxu0 0
      %1732 = vmatpush2.bf16.msra.mxu0 %v1479
      %1733 = vmatprep.subr.bf16.mxu0 0
      %1734 = vmatpush2.bf16.msra.mxu0 %v1478
      %1735 = vmatprep.subr.bf16.mxu0 0
      %1736 = vmatpush2.bf16.msra.mxu0 %v1477
      %1737 = vmatprep.subr.bf16.mxu0 0
      %1738 = vmatpush2.bf16.msra.mxu0 %v1476
      %1739 = vmatprep.subr.bf16.mxu0 0
      %1740 = vmatpush2.bf16.msra.mxu0 %v1475
      %1741 = vmatprep.mubr.bf16.mxu0 %v932
      %1742 = vmatmul.mubr.bf16.gmra.mxu0 %v916
      %v1743 = vpop.f32.mrf.mxu0
      %v1744 = vadd.f32 %v1679, %v1743
      %v1745 = vpop.f32.mrf.mxu0
      %v1746 = vpop.f32.mrf.mxu0
      %v1747 = vadd.f32 %v1682, %v1746
      %v1748 = vpop.f32.mrf.mxu0
      %1749 = vmatprep.mubr.bf16.mxu0 %v933
      %1750 = vmatmul.mubr.bf16.gmra.mxu0 %v917
      %v1751 = vpop.f32.mrf.mxu0
      %v1752 = vadd.f32 %v1687, %v1751
      %v1753 = vpop.f32.mrf.mxu0
      %v1754 = vpop.f32.mrf.mxu0
      %v1755 = vadd.f32 %v1690, %v1754
      %v1756 = vpop.f32.mrf.mxu0
      %1757 = vmatprep.mubr.bf16.mxu0 %v934
      %1758 = vmatmul.mubr.bf16.gmra.mxu0 %v918
      %v1759 = vpop.f32.mrf.mxu0
      %v1760 = vadd.f32 %v1695, %v1759
      %v1761 = vpop.f32.mrf.mxu0
      %v1762 = vpop.f32.mrf.mxu0
      %v1763 = vadd.f32 %v1698, %v1762
      %v1764 = vpop.f32.mrf.mxu0
      %1765 = vmatprep.mubr.bf16.mxu0 %v935
      %1766 = vmatmul.mubr.bf16.gmra.mxu0 %v919
      %v1767 = vpop.f32.mrf.mxu0
      %v1768 = vadd.f32 %v1703, %v1767
      %v1769 = vpop.f32.mrf.mxu0
      %v1770 = vpop.f32.mrf.mxu0
      %v1771 = vadd.f32 %v1706, %v1770
      %v1772 = vpop.f32.mrf.mxu0
      %1773 = vdwg.mxu0
      %1774 = vmatprep.subr.bf16.mxu0 0
      %1775 = vmatpush1.bf16.msra.mxu0 %v1490
      %1776 = vmatprep.subr.bf16.mxu0 0
      %1777 = vmatpush1.bf16.msra.mxu0 %v1489
      %1778 = vmatprep.subr.bf16.mxu0 0
      %1779 = vmatpush1.bf16.msra.mxu0 %v1488
      %1780 = vmatprep.subr.bf16.mxu0 0
      %1781 = vmatpush1.bf16.msra.mxu0 %v1487
      %1782 = vmatprep.subr.bf16.mxu0 0
      %1783 = vmatpush1.bf16.msra.mxu0 %v1486
      %1784 = vmatprep.subr.bf16.mxu0 0
      %1785 = vmatpush1.bf16.msra.mxu0 %v1485
      %1786 = vmatprep.subr.bf16.mxu0 0
      %1787 = vmatpush1.bf16.msra.mxu0 %v1484
      %1788 = vmatprep.subr.bf16.mxu0 0
      %1789 = vmatpush1.bf16.msra.mxu0 %v1483
      %1790 = vmatprep.subr.bf16.mxu0 0
      %1791 = vmatpush2.bf16.msra.mxu0 %v1498
      %1792 = vmatprep.subr.bf16.mxu0 0
      %1793 = vmatpush2.bf16.msra.mxu0 %v1497
      %1794 = vmatprep.subr.bf16.mxu0 0
      %1795 = vmatpush2.bf16.msra.mxu0 %v1496
      %1796 = vmatprep.subr.bf16.mxu0 0
      %1797 = vmatpush2.bf16.msra.mxu0 %v1495
      %1798 = vmatprep.subr.bf16.mxu0 0
      %1799 = vmatpush2.bf16.msra.mxu0 %v1494
      %1800 = vmatprep.subr.bf16.mxu0 0
      %1801 = vmatpush2.bf16.msra.mxu0 %v1493
      %1802 = vmatprep.subr.bf16.mxu0 0
      %1803 = vmatpush2.bf16.msra.mxu0 %v1492
      %1804 = vmatprep.subr.bf16.mxu0 0
      %1805 = vmatpush2.bf16.msra.mxu0 %v1491
      %1806 = vmatprep.mubr.bf16.mxu0 %v972
      %1807 = vmatmul.mubr.bf16.gmra.mxu0 %v956
      %v1808 = vpop.f32.mrf.mxu0
      %v1809 = vadd.f32 %v1744, %v1808
      %v1810 = vpop.f32.mrf.mxu0
      %v1811 = vpop.f32.mrf.mxu0
      %v1812 = vadd.f32 %v1747, %v1811
      %v1813 = vpop.f32.mrf.mxu0
      %1814 = vmatprep.mubr.bf16.mxu0 %v973
      %1815 = vmatmul.mubr.bf16.gmra.mxu0 %v957
      %v1816 = vpop.f32.mrf.mxu0
      %v1817 = vadd.f32 %v1752, %v1816
      %v1818 = vpop.f32.mrf.mxu0
      %v1819 = vpop.f32.mrf.mxu0
      %v1820 = vadd.f32 %v1755, %v1819
      %v1821 = vpop.f32.mrf.mxu0
      %1822 = vmatprep.mubr.bf16.mxu0 %v974
      %1823 = vmatmul.mubr.bf16.gmra.mxu0 %v958
      %v1824 = vpop.f32.mrf.mxu0
      %v1825 = vadd.f32 %v1760, %v1824
      %v1826 = vpop.f32.mrf.mxu0
      %v1827 = vpop.f32.mrf.mxu0
      %v1828 = vadd.f32 %v1763, %v1827
      %v1829 = vpop.f32.mrf.mxu0
      %1830 = vmatprep.mubr.bf16.mxu0 %v975
      %1831 = vmatmul.mubr.bf16.gmra.mxu0 %v959
      %v1832 = vpop.f32.mrf.mxu0
      %v1833 = vadd.f32 %v1768, %v1832
      %v1834 = vpop.f32.mrf.mxu0
      %v1835 = vpop.f32.mrf.mxu0
      %v1836 = vadd.f32 %v1771, %v1835
      %v1837 = vpop.f32.mrf.mxu0
      %1838 = vdwg.mxu0
      %1839 = vmatprep.subr.bf16.mxu0 0
      %1840 = vmatpush1.bf16.msra.mxu0 %v1506
      %1841 = vmatprep.subr.bf16.mxu0 0
      %1842 = vmatpush1.bf16.msra.mxu0 %v1505
      %1843 = vmatprep.subr.bf16.mxu0 0
      %1844 = vmatpush1.bf16.msra.mxu0 %v1504
      %1845 = vmatprep.subr.bf16.mxu0 0
      %1846 = vmatpush1.bf16.msra.mxu0 %v1503
      %1847 = vmatprep.subr.bf16.mxu0 0
      %1848 = vmatpush1.bf16.msra.mxu0 %v1502
      %1849 = vmatprep.subr.bf16.mxu0 0
      %1850 = vmatpush1.bf16.msra.mxu0 %v1501
      %1851 = vmatprep.subr.bf16.mxu0 0
      %1852 = vmatpush1.bf16.msra.mxu0 %v1500
      %1853 = vmatprep.subr.bf16.mxu0 0
      %1854 = vmatpush1.bf16.msra.mxu0 %v1499
      %1855 = vmatprep.subr.bf16.mxu0 0
      %1856 = vmatpush2.bf16.msra.mxu0 0
      %1857 = vmatprep.subr.bf16.mxu0 0
      %1858 = vmatpush2.bf16.msra.mxu0 0
      %1859 = vmatprep.subr.bf16.mxu0 0
      %1860 = vmatpush2.bf16.msra.mxu0 0
      %1861 = vmatprep.subr.bf16.mxu0 0
      %1862 = vmatpush2.bf16.msra.mxu0 0
      %1863 = vmatprep.subr.bf16.mxu0 0
      %1864 = vmatpush2.bf16.msra.mxu0 0
      %1865 = vmatprep.subr.bf16.mxu0 0
      %1866 = vmatpush2.bf16.msra.mxu0 0
      %1867 = vmatprep.subr.bf16.mxu0 0
      %1868 = vmatpush2.bf16.msra.mxu0 0
      %1869 = vmatprep.subr.bf16.mxu0 0
      %1870 = vmatpush2.bf16.msra.mxu0 0
      %1871 = vmatprep.mubr.bf16.mxu0 0
      %1872 = vmatmul.mubr.bf16.gmra.mxu0 %v988
      %v1873 = vpop.f32.mrf.mxu0
      %v1874 = vadd.f32 %v1809, %v1873
      %v1875 = vpop.f32.mrf.mxu0
      %v1876 = vpop.f32.mrf.mxu0
      %v1877 = vadd.f32 %v1812, %v1876
      %v1878 = vpop.f32.mrf.mxu0
      %1879 = vmatprep.mubr.bf16.mxu0 0
      %1880 = vmatmul.mubr.bf16.gmra.mxu0 %v989
      %v1881 = vpop.f32.mrf.mxu0
      %v1882 = vadd.f32 %v1817, %v1881
      %v1883 = vpop.f32.mrf.mxu0
      %v1884 = vpop.f32.mrf.mxu0
      %v1885 = vadd.f32 %v1820, %v1884
      %v1886 = vpop.f32.mrf.mxu0
      %1887 = vmatprep.mubr.bf16.mxu0 0
      %1888 = vmatmul.mubr.bf16.gmra.mxu0 %v990
      %v1889 = vpop.f32.mrf.mxu0
      %v1890 = vadd.f32 %v1825, %v1889
      %v1891 = vpop.f32.mrf.mxu0
      %v1892 = vpop.f32.mrf.mxu0
      %v1893 = vadd.f32 %v1828, %v1892
      %v1894 = vpop.f32.mrf.mxu0
      %1895 = vmatprep.mubr.bf16.mxu0 0
      %1896 = vmatmul.mubr.bf16.gmra.mxu0 %v991
      %v1897 = vpop.f32.mrf.mxu0
      %v1898 = vadd.f32 %v1833, %v1897
      %v1899 = vpop.f32.mrf.mxu0
      %v1900 = vpop.f32.mrf.mxu0
      %v1901 = vadd.f32 %v1836, %v1900
      %v1902 = vpop.f32.mrf.mxu0
      %1903 = vdwg.mxu0
      %v1904 = vld [vmem:[%s245] sm:$0xf]
      %v1905 = vld [vmem:[%s245 + $0x4] sm:$0xf]
      %v1906 = vld [vmem:[%s245 + $0x8] sm:$0xf]
      %v1907 = vld [vmem:[%s245 + $0xc] sm:$0xf]
      %v1908 = vld [vmem:[%s245 + $0x10] sm:$0xf]
      %v1909 = vld [vmem:[%s245 + $0x14] sm:$0xf]
      %v1910 = vld [vmem:[%s245 + $0x18] sm:$0xf]
      %v1911 = vld [vmem:[%s245 + $0x1c] sm:$0xf]
      %v1912 = vunpack.c.l.bf16 %v1904
      %v1913 = vunpack.c.l.bf16 %v1905
      %v1914 = vunpack.c.l.bf16 %v1906
      %v1915 = vunpack.c.l.bf16 %v1907
      %v1916 = vunpack.c.l.bf16 %v1908
      %v1917 = vunpack.c.l.bf16 %v1909
      %v1918 = vunpack.c.l.bf16 %v1910
      %v1919 = vunpack.c.l.bf16 %v1911
      %v1920 = vadd.f32 %v1874, %v1912
      %v1921 = vadd.f32 %v1877, %v1913
      %v1922 = vadd.f32 %v1882, %v1914
      %v1923 = vadd.f32 %v1885, %v1915
      %v1924 = vadd.f32 %v1890, %v1916
      %v1925 = vadd.f32 %v1893, %v1917
      %v1926 = vadd.f32 %v1898, %v1918
      %v1927 = vadd.f32 %v1901, %v1919
      %v1928 = vmax.f32 %v1920, 0.0
      %v1929 = vmax.f32 %v1921, 0.0
      %v1930 = vmax.f32 %v1922, 0.0
      %v1931 = vmax.f32 %v1923, 0.0
      %v1932 = vmax.f32 %v1924, 0.0
      %v1933 = vmax.f32 %v1925, 0.0
      %v1934 = vmax.f32 %v1926, 0.0
      %v1935 = vmax.f32 %v1927, 0.0
      %1936 = vst [vmem:[%s255] sm:$0xff] %v1928
      %1937 = vst [vmem:[%s255 + $0x8] sm:$0xff] %v1929
      %1938 = vst [vmem:[%s255 + $0x10] sm:$0xff] %v1930
      %1939 = vst [vmem:[%s255 + $0x18] sm:$0xff] %v1931
      %1940 = vst [vmem:[%s255 + $0x20] sm:$0xff] %v1932
      %1941 = vst [vmem:[%s255 + $0x28] sm:$0xff] %v1933
      %1942 = vst [vmem:[%s255 + $0x30] sm:$0xff] %v1934
      %1943 = vst [vmem:[%s255 + $0x38] sm:$0xff] %v1935
      %s1944 = smul.u32 8, %s20
      %p1945 = scmp.lt.s32.totalorder %s19, 1
      %s1946 = scalar_select %p1945, %s19, 1
      %p1947 = scmp.lt.s32.totalorder %s1944, 7
      %s1948 = scalar_select %p1947, %s1944, 7
      %s1949 = smul.addr %s1946, 8
      %s1950 = sadd.s32 %s1948, %s1949
      %s1951 = smul.addr %s1950, 8
      %s1952 = scalar_lea.vmem %s4, %s1951
      // Predicated region
      $region37: #{basic_block_forward.5} parent=35 // pred_check
        %p1953 = pneg %p143
      $region38: #{basic_block_forward.5} parent=35 // pred_check_branch
        %1955 = sbr.rel (%p1953) target = $region40
      $region39: #{basic_block_forward.5} parent=35 // pred_region
        %s1956 = smul.u32 8, %s20
      $region40: #{basic_block_forward.5} parent=35 // pred_fallthru
        _
    $region36: #{basic_block_forward.5} parent=5 // pred_fallthru
      _
    %p1957 = scmp.le.s32.totalorder 2, %s10
    // Predicated region
    $region41: #{basic_block_forward.5} parent=5 // pred_check
      %p1958 = pneg %p1957
    $region42: #{basic_block_forward.5} parent=5 // pred_check_branch
      %1960 = sbr.rel (%p1958) target = $region44
    $region43: #{basic_block_forward.5} parent=5 // pred_region
      %s1961 = ssub.s32 %s10, 2
      // Predicated region
      $region45: #{basic_block_forward.5} parent=43 // pred_check
        %p1962 = pneg %p149
      $region46: #{basic_block_forward.5} parent=43 // pred_check_branch
        %1964 = sbr.rel (%p1962) target = $region48
      $region47: #{basic_block_forward.5} parent=43 // pred_region
        %s1965 = smul.u32 8, %s22
        %p1966 = scmp.lt.s32.totalorder %s21, 1
        %s1967 = scalar_select %p1966, %s21, 1
        %p1968 = scmp.lt.s32.totalorder %s1965, 7
        %s1969 = scalar_select %p1968, %s1965, 7
        %s1970 = smul.addr %s1967, 8
        %s1971 = sadd.s32 %s1969, %s1970
        %s1972 = smul.addr %s1971, 8
        %s1973 = scalar_lea.vmem %s4, %s1972
      $region48: #{basic_block_forward.5} parent=43 // pred_fallthru
        _
    $region44: #{basic_block_forward.5} parent=5 // pred_fallthru
      _
  $region6: #{basic_block_forward.5} parent=0 // loop_footer
    %s14 = sadd.s32 1, %s10
  $region7: #{basic_block_forward.5} parent=0 // loop_footer_branch
    %9 = sbr.rel target = $region3
  $region8: #{basic_block_forward.5} parent=0 // loop_exit
    _

</llo_original>
